<compile_context>
chip_gen: v7x
topology: tpu7x:2x2x1
jax: 0.10.0
libtpu: 0.0.40
codegen_flags: <defaults>
</compile_context>

<pallas_src>
import jax
import jax.numpy as jnp
from jax.experimental import pallas as pl
from jax.experimental.pallas import tpu as pltpu


def _round_up(x, m):
    return (x + m - 1) // m * m


def _vmem_limit_bytes(default=64 * 1024 * 1024):
    """Per-generation VMEM budget: ~75% of physical (48 MiB on v7x, 96 MiB on v5e/v6e)."""
    try:
        cap = int(pltpu.get_tpu_info().vmem_capacity_bytes)
        return max(cap * 3 // 4, 32 * 1024 * 1024)
    except Exception:
        return default


# ----------------------------------------------------------------------------- decoder stack
def make_decoder_stack_kernel(num_heads: int, head_dim: int, q_tile: int = 256):
    H, D = num_heads, head_dim
    HD = H * D

    def layer_norm(t, g, b):
        mu = jnp.mean(t, axis=-1, keepdims=True)
        var = jnp.mean(jnp.square(t - mu), axis=-1, keepdims=True)
        return (t - mu) * jax.lax.rsqrt(var + 1e-5) * g + b

    def kernel(x_hbm_ref,
               ln1g_ref, ln1b_ref, wqkv_ref, bqkv_ref, wo_ref, bo_ref,
               ln2g_ref, ln2b_ref, w1_ref, b1_ref, w2_ref, b2_ref,
               h_ref):
        B, S, E = h_ref.shape
        M = B * S
        cdt = wqkv_ref.dtype           # bf16 matmul operands; accumulation is f32

        # Layer 0: DMA the embeddings from HBM straight into the VMEM-resident residual
        # block (no permanently-resident, double-buffered embeddings input).
        @pl.when(pl.program_id(0) == 0)
        def _():
            pltpu.sync_copy(x_hbm_ref, h_ref)

        h = h_ref[...]                                                     # (B,S,E) f32

        # ---- causal multi-head self-attention (pre-LN) ----
        hn = layer_norm(h.reshape(M, E), ln1g_ref[0], ln1b_ref[0])
        qkv = (jnp.dot(hn.astype(cdt), wqkv_ref[0],
                       preferred_element_type=jnp.float32)
               + bqkv_ref[0]).astype(cdt)                                  # (M, 3*H*D)
        # heads: lanes -> leading batch axis (single lane-aware relayout, bf16)
        qkv = pltpu.einshape('mhd->hmd', qkv.reshape(M, 3 * H, D))         # (3H, M, D)
        q = qkv[:H].reshape(H * B, S, D)        # 1/sqrt(D) pre-folded into Wq / bq
        k = qkv[H:2 * H].reshape(H * B, S, D)
        v = qkv[2 * H:].reshape(H * B, S, D)

        wo = wo_ref[0]                                                     # (HD, E)
        bo = bo_ref[0]                                                     # (1, E)

        # Query-tiled attention: live scores are (H*B, TQ, S), never (H*B, S, S).
        for t0 in range(0, S, q_tile):
            t1 = min(t0 + q_tile, S)
            tq = t1 - t0
            s = jnp.einsum('bqd,bkd->bqk', q[:, t0:t1, :], k,
                           preferred_element_type=jnp.float32)             # (HB, tq, S)
            # in-kernel additive causal bias (no (S,S) constant streamed from HBM)
            qi = jax.lax.broadcasted_iota(jnp.int32, (tq, S), 0) + t0
            ki = jax.lax.broadcasted_iota(jnp.int32, (tq, S), 1)
            s = s + jnp.where(ki <= qi, 0.0, -1e30)[None]
            p = jnp.exp(s - jnp.max(s, axis=-1, keepdims=True))
            inv = pl.reciprocal(jnp.sum(p, axis=-1, keepdims=True), approx=True)
            o = jnp.einsum('bqk,bkd->bqd', p.astype(cdt), v,
                           preferred_element_type=jnp.float32) * inv       # (HB, tq, D)
            # heads: leading batch axis -> lanes (single relayout), fused output projection
            o = pltpu.einshape('hmd->mhd', o.astype(cdt).reshape(H, B * tq, D))
            o = o.reshape(B * tq, HD)
            proj = jnp.dot(o, wo, preferred_element_type=jnp.float32) + bo  # (B*tq, E)
            h_ref[:, t0:t1, :] = h[:, t0:t1, :] + proj.reshape(B, tq, E)

        h2 = h_ref[...]

        # ---- feed-forward MLP (pre-LN, 4x expansion, tanh-GELU), flat M = B*S matmuls ----
        hn2 = layer_norm(h2.reshape(M, E), ln2g_ref[0], ln2b_ref[0])
        f = jnp.dot(hn2.astype(cdt), w1_ref[0],
                    preferred_element_type=jnp.float32) + b1_ref[0]        # (M, F)
        f = 0.5 * f * (1.0 + jnp.tanh(0.7978845608028654 *
                                      (f + 0.044715 * f * f * f)))
        mlp = jnp.dot(f.astype(cdt), w2_ref[0],
                      preferred_element_type=jnp.float32) + b2_ref[0]      # (M, E)
        h_ref[...] = h2 + mlp.reshape(B, S, E)

    return kernel


# ----------------------------------------------------------------------------- LM head
def lm_head_kernel(h_ref, w_ref, b_ref, out_ref):
    out_ref[...] = jnp.dot(h_ref[...], w_ref[...],
                           preferred_element_type=jnp.float32) + b_ref[...]


# ----------------------------------------------------------------------------- params / wrapper
def init_params(key, num_blocks, vocab, embed, num_heads, head_dim, max_block,
                weight_dtype=jnp.bfloat16):
    HD = num_heads * head_dim
    F = 4 * embed
    ks = jax.random.split(key, 8)

    def nrm(k, shape, dtype, scale=0.02):
        return (scale * jax.random.normal(k, shape, dtype=jnp.float32)).astype(dtype)

    wqkv = nrm(ks[2], (num_blocks, embed, 3 * HD), weight_dtype)
    bqkv = jnp.zeros((num_blocks, 1, 3 * HD), jnp.float32)
    # fold the 1/sqrt(head_dim) attention scale into the Q columns (kernel does not rescale)
    attn_scale = 1.0 / (float(head_dim) ** 0.5)
    wqkv = wqkv.at[:, :, :HD].multiply(attn_scale)
    bqkv = bqkv.at[:, :, :HD].multiply(attn_scale)

    return dict(
        tok_emb=nrm(ks[0], (vocab, embed), jnp.float32),
        pos_emb=nrm(ks[1], (max_block, embed), jnp.float32),
        # per-layer vectors stored as (L, 1, C) so per-layer blocks are full in last two dims
        ln1_g=jnp.ones((num_blocks, 1, embed), jnp.float32),
        ln1_b=jnp.zeros((num_blocks, 1, embed), jnp.float32),
        wqkv=wqkv,
        bqkv=bqkv,
        wo=nrm(ks[3], (num_blocks, HD, embed), weight_dtype),
        bo=jnp.zeros((num_blocks, 1, embed), jnp.float32),
        ln2_g=jnp.ones((num_blocks, 1, embed), jnp.float32),
        ln2_b=jnp.zeros((num_blocks, 1, embed), jnp.float32),
        w1=nrm(ks[4], (num_blocks, embed, F), weight_dtype),
        b1=jnp.zeros((num_blocks, 1, F), jnp.float32),
        w2=nrm(ks[5], (num_blocks, F, embed), weight_dtype),
        b2=jnp.zeros((num_blocks, 1, embed), jnp.float32),
        w_head=nrm(ks[6], (embed, vocab), weight_dtype),
        b_head=jnp.zeros((vocab,), jnp.float32),
    )


def gpt_forward(x_tokens, params, *, num_heads, head_dim, y=None):
    B, S = x_tokens.shape
    V, E = params['tok_emb'].shape
    L = params['ln1_g'].shape[0]
    HD = num_heads * head_dim
    F = params['w1'].shape[-1]
    vmem_limit = _vmem_limit_bytes()

    # embedding lookups (data-dependent gather stays in plain JAX glue)
    tok = jnp.take(params['tok_emb'], x_tokens, axis=0)            # (B, S, E)
    pos = params['pos_emb'][:S]                                    # (S, E)
    h0 = (tok + pos[None, :, :]).astype(jnp.float32)

    perl3 = lambda l: (l, 0, 0)

    h_final = pl.pallas_call(
        make_decoder_stack_kernel(num_heads, head_dim),
        out_shape=jax.ShapeDtypeStruct((B, S, E), jnp.float32),
        grid=(L,),
        in_specs=[
            pl.BlockSpec(memory_space=pl.ANY),             # embeddings stay in HBM; DMA'd once
            pl.BlockSpec((1, 1, E), perl3),                # ln1_g
            pl.BlockSpec((1, 1, E), perl3),                # ln1_b
            pl.BlockSpec((1, E, 3 * HD), perl3),           # wqkv   (streamed per layer)
            pl.BlockSpec((1, 1, 3 * HD), perl3),           # bqkv
            pl.BlockSpec((1, HD, E), perl3),               # wo
            pl.BlockSpec((1, 1, E), perl3),                # bo
            pl.BlockSpec((1, 1, E), perl3),                # ln2_g
            pl.BlockSpec((1, 1, E), perl3),                # ln2_b
            pl.BlockSpec((1, E, F), perl3),                # w1
            pl.BlockSpec((1, 1, F), perl3),                # b1
            pl.BlockSpec((1, F, E), perl3),                # w2
            pl.BlockSpec((1, 1, E), perl3),                # b2
        ],
        out_specs=pl.BlockSpec((B, S, E), lambda l: (0, 0, 0)),   # VMEM-resident residual
        compiler_params=pltpu.CompilerParams(
            dimension_semantics=("arbitrary",),            # layer axis is a sequential carry
            vmem_limit_bytes=vmem_limit),
    )(h0,
      params['ln1_g'], params['ln1_b'], params['wqkv'], params['bqkv'],
      params['wo'], params['bo'], params['ln2_g'], params['ln2_b'],
      params['w1'], params['b1'], params['w2'], params['b2'])

    # ---- LM head: bf16 activations (cast once), (M, vocab)-tiled, lane-dense tiles ----
    M = B * S
    h_flat = h_final.reshape(M, E).astype(jnp.bfloat16)

    Vp = _round_up(V, 128)
    tv_cap = 512 if vmem_limit <= 48 * 1024 * 1024 else 1024   # bigger tiles on v5e/v6e
    tv = 128
    for cand in (1024, 512, 256, 128):
        if cand <= tv_cap and cand <= Vp and Vp % cand == 0:
            tv = cand
            break
    tm = min(512, _round_up(M, 8))
    Mp = _round_up(M, tm)
    if Mp != M:
        h_flat = jnp.pad(h_flat, ((0, Mp - M), (0, 0)))

    w_head = params['w_head']
    b_head = params['b_head'].astype(jnp.float32)
    if Vp != V:
        w_head = jnp.pad(w_head, ((0, 0), (0, Vp - V)))
        b_head = jnp.pad(b_head, (0, Vp - V))
    b_head = b_head.reshape(1, Vp)

    logits_p = pl.pallas_call(
        lm_head_kernel,
        out_shape=jax.ShapeDtypeStruct((Mp, Vp), jnp.float32),
        grid=(Mp // tm, Vp // tv),
        in_specs=[pl.BlockSpec((tm, E), lambda i, j: (i, 0)),
                  pl.BlockSpec((E, tv), lambda i, j: (0, j)),
                  pl.BlockSpec((1, tv), lambda i, j: (0, j))],
        out_specs=pl.BlockSpec((tm, tv), lambda i, j: (i, j)),
        compiler_params=pltpu.CompilerParams(
            dimension_semantics=("parallel", "parallel"),   # shards across TCs on v7x
            vmem_limit_bytes=vmem_limit),
    )(h_flat, w_head, b_head)

    logits = logits_p[:M, :V].reshape(B, S, V)

    loss = None
    if y is not None:
        logp = jax.nn.log_softmax(logits.reshape(M, V), axis=-1)
        loss = -jnp.mean(jnp.take_along_axis(logp, y.reshape(M, 1), axis=-1))
    return logits, loss


if __name__ == "__main__":
    # small shapes consistent with the module
    NUM_BLOCKS = 2
    VOCAB = 64
    EMBED = 32
    NUM_HEADS = 4
    HEAD_DIM = 8
    MAX_BLOCK = 16
    B, S = 2, 8

    key = jax.random.PRNGKey(0)
    k_params, k_tokens = jax.random.split(key)
    params = init_params(k_params, NUM_BLOCKS, VOCAB, EMBED,
                         NUM_HEADS, HEAD_DIM, MAX_BLOCK)
    x = jax.random.randint(k_tokens, (B, S), 0, VOCAB, dtype=jnp.int32)

    preds, loss = gpt_forward(x, params, num_heads=NUM_HEADS, head_dim=HEAD_DIM)
    jax.block_until_ready(preds)
    assert preds.shape == (B, S, VOCAB)
    print("KERNEL_OK")
</pallas_src>

<mosaic_0001>
module attributes {stable_mosaic.version = 11 : i64} {
  func.func @kernel(%arg0: i32, %arg1: memref<2x8x32xf32, #tpu.memory_space<any>>, %arg2: memref<1x1x32xf32, #tpu.memory_space<vmem>>, %arg3: memref<1x1x32xf32, #tpu.memory_space<vmem>>, %arg4: memref<1x32x96xbf16, #tpu.memory_space<vmem>>, %arg5: memref<1x1x96xf32, #tpu.memory_space<vmem>>, %arg6: memref<1x32x32xbf16, #tpu.memory_space<vmem>>, %arg7: memref<1x1x32xf32, #tpu.memory_space<vmem>>, %arg8: memref<1x1x32xf32, #tpu.memory_space<vmem>>, %arg9: memref<1x1x32xf32, #tpu.memory_space<vmem>>, %arg10: memref<1x32x128xbf16, #tpu.memory_space<vmem>>, %arg11: memref<1x1x128xf32, #tpu.memory_space<vmem>>, %arg12: memref<1x128x32xbf16, #tpu.memory_space<vmem>>, %arg13: memref<1x1x32xf32, #tpu.memory_space<vmem>>, %arg14: memref<2x8x32xf32, #tpu.memory_space<vmem>>) attributes {dimension_semantics = [#tpu.dimension_semantics<arbitrary>], iteration_bounds = array<i64: 2>, scalar_prefetch = 0 : i64, scratch_operands = 0 : i64, tpu.core_type = #tpu.core_type<tc>, window_params = [{}, {transform_indices = @transform_1, window_bounds = array<i64: 1, 1, 32>}, {transform_indices = @transform_2, window_bounds = array<i64: 1, 1, 32>}, {transform_indices = @transform_3, window_bounds = array<i64: 1, 32, 96>}, {transform_indices = @transform_4, window_bounds = array<i64: 1, 1, 96>}, {transform_indices = @transform_5, window_bounds = array<i64: 1, 32, 32>}, {transform_indices = @transform_6, window_bounds = array<i64: 1, 1, 32>}, {transform_indices = @transform_7, window_bounds = array<i64: 1, 1, 32>}, {transform_indices = @transform_8, window_bounds = array<i64: 1, 1, 32>}, {transform_indices = @transform_9, window_bounds = array<i64: 1, 32, 128>}, {transform_indices = @transform_10, window_bounds = array<i64: 1, 1, 128>}, {transform_indices = @transform_11, window_bounds = array<i64: 1, 128, 32>}, {transform_indices = @transform_12, window_bounds = array<i64: 1, 1, 32>}, {pipeline_mode = #tpu.pipeline_mode<synchronous>, transform_indices = @transform_13, window_bounds = array<i64: 2, 8, 32>}]} {
    %c0_i32 = arith.constant 0 : i32
    %0 = arith.cmpi eq, %arg0, %c0_i32 : i32
    %1 = arith.extui %0 : i1 to i32
    %c0_i32_0 = arith.constant 0 : i32
    %2 = arith.cmpi ne, %1, %c0_i32_0 : i32
    scf.if %2 {
      "tpu.region"() ({
        %146 = tpu.sem_alloc : memref<!tpu.dma_semaphore, #tpu.memory_space<semaphore_mem>>
        tpu.enqueue_dma source(%arg1 : memref<2x8x32xf32, #tpu.memory_space<any>>) target(%arg14 : memref<2x8x32xf32, #tpu.memory_space<vmem>>) target_semaphore(%146 : memref<!tpu.dma_semaphore, #tpu.memory_space<semaphore_mem>>)
        tpu.wait_dma2 semaphore(%146 : memref<!tpu.dma_semaphore, #tpu.memory_space<semaphore_mem>>) src(%arg1 : memref<2x8x32xf32, #tpu.memory_space<any>>) dst(%arg14 : memref<2x8x32xf32, #tpu.memory_space<vmem>>)
        tpu.yield
      }) : () -> ()
    } else {
    }
    %c0 = arith.constant 0 : index
    %c0_1 = arith.constant 0 : index
    %c0_2 = arith.constant 0 : index
    %3 = vector.load %arg14[%c0, %c0_1, %c0_2] : memref<2x8x32xf32, #tpu.memory_space<vmem>>, vector<2x8x32xf32>
    %4 = vector.shape_cast %3 : vector<2x8x32xf32> to vector<16x32xf32>
    %c0_3 = arith.constant 0 : index
    %c0_4 = arith.constant 0 : index
    %c0_5 = arith.constant 0 : index
    %5 = vector.load %arg2[%c0_3, %c0_4, %c0_5] : memref<1x1x32xf32, #tpu.memory_space<vmem>>, vector<1x1x32xf32>
    %6 = vector.shape_cast %5 : vector<1x1x32xf32> to vector<1x32xf32>
    %c0_6 = arith.constant 0 : index
    %c0_7 = arith.constant 0 : index
    %c0_8 = arith.constant 0 : index
    %7 = vector.load %arg3[%c0_6, %c0_7, %c0_8] : memref<1x1x32xf32, #tpu.memory_space<vmem>>, vector<1x1x32xf32>
    %8 = vector.shape_cast %7 : vector<1x1x32xf32> to vector<1x32xf32>
    %cst = arith.constant dense<0.000000e+00> : vector<16xf32>
    %9 = vector.multi_reduction <add>, %4, %cst [1] : vector<16x32xf32> to vector<16xf32>
    %10 = vector.shape_cast %9 : vector<16xf32> to vector<16x1xf32>
    %cst_9 = arith.constant 3.200000e+01 : f32
    %11 = vector.broadcast %cst_9 : f32 to vector<16x1xf32>
    %12 = arith.divf %10, %11 : vector<16x1xf32>
    %13 = vector.broadcast %12 : vector<16x1xf32> to vector<16x32xf32>
    %14 = arith.subf %4, %13 : vector<16x32xf32>
    %15 = arith.mulf %14, %14 : vector<16x32xf32>
    %cst_10 = arith.constant dense<0.000000e+00> : vector<16xf32>
    %16 = vector.multi_reduction <add>, %15, %cst_10 [1] : vector<16x32xf32> to vector<16xf32>
    %17 = vector.shape_cast %16 : vector<16xf32> to vector<16x1xf32>
    %cst_11 = arith.constant 3.200000e+01 : f32
    %18 = vector.broadcast %cst_11 : f32 to vector<16x1xf32>
    %19 = arith.divf %17, %18 : vector<16x1xf32>
    %20 = vector.broadcast %12 : vector<16x1xf32> to vector<16x32xf32>
    %21 = arith.subf %4, %20 : vector<16x32xf32>
    %cst_12 = arith.constant 9.99999974E-6 : f32
    %22 = vector.broadcast %cst_12 : f32 to vector<16x1xf32>
    %23 = arith.addf %19, %22 : vector<16x1xf32>
    %24 = math.rsqrt %23 : vector<16x1xf32>
    %25 = vector.broadcast %24 : vector<16x1xf32> to vector<16x32xf32>
    %26 = arith.mulf %21, %25 : vector<16x32xf32>
    %27 = vector.broadcast %6 : vector<1x32xf32> to vector<16x32xf32>
    %28 = arith.mulf %26, %27 : vector<16x32xf32>
    %29 = vector.broadcast %8 : vector<1x32xf32> to vector<16x32xf32>
    %30 = arith.addf %28, %29 : vector<16x32xf32>
    %31 = arith.truncf %30 : vector<16x32xf32> to vector<16x32xbf16>
    %c0_13 = arith.constant 0 : index
    %c0_14 = arith.constant 0 : index
    %c0_15 = arith.constant 0 : index
    %32 = vector.load %arg4[%c0_13, %c0_14, %c0_15] : memref<1x32x96xbf16, #tpu.memory_space<vmem>>, vector<1x32x96xbf16>
    %33 = vector.shape_cast %32 : vector<1x32x96xbf16> to vector<32x96xbf16>
    %cst_16 = arith.constant dense<0.000000e+00> : vector<16x96xf32>
    %34 = tpu.matmul %31, %33, %cst_16 {dimension_numbers = #tpu.dot_dimension_numbers<[1], [0], [0], [1], [0, 0, 1, 1], [], []>} : vector<16x32xbf16>, vector<32x96xbf16>, vector<16x96xf32> -> vector<16x96xf32>
    %c0_17 = arith.constant 0 : index
    %c0_18 = arith.constant 0 : index
    %c0_19 = arith.constant 0 : index
    %35 = vector.load %arg5[%c0_17, %c0_18, %c0_19] : memref<1x1x96xf32, #tpu.memory_space<vmem>>, vector<1x1x96xf32>
    %36 = vector.shape_cast %35 : vector<1x1x96xf32> to vector<1x96xf32>
    %37 = vector.broadcast %36 : vector<1x96xf32> to vector<16x96xf32>
    %38 = arith.addf %34, %37 : vector<16x96xf32>
    %39 = arith.truncf %38 : vector<16x96xf32> to vector<16x96xbf16>
    %40 = vector.shape_cast %39 : vector<16x96xbf16> to vector<16x12x8xbf16>
    %41 = tpu.transpose %40, [1, 0, 2] : vector<16x12x8xbf16> -> vector<12x16x8xbf16>
    %42 = vector.extract_strided_slice %41 {offsets = [0, 0, 0], sizes = [4, 16, 8], strides = [1, 1, 1]} : vector<12x16x8xbf16> to vector<4x16x8xbf16>
    %43 = vector.shape_cast %42 : vector<4x16x8xbf16> to vector<8x8x8xbf16>
    %44 = vector.extract_strided_slice %41 {offsets = [4, 0, 0], sizes = [4, 16, 8], strides = [1, 1, 1]} : vector<12x16x8xbf16> to vector<4x16x8xbf16>
    %45 = vector.shape_cast %44 : vector<4x16x8xbf16> to vector<8x8x8xbf16>
    %46 = vector.extract_strided_slice %41 {offsets = [8, 0, 0], sizes = [4, 16, 8], strides = [1, 1, 1]} : vector<12x16x8xbf16> to vector<4x16x8xbf16>
    %47 = vector.shape_cast %46 : vector<4x16x8xbf16> to vector<8x8x8xbf16>
    %c0_20 = arith.constant 0 : index
    %c0_21 = arith.constant 0 : index
    %c0_22 = arith.constant 0 : index
    %48 = vector.load %arg6[%c0_20, %c0_21, %c0_22] : memref<1x32x32xbf16, #tpu.memory_space<vmem>>, vector<1x32x32xbf16>
    %49 = vector.shape_cast %48 : vector<1x32x32xbf16> to vector<32x32xbf16>
    %c0_23 = arith.constant 0 : index
    %c0_24 = arith.constant 0 : index
    %c0_25 = arith.constant 0 : index
    %50 = vector.load %arg7[%c0_23, %c0_24, %c0_25] : memref<1x1x32xf32, #tpu.memory_space<vmem>>, vector<1x1x32xf32>
    %51 = vector.shape_cast %50 : vector<1x1x32xf32> to vector<1x32xf32>
    "tpu.trace_start"() <{level = 10 : i32, message = "bqd,bkd->bqk"}> : () -> ()
    %cst_26 = arith.constant dense<0.000000e+00> : vector<8x8x8xf32>
    %52 = tpu.matmul %43, %45, %cst_26 {dimension_numbers = #tpu.dot_dimension_numbers<[2], [2], [1], [1], [0, 0, 0, 1, 1, 1], [0], [0]>} : vector<8x8x8xbf16>, vector<8x8x8xbf16>, vector<8x8x8xf32> -> vector<8x8x8xf32>
    "tpu.trace_stop"() : () -> ()
    %53 = tpu.iota {dimensions = array<i32: 0>} : vector<8x8xi32>
    %c0_i32_27 = arith.constant 0 : i32
    %54 = vector.broadcast %c0_i32_27 : i32 to vector<8x8xi32>
    %55 = arith.addi %53, %54 : vector<8x8xi32>
    %56 = tpu.iota {dimensions = array<i32: 1>} : vector<8x8xi32>
    %57 = arith.cmpi sle, %56, %55 : vector<8x8xi32>
    %cst_28 = arith.constant 0.000000e+00 : f32
    %cst_29 = arith.constant -1.000000e+30 : f32
    %58 = vector.broadcast %cst_28 : f32 to vector<8x8xf32>
    %59 = vector.broadcast %cst_29 : f32 to vector<8x8xf32>
    %60 = arith.select %57, %58, %59 : vector<8x8xi1>, vector<8x8xf32>
    %61 = vector.shape_cast %60 : vector<8x8xf32> to vector<1x8x8xf32>
    %62 = vector.broadcast %61 : vector<1x8x8xf32> to vector<8x8x8xf32>
    %63 = arith.addf %52, %62 : vector<8x8x8xf32>
    %cst_30 = arith.constant dense<0xFF800000> : vector<8x8xf32>
    %64 = vector.multi_reduction <maximumf>, %63, %cst_30 [2] : vector<8x8x8xf32> to vector<8x8xf32>
    %65 = vector.shape_cast %64 : vector<8x8xf32> to vector<8x8x1xf32>
    %66 = vector.broadcast %65 : vector<8x8x1xf32> to vector<8x8x8xf32>
    %67 = arith.subf %63, %66 : vector<8x8x8xf32>
    %68 = math.exp %67 : vector<8x8x8xf32>
    %cst_31 = arith.constant dense<0.000000e+00> : vector<8x8xf32>
    %69 = vector.multi_reduction <add>, %68, %cst_31 [2] : vector<8x8x8xf32> to vector<8x8xf32>
    %70 = vector.shape_cast %69 : vector<8x8xf32> to vector<8x8x1xf32>
    %71 = tpu.reciprocal %70 {approx = true} : vector<8x8x1xf32> -> vector<8x8x1xf32>
    %72 = arith.truncf %68 : vector<8x8x8xf32> to vector<8x8x8xbf16>
    "tpu.trace_start"() <{level = 10 : i32, message = "bqk,bkd->bqd"}> : () -> ()
    %cst_32 = arith.constant dense<0.000000e+00> : vector<8x8x8xf32>
    %73 = tpu.matmul %72, %47, %cst_32 {dimension_numbers = #tpu.dot_dimension_numbers<[2], [1], [1], [2], [0, 0, 0, 1, 1, 2], [0], [0]>} : vector<8x8x8xbf16>, vector<8x8x8xbf16>, vector<8x8x8xf32> -> vector<8x8x8xf32>
    "tpu.trace_stop"() : () -> ()
    %74 = vector.broadcast %71 : vector<8x8x1xf32> to vector<8x8x8xf32>
    %75 = arith.mulf %73, %74 : vector<8x8x8xf32>
    %76 = arith.truncf %75 : vector<8x8x8xf32> to vector<8x8x8xbf16>
    %77 = vector.shape_cast %76 : vector<8x8x8xbf16> to vector<4x16x8xbf16>
    %78 = tpu.transpose %77, [1, 0, 2] : vector<4x16x8xbf16> -> vector<16x4x8xbf16>
    %79 = vector.shape_cast %78 : vector<16x4x8xbf16> to vector<16x32xbf16>
    %cst_33 = arith.constant dense<0.000000e+00> : vector<16x32xf32>
    %80 = tpu.matmul %79, %49, %cst_33 {dimension_numbers = #tpu.dot_dimension_numbers<[1], [0], [0], [1], [0, 0, 1, 1], [], []>} : vector<16x32xbf16>, vector<32x32xbf16>, vector<16x32xf32> -> vector<16x32xf32>
    %81 = vector.broadcast %51 : vector<1x32xf32> to vector<16x32xf32>
    %82 = arith.addf %80, %81 : vector<16x32xf32>
    %83 = vector.shape_cast %82 : vector<16x32xf32> to vector<2x8x32xf32>
    %84 = arith.addf %3, %83 : vector<2x8x32xf32>
    %c0_34 = arith.constant 0 : index
    %c0_35 = arith.constant 0 : index
    %c0_36 = arith.constant 0 : index
    %85 = vector.load %arg14[%c0_34, %c0_35, %c0_36] : memref<2x8x32xf32, #tpu.memory_space<vmem>>, vector<2x8x32xf32>
    tpu.vector_store %arg14[%c0_34, %c0_35, %c0_36], %84 {strides = array<i32>} : memref<2x8x32xf32, #tpu.memory_space<vmem>>, vector<2x8x32xf32>,
    %c0_37 = arith.constant 0 : index
    %c0_38 = arith.constant 0 : index
    %c0_39 = arith.constant 0 : index
    %86 = vector.load %arg14[%c0_37, %c0_38, %c0_39] : memref<2x8x32xf32, #tpu.memory_space<vmem>>, vector<2x8x32xf32>
    %87 = vector.shape_cast %86 : vector<2x8x32xf32> to vector<16x32xf32>
    %c0_40 = arith.constant 0 : index
    %c0_41 = arith.constant 0 : index
    %c0_42 = arith.constant 0 : index
    %88 = vector.load %arg8[%c0_40, %c0_41, %c0_42] : memref<1x1x32xf32, #tpu.memory_space<vmem>>, vector<1x1x32xf32>
    %89 = vector.shape_cast %88 : vector<1x1x32xf32> to vector<1x32xf32>
    %c0_43 = arith.constant 0 : index
    %c0_44 = arith.constant 0 : index
    %c0_45 = arith.constant 0 : index
    %90 = vector.load %arg9[%c0_43, %c0_44, %c0_45] : memref<1x1x32xf32, #tpu.memory_space<vmem>>, vector<1x1x32xf32>
    %91 = vector.shape_cast %90 : vector<1x1x32xf32> to vector<1x32xf32>
    %cst_46 = arith.constant dense<0.000000e+00> : vector<16xf32>
    %92 = vector.multi_reduction <add>, %87, %cst_46 [1] : vector<16x32xf32> to vector<16xf32>
    %93 = vector.shape_cast %92 : vector<16xf32> to vector<16x1xf32>
    %cst_47 = arith.constant 3.200000e+01 : f32
    %94 = vector.broadcast %cst_47 : f32 to vector<16x1xf32>
    %95 = arith.divf %93, %94 : vector<16x1xf32>
    %96 = vector.broadcast %95 : vector<16x1xf32> to vector<16x32xf32>
    %97 = arith.subf %87, %96 : vector<16x32xf32>
    %98 = arith.mulf %97, %97 : vector<16x32xf32>
    %cst_48 = arith.constant dense<0.000000e+00> : vector<16xf32>
    %99 = vector.multi_reduction <add>, %98, %cst_48 [1] : vector<16x32xf32> to vector<16xf32>
    %100 = vector.shape_cast %99 : vector<16xf32> to vector<16x1xf32>
    %cst_49 = arith.constant 3.200000e+01 : f32
    %101 = vector.broadcast %cst_49 : f32 to vector<16x1xf32>
    %102 = arith.divf %100, %101 : vector<16x1xf32>
    %103 = vector.broadcast %95 : vector<16x1xf32> to vector<16x32xf32>
    %104 = arith.subf %87, %103 : vector<16x32xf32>
    %cst_50 = arith.constant 9.99999974E-6 : f32
    %105 = vector.broadcast %cst_50 : f32 to vector<16x1xf32>
    %106 = arith.addf %102, %105 : vector<16x1xf32>
    %107 = math.rsqrt %106 : vector<16x1xf32>
    %108 = vector.broadcast %107 : vector<16x1xf32> to vector<16x32xf32>
    %109 = arith.mulf %104, %108 : vector<16x32xf32>
    %110 = vector.broadcast %89 : vector<1x32xf32> to vector<16x32xf32>
    %111 = arith.mulf %109, %110 : vector<16x32xf32>
    %112 = vector.broadcast %91 : vector<1x32xf32> to vector<16x32xf32>
    %113 = arith.addf %111, %112 : vector<16x32xf32>
    %114 = arith.truncf %113 : vector<16x32xf32> to vector<16x32xbf16>
    %c0_51 = arith.constant 0 : index
    %c0_52 = arith.constant 0 : index
    %c0_53 = arith.constant 0 : index
    %115 = vector.load %arg10[%c0_51, %c0_52, %c0_53] : memref<1x32x128xbf16, #tpu.memory_space<vmem>>, vector<1x32x128xbf16>
    %116 = vector.shape_cast %115 : vector<1x32x128xbf16> to vector<32x128xbf16>
    %cst_54 = arith.constant dense<0.000000e+00> : vector<16x128xf32>
    %117 = tpu.matmul %114, %116, %cst_54 {dimension_numbers = #tpu.dot_dimension_numbers<[1], [0], [0], [1], [0, 0, 1, 1], [], []>} : vector<16x32xbf16>, vector<32x128xbf16>, vector<16x128xf32> -> vector<16x128xf32>
    %c0_55 = arith.constant 0 : index
    %c0_56 = arith.constant 0 : index
    %c0_57 = arith.constant 0 : index
    %118 = vector.load %arg11[%c0_55, %c0_56, %c0_57] : memref<1x1x128xf32, #tpu.memory_space<vmem>>, vector<1x1x128xf32>
    %119 = vector.shape_cast %118 : vector<1x1x128xf32> to vector<1x128xf32>
    %120 = vector.broadcast %119 : vector<1x128xf32> to vector<16x128xf32>
    %121 = arith.addf %117, %120 : vector<16x128xf32>
    %cst_58 = arith.constant 5.000000e-01 : f32
    %122 = vector.broadcast %cst_58 : f32 to vector<16x128xf32>
    %123 = arith.mulf %122, %121 : vector<16x128xf32>
    %cst_59 = arith.constant 4.471500e-02 : f32
    %124 = vector.broadcast %cst_59 : f32 to vector<16x128xf32>
    %125 = arith.mulf %124, %121 : vector<16x128xf32>
    %126 = arith.mulf %125, %121 : vector<16x128xf32>
    %127 = arith.mulf %126, %121 : vector<16x128xf32>
    %128 = arith.addf %121, %127 : vector<16x128xf32>
    %cst_60 = arith.constant 0.797884583 : f32
    %129 = vector.broadcast %cst_60 : f32 to vector<16x128xf32>
    %130 = arith.mulf %129, %128 : vector<16x128xf32>
    %131 = math.tanh %130 : vector<16x128xf32>
    %cst_61 = arith.constant 1.000000e+00 : f32
    %132 = vector.broadcast %cst_61 : f32 to vector<16x128xf32>
    %133 = arith.addf %132, %131 : vector<16x128xf32>
    %134 = arith.mulf %123, %133 : vector<16x128xf32>
    %135 = arith.truncf %134 : vector<16x128xf32> to vector<16x128xbf16>
    %c0_62 = arith.constant 0 : index
    %c0_63 = arith.constant 0 : index
    %c0_64 = arith.constant 0 : index
    %136 = vector.load %arg12[%c0_62, %c0_63, %c0_64] : memref<1x128x32xbf16, #tpu.memory_space<vmem>>, vector<1x128x32xbf16>
    %137 = vector.shape_cast %136 : vector<1x128x32xbf16> to vector<128x32xbf16>
    %cst_65 = arith.constant dense<0.000000e+00> : vector<16x32xf32>
    %138 = tpu.matmul %135, %137, %cst_65 {dimension_numbers = #tpu.dot_dimension_numbers<[1], [0], [0], [1], [0, 0, 1, 1], [], []>} : vector<16x128xbf16>, vector<128x32xbf16>, vector<16x32xf32> -> vector<16x32xf32>
    %c0_66 = arith.constant 0 : index
    %c0_67 = arith.constant 0 : index
    %c0_68 = arith.constant 0 : index
    %139 = vector.load %arg13[%c0_66, %c0_67, %c0_68] : memref<1x1x32xf32, #tpu.memory_space<vmem>>, vector<1x1x32xf32>
    %140 = vector.shape_cast %139 : vector<1x1x32xf32> to vector<1x32xf32>
    %141 = vector.broadcast %140 : vector<1x32xf32> to vector<16x32xf32>
    %142 = arith.addf %138, %141 : vector<16x32xf32>
    %143 = vector.shape_cast %142 : vector<16x32xf32> to vector<2x8x32xf32>
    %144 = arith.addf %86, %143 : vector<2x8x32xf32>
    %c0_69 = arith.constant 0 : index
    %c0_70 = arith.constant 0 : index
    %c0_71 = arith.constant 0 : index
    %145 = vector.load %arg14[%c0_69, %c0_70, %c0_71] : memref<2x8x32xf32, #tpu.memory_space<vmem>>, vector<2x8x32xf32>
    tpu.vector_store %arg14[%c0_69, %c0_70, %c0_71], %144 {strides = array<i32>} : memref<2x8x32xf32, #tpu.memory_space<vmem>>, vector<2x8x32xf32>,
    return
  }
  func.func @transform_1(%arg0: i32) -> (i32, i32, i32) {
    %c0_i32 = arith.constant 0 : i32
    %c0_i32_0 = arith.constant 0 : i32
    %c0_i32_1 = arith.constant 0 : i32
    return %arg0, %c0_i32, %c0_i32_0 : i32, i32, i32
  }
  func.func @transform_2(%arg0: i32) -> (i32, i32, i32) {
    %c0_i32 = arith.constant 0 : i32
    %c0_i32_0 = arith.constant 0 : i32
    %c0_i32_1 = arith.constant 0 : i32
    return %arg0, %c0_i32, %c0_i32_0 : i32, i32, i32
  }
  func.func @transform_3(%arg0: i32) -> (i32, i32, i32) {
    %c0_i32 = arith.constant 0 : i32
    %c0_i32_0 = arith.constant 0 : i32
    %c0_i32_1 = arith.constant 0 : i32
    return %arg0, %c0_i32, %c0_i32_0 : i32, i32, i32
  }
  func.func @transform_4(%arg0: i32) -> (i32, i32, i32) {
    %c0_i32 = arith.constant 0 : i32
    %c0_i32_0 = arith.constant 0 : i32
    %c0_i32_1 = arith.constant 0 : i32
    return %arg0, %c0_i32, %c0_i32_0 : i32, i32, i32
  }
  func.func @transform_5(%arg0: i32) -> (i32, i32, i32) {
    %c0_i32 = arith.constant 0 : i32
    %c0_i32_0 = arith.constant 0 : i32
    %c0_i32_1 = arith.constant 0 : i32
    return %arg0, %c0_i32, %c0_i32_0 : i32, i32, i32
  }
  func.func @transform_6(%arg0: i32) -> (i32, i32, i32) {
    %c0_i32 = arith.constant 0 : i32
    %c0_i32_0 = arith.constant 0 : i32
    %c0_i32_1 = arith.constant 0 : i32
    return %arg0, %c0_i32, %c0_i32_0 : i32, i32, i32
  }
  func.func @transform_7(%arg0: i32) -> (i32, i32, i32) {
    %c0_i32 = arith.constant 0 : i32
    %c0_i32_0 = arith.constant 0 : i32
    %c0_i32_1 = arith.constant 0 : i32
    return %arg0, %c0_i32, %c0_i32_0 : i32, i32, i32
  }
  func.func @transform_8(%arg0: i32) -> (i32, i32, i32) {
    %c0_i32 = arith.constant 0 : i32
    %c0_i32_0 = arith.constant 0 : i32
    %c0_i32_1 = arith.constant 0 : i32
    return %arg0, %c0_i32, %c0_i32_0 : i32, i32, i32
  }
  func.func @transform_9(%arg0: i32) -> (i32, i32, i32) {
    %c0_i32 = arith.constant 0 : i32
    %c0_i32_0 = arith.constant 0 : i32
    %c0_i32_1 = arith.constant 0 : i32
    return %arg0, %c0_i32, %c0_i32_0 : i32, i32, i32
  }
  func.func @transform_10(%arg0: i32) -> (i32, i32, i32) {
    %c0_i32 = arith.constant 0 : i32
    %c0_i32_0 = arith.constant 0 : i32
    %c0_i32_1 = arith.constant 0 : i32
    return %arg0, %c0_i32, %c0_i32_0 : i32, i32, i32
  }
  func.func @transform_11(%arg0: i32) -> (i32, i32, i32) {
    %c0_i32 = arith.constant 0 : i32
    %c0_i32_0 = arith.constant 0 : i32
    %c0_i32_1 = arith.constant 0 : i32
    return %arg0, %c0_i32, %c0_i32_0 : i32, i32, i32
  }
  func.func @transform_12(%arg0: i32) -> (i32, i32, i32) {
    %c0_i32 = arith.constant 0 : i32
    %c0_i32_0 = arith.constant 0 : i32
    %c0_i32_1 = arith.constant 0 : i32
    return %arg0, %c0_i32, %c0_i32_0 : i32, i32, i32
  }
  func.func @transform_13(%arg0: i32) -> (i32, i32, i32) {
    %c0_i32 = arith.constant 0 : i32
    %c0_i32_0 = arith.constant 0 : i32
    %c0_i32_1 = arith.constant 0 : i32
    %c0_i32_2 = arith.constant 0 : i32
    return %c0_i32, %c0_i32_0, %c0_i32_1 : i32, i32, i32
  }
}

</mosaic_0001>

<llo_original>
// kernel: tpu_custom_call.1
$region0: #{tpu_custom_call.1}
  #allocation0 [shape = 'u32[]', space=smem, size = 0x4, offset = 0x4, fixed_abs, tag = 'smem constant byte address 0x4 - core index']
  #allocation1 [shape = 'u32[144,128]{1,0:T(1,128)}', space=vmem, size = 0x12000, scoped, tag = 'internal scratch']
  #allocation24 [shape = 's32[]', space=sflag, size = 0x4, offset = 0, fixed_abs, tag = 'sflag constant byte address 0x0 - dummy sync flag']
  #allocation25 [shape = 's32[]', space=sflag, size = 0x4, offset = 0, fixed_abs, tag = 'sflag constant byte address 0x0 - dummy sync flag']
  #allocation26 [shape = 'u32[]', space=smem, size = 0x4, offset = 0x44, fixed_abs, tag = 'smem constant byte address 0x44 - assertion arg 0']
  #allocation27 [shape = 'u32[]', space=smem, size = 0x4, offset = 0x48, fixed_abs, tag = 'smem constant byte address 0x48 - assertion arg 1']
  %s0 = inlined_call_operand.hbm [shape: f32[2,8,32], index: 0, kind: input, shape index: {}]
  %s1 = inlined_call_operand.hbm [shape: f32[2,1,32], index: 1, kind: input, shape index: {}]
  %s2 = inlined_call_operand.hbm [shape: f32[2,1,32], index: 2, kind: input, shape index: {}]
  %s3 = inlined_call_operand.hbm [shape: bf16[2,32,96], index: 3, kind: input, shape index: {}]
  %s4 = inlined_call_operand.hbm [shape: f32[2,1,96], index: 4, kind: input, shape index: {}]
  %s5 = inlined_call_operand.hbm [shape: bf16[2,32,32], index: 5, kind: input, shape index: {}]
  %s6 = inlined_call_operand.hbm [shape: f32[2,1,32], index: 6, kind: input, shape index: {}]
  %s7 = inlined_call_operand.hbm [shape: f32[2,1,32], index: 7, kind: input, shape index: {}]
  %s8 = inlined_call_operand.hbm [shape: f32[2,1,32], index: 8, kind: input, shape index: {}]
  %s9 = inlined_call_operand.hbm [shape: bf16[2,32,128], index: 9, kind: input, shape index: {}]
  %s10 = inlined_call_operand.hbm [shape: f32[2,1,128], index: 10, kind: input, shape index: {}]
  %s11 = inlined_call_operand.hbm [shape: bf16[2,128,32], index: 11, kind: input, shape index: {}]
  %s12 = inlined_call_operand.hbm [shape: f32[2,1,32], index: 12, kind: input, shape index: {}]
  %s13 = inlined_call_operand.hbm [shape: f32[2,8,32], index: 13, kind: output, shape index: {}]
  %s14 = sld [smem:[#allocation0]]
  $region138: #{tpu_custom_call.1} parent=0
    _
  %s16 = ssub.s32 1, %s14
  %s17 = scalar_select 0, %s16, %s14
  $region1: #{tpu_custom_call.1} parent=0
    #allocation2 [shape = 'u8[1024]{0}', space=vmem, size = 0x400, scoped, tag = 'input window, operand 1']
    #allocation3 [shape = 's32[2]{0}', space=sflag, size = 0x8, scoped, tag = 'scoped memory for tpu_custom_call.1']
    #allocation4 [shape = 's32[2]{0}', space=sflag, size = 0x8, scoped, tag = 'scoped memory for tpu_custom_call.1']
    #allocation5 [shape = 'u8[1024]{0}', space=vmem, size = 0x400, scoped, tag = 'input window, operand 2']
    #allocation6 [shape = 's32[2]{0}', space=sflag, size = 0x8, scoped, tag = 'scoped memory for tpu_custom_call.1']
    #allocation7 [shape = 'u8[16384]{0}', space=vmem, size = 0x4000, scoped, tag = 'input window, operand 3']
    #allocation8 [shape = 'u8[1024]{0}', space=vmem, size = 0x400, scoped, tag = 'input window, operand 4']
    #allocation9 [shape = 's32[2]{0}', space=sflag, size = 0x8, scoped, tag = 'scoped memory for tpu_custom_call.1']
    #allocation10 [shape = 'u8[16384]{0}', space=vmem, size = 0x4000, scoped, tag = 'input window, operand 5']
    #allocation11 [shape = 'u8[1024]{0}', space=vmem, size = 0x400, scoped, tag = 'input window, operand 6']
    #allocation12 [shape = 's32[2]{0}', space=sflag, size = 0x8, scoped, tag = 'scoped memory for tpu_custom_call.1']
    #allocation13 [shape = 'u8[1024]{0}', space=vmem, size = 0x400, scoped, tag = 'input window, operand 7']
    #allocation14 [shape = 'u8[1024]{0}', space=vmem, size = 0x400, scoped, tag = 'input window, operand 8']
    #allocation15 [shape = 's32[2]{0}', space=sflag, size = 0x8, scoped, tag = 'scoped memory for tpu_custom_call.1']
    #allocation16 [shape = 'u8[16384]{0}', space=vmem, size = 0x4000, scoped, tag = 'input window, operand 9']
    #allocation17 [shape = 'u8[1024]{0}', space=vmem, size = 0x400, scoped, tag = 'input window, operand 10']
    #allocation18 [shape = 's32[2]{0}', space=sflag, size = 0x8, scoped, tag = 'scoped memory for tpu_custom_call.1']
    #allocation19 [shape = 'u8[65536]{0}', space=vmem, size = 0x10000, scoped, tag = 'input window, operand 11']
    #allocation20 [shape = 'u8[1024]{0}', space=vmem, size = 0x400, scoped, tag = 'input window, operand 12']
    #allocation21 [shape = 's32[2]{0}', space=sflag, size = 0x8, scoped, tag = 'scoped memory for tpu_custom_call.1']
    #allocation22 [shape = 'u8[8192]{0}', space=vmem, size = 0x2000, scoped, tag = 'output window, operand 0, single buffered']
    %18 = vsyncpa [#allocation3], 0
    %s19 = scalar_lea.sflag [#allocation3], 1
    %20 = vsyncpa %s19, 0
    %21 = vsyncpa [#allocation6], 0
    %s22 = scalar_lea.sflag [#allocation6], 1
    %23 = vsyncpa %s22, 0
    %24 = vsyncpa [#allocation9], 0
    %s25 = scalar_lea.sflag [#allocation9], 1
    %26 = vsyncpa %s25, 0
    %27 = vsyncpa [#allocation12], 0
    %s28 = scalar_lea.sflag [#allocation12], 1
    %29 = vsyncpa %s28, 0
    %30 = vsyncpa [#allocation15], 0
    %s31 = scalar_lea.sflag [#allocation15], 1
    %32 = vsyncpa %s31, 0
    %33 = vsyncpa [#allocation18], 0
    %s34 = scalar_lea.sflag [#allocation18], 1
    %35 = vsyncpa %s34, 0
    %36 = vsyncpa [#allocation21], 0
    %s37 = scalar_lea.sflag [#allocation21], 1
    %38 = vsyncpa %s37, 0
    %39 = vsyncpa [#allocation4], 0
    loop: start=0, step=1, limit=4
    $region2: #{tpu_custom_call.1} parent=1 // loop_pre_header
      _
    $region3: #{tpu_custom_call.1} parent=1 // loop_header
      %s41 = sphi 0, %s45
      %p42 = scmp.ge.s32.totalorder %s41, 4
      %s51 = sphi 0, %s53
      %s54 = sphi 0, %s51
      %s55 = sphi 0, %s54
      %s71 = sphi 0, %s55
      %s77 = sphi 0, %s79
      %s80 = sphi 0, %s77
      %s81 = sphi 0, %s80
      %s97 = sphi 0, %s81
      %s103 = sphi 0, %s105
      %s106 = sphi 0, %s103
      %s107 = sphi 0, %s106
      %s123 = sphi 0, %s107
      %s129 = sphi 0, %s131
      %s132 = sphi 0, %s129
      %s133 = sphi 0, %s132
      %s149 = sphi 0, %s133
      %s155 = sphi 0, %s157
      %s158 = sphi 0, %s155
      %s159 = sphi 0, %s158
      %s175 = sphi 0, %s159
      %s181 = sphi 0, %s183
      %s184 = sphi 0, %s181
      %s185 = sphi 0, %s184
      %s201 = sphi 0, %s185
      %s207 = sphi 0, %s209
      %s210 = sphi 0, %s207
      %s211 = sphi 0, %s210
      %s227 = sphi 0, %s211
      %s233 = sphi 0, %s235
      %s236 = sphi 0, %s233
      %s237 = sphi 0, %s236
      %s253 = sphi 0, %s237
      %s259 = sphi 0, %s261
      %s262 = sphi 0, %s259
      %s263 = sphi 0, %s262
      %s279 = sphi 0, %s263
      %s285 = sphi 0, %s287
      %s288 = sphi 0, %s285
      %s289 = sphi 0, %s288
      %s305 = sphi 0, %s289
      %s311 = sphi 0, %s313
      %s314 = sphi 0, %s311
      %s315 = sphi 0, %s314
      %s331 = sphi 0, %s315
      %s337 = sphi 0, %s339
      %s340 = sphi 0, %s337
      %s341 = sphi 0, %s340
      %s357 = sphi 0, %s341
      %s361 = sphi 0, %s361
      %s363 = sphi 0, %s361
      %s364 = sphi 0, %s363
      %s378 = sphi 0, %s364
    $region4: #{tpu_custom_call.1} parent=1 // loop_header_branch
      %44 = sbr.rel (%p42) target = $region8
    $region5: #{tpu_custom_call.1} parent=1 // loop_body
      %s46 = ssub.s32 %s41, 1
      %s47 = ssub.s32 %s41, 2
      %s48 = sadd.s32 %s41, 1
      %s49 = ssub.s32 %s41, %s48
      %p50 = scmp.eq.s32.totalorder %s49, 0
      %s52 = sadd.s32 %s51, 1
      %s53 = scalar_select %p50, %s51, %s52
      %p56 = pneg %p50
      %p57 = scmp.eq.s32.totalorder %s41, 1
      %p58 = por %p56, %p57
      %p59 = scmp.ne.s32.totalorder %s51, %s54
      %p60 = scmp.eq.s32.totalorder %s41, 0
      %p61 = por %p59, %p60
      %p62 = scmp.ne.s32.totalorder %s51, %s54
      %p63 = scmp.eq.s32.totalorder %s46, 1
      %p64 = por %p62, %p63
      %p65 = scmp.ne.s32.totalorder %s54, %s55
      %p66 = scmp.eq.s32.totalorder %s46, 0
      %p67 = por %p65, %p66
      %p68 = scmp.ne.s32.totalorder %s54, %s55
      %p69 = scmp.eq.s32.totalorder %s47, 1
      %p70 = por %p68, %p69
      %p72 = scmp.ne.s32.totalorder %s55, %s71
      %p73 = scmp.eq.s32.totalorder %s47, 0
      %p74 = por %p72, %p73
      %s75 = ssub.s32 %s41, %s48
      %p76 = scmp.eq.s32.totalorder %s75, 0
      %s78 = sadd.s32 %s77, 1
      %s79 = scalar_select %p76, %s77, %s78
      %p82 = pneg %p76
      %p83 = scmp.eq.s32.totalorder %s41, 1
      %p84 = por %p82, %p83
      %p85 = scmp.ne.s32.totalorder %s77, %s80
      %p86 = scmp.eq.s32.totalorder %s41, 0
      %p87 = por %p85, %p86
      %p88 = scmp.ne.s32.totalorder %s77, %s80
      %p89 = scmp.eq.s32.totalorder %s46, 1
      %p90 = por %p88, %p89
      %p91 = scmp.ne.s32.totalorder %s80, %s81
      %p92 = scmp.eq.s32.totalorder %s46, 0
      %p93 = por %p91, %p92
      %p94 = scmp.ne.s32.totalorder %s80, %s81
      %p95 = scmp.eq.s32.totalorder %s47, 1
      %p96 = por %p94, %p95
      %p98 = scmp.ne.s32.totalorder %s81, %s97
      %p99 = scmp.eq.s32.totalorder %s47, 0
      %p100 = por %p98, %p99
      %s101 = ssub.s32 %s41, %s48
      %p102 = scmp.eq.s32.totalorder %s101, 0
      %s104 = sadd.s32 %s103, 1
      %s105 = scalar_select %p102, %s103, %s104
      %p108 = pneg %p102
      %p109 = scmp.eq.s32.totalorder %s41, 1
      %p110 = por %p108, %p109
      %p111 = scmp.ne.s32.totalorder %s103, %s106
      %p112 = scmp.eq.s32.totalorder %s41, 0
      %p113 = por %p111, %p112
      %p114 = scmp.ne.s32.totalorder %s103, %s106
      %p115 = scmp.eq.s32.totalorder %s46, 1
      %p116 = por %p114, %p115
      %p117 = scmp.ne.s32.totalorder %s106, %s107
      %p118 = scmp.eq.s32.totalorder %s46, 0
      %p119 = por %p117, %p118
      %p120 = scmp.ne.s32.totalorder %s106, %s107
      %p121 = scmp.eq.s32.totalorder %s47, 1
      %p122 = por %p120, %p121
      %p124 = scmp.ne.s32.totalorder %s107, %s123
      %p125 = scmp.eq.s32.totalorder %s47, 0
      %p126 = por %p124, %p125
      %s127 = ssub.s32 %s41, %s48
      %p128 = scmp.eq.s32.totalorder %s127, 0
      %s130 = sadd.s32 %s129, 1
      %s131 = scalar_select %p128, %s129, %s130
      %p134 = pneg %p128
      %p135 = scmp.eq.s32.totalorder %s41, 1
      %p136 = por %p134, %p135
      %p137 = scmp.ne.s32.totalorder %s129, %s132
      %p138 = scmp.eq.s32.totalorder %s41, 0
      %p139 = por %p137, %p138
      %p140 = scmp.ne.s32.totalorder %s129, %s132
      %p141 = scmp.eq.s32.totalorder %s46, 1
      %p142 = por %p140, %p141
      %p143 = scmp.ne.s32.totalorder %s132, %s133
      %p144 = scmp.eq.s32.totalorder %s46, 0
      %p145 = por %p143, %p144
      %p146 = scmp.ne.s32.totalorder %s132, %s133
      %p147 = scmp.eq.s32.totalorder %s47, 1
      %p148 = por %p146, %p147
      %p150 = scmp.ne.s32.totalorder %s133, %s149
      %p151 = scmp.eq.s32.totalorder %s47, 0
      %p152 = por %p150, %p151
      %s153 = ssub.s32 %s41, %s48
      %p154 = scmp.eq.s32.totalorder %s153, 0
      %s156 = sadd.s32 %s155, 1
      %s157 = scalar_select %p154, %s155, %s156
      %p160 = pneg %p154
      %p161 = scmp.eq.s32.totalorder %s41, 1
      %p162 = por %p160, %p161
      %p163 = scmp.ne.s32.totalorder %s155, %s158
      %p164 = scmp.eq.s32.totalorder %s41, 0
      %p165 = por %p163, %p164
      %p166 = scmp.ne.s32.totalorder %s155, %s158
      %p167 = scmp.eq.s32.totalorder %s46, 1
      %p168 = por %p166, %p167
      %p169 = scmp.ne.s32.totalorder %s158, %s159
      %p170 = scmp.eq.s32.totalorder %s46, 0
      %p171 = por %p169, %p170
      %p172 = scmp.ne.s32.totalorder %s158, %s159
      %p173 = scmp.eq.s32.totalorder %s47, 1
      %p174 = por %p172, %p173
      %p176 = scmp.ne.s32.totalorder %s159, %s175
      %p177 = scmp.eq.s32.totalorder %s47, 0
      %p178 = por %p176, %p177
      %s179 = ssub.s32 %s41, %s48
      %p180 = scmp.eq.s32.totalorder %s179, 0
      %s182 = sadd.s32 %s181, 1
      %s183 = scalar_select %p180, %s181, %s182
      %p186 = pneg %p180
      %p187 = scmp.eq.s32.totalorder %s41, 1
      %p188 = por %p186, %p187
      %p189 = scmp.ne.s32.totalorder %s181, %s184
      %p190 = scmp.eq.s32.totalorder %s41, 0
      %p191 = por %p189, %p190
      %p192 = scmp.ne.s32.totalorder %s181, %s184
      %p193 = scmp.eq.s32.totalorder %s46, 1
      %p194 = por %p192, %p193
      %p195 = scmp.ne.s32.totalorder %s184, %s185
      %p196 = scmp.eq.s32.totalorder %s46, 0
      %p197 = por %p195, %p196
      %p198 = scmp.ne.s32.totalorder %s184, %s185
      %p199 = scmp.eq.s32.totalorder %s47, 1
      %p200 = por %p198, %p199
      %p202 = scmp.ne.s32.totalorder %s185, %s201
      %p203 = scmp.eq.s32.totalorder %s47, 0
      %p204 = por %p202, %p203
      %s205 = ssub.s32 %s41, %s48
      %p206 = scmp.eq.s32.totalorder %s205, 0
      %s208 = sadd.s32 %s207, 1
      %s209 = scalar_select %p206, %s207, %s208
      %p212 = pneg %p206
      %p213 = scmp.eq.s32.totalorder %s41, 1
      %p214 = por %p212, %p213
      %p215 = scmp.ne.s32.totalorder %s207, %s210
      %p216 = scmp.eq.s32.totalorder %s41, 0
      %p217 = por %p215, %p216
      %p218 = scmp.ne.s32.totalorder %s207, %s210
      %p219 = scmp.eq.s32.totalorder %s46, 1
      %p220 = por %p218, %p219
      %p221 = scmp.ne.s32.totalorder %s210, %s211
      %p222 = scmp.eq.s32.totalorder %s46, 0
      %p223 = por %p221, %p222
      %p224 = scmp.ne.s32.totalorder %s210, %s211
      %p225 = scmp.eq.s32.totalorder %s47, 1
      %p226 = por %p224, %p225
      %p228 = scmp.ne.s32.totalorder %s211, %s227
      %p229 = scmp.eq.s32.totalorder %s47, 0
      %p230 = por %p228, %p229
      %s231 = ssub.s32 %s41, %s48
      %p232 = scmp.eq.s32.totalorder %s231, 0
      %s234 = sadd.s32 %s233, 1
      %s235 = scalar_select %p232, %s233, %s234
      %p238 = pneg %p232
      %p239 = scmp.eq.s32.totalorder %s41, 1
      %p240 = por %p238, %p239
      %p241 = scmp.ne.s32.totalorder %s233, %s236
      %p242 = scmp.eq.s32.totalorder %s41, 0
      %p243 = por %p241, %p242
      %p244 = scmp.ne.s32.totalorder %s233, %s236
      %p245 = scmp.eq.s32.totalorder %s46, 1
      %p246 = por %p244, %p245
      %p247 = scmp.ne.s32.totalorder %s236, %s237
      %p248 = scmp.eq.s32.totalorder %s46, 0
      %p249 = por %p247, %p248
      %p250 = scmp.ne.s32.totalorder %s236, %s237
      %p251 = scmp.eq.s32.totalorder %s47, 1
      %p252 = por %p250, %p251
      %p254 = scmp.ne.s32.totalorder %s237, %s253
      %p255 = scmp.eq.s32.totalorder %s47, 0
      %p256 = por %p254, %p255
      %s257 = ssub.s32 %s41, %s48
      %p258 = scmp.eq.s32.totalorder %s257, 0
      %s260 = sadd.s32 %s259, 1
      %s261 = scalar_select %p258, %s259, %s260
      %p264 = pneg %p258
      %p265 = scmp.eq.s32.totalorder %s41, 1
      %p266 = por %p264, %p265
      %p267 = scmp.ne.s32.totalorder %s259, %s262
      %p268 = scmp.eq.s32.totalorder %s41, 0
      %p269 = por %p267, %p268
      %p270 = scmp.ne.s32.totalorder %s259, %s262
      %p271 = scmp.eq.s32.totalorder %s46, 1
      %p272 = por %p270, %p271
      %p273 = scmp.ne.s32.totalorder %s262, %s263
      %p274 = scmp.eq.s32.totalorder %s46, 0
      %p275 = por %p273, %p274
      %p276 = scmp.ne.s32.totalorder %s262, %s263
      %p277 = scmp.eq.s32.totalorder %s47, 1
      %p278 = por %p276, %p277
      %p280 = scmp.ne.s32.totalorder %s263, %s279
      %p281 = scmp.eq.s32.totalorder %s47, 0
      %p282 = por %p280, %p281
      %s283 = ssub.s32 %s41, %s48
      %p284 = scmp.eq.s32.totalorder %s283, 0
      %s286 = sadd.s32 %s285, 1
      %s287 = scalar_select %p284, %s285, %s286
      %p290 = pneg %p284
      %p291 = scmp.eq.s32.totalorder %s41, 1
      %p292 = por %p290, %p291
      %p293 = scmp.ne.s32.totalorder %s285, %s288
      %p294 = scmp.eq.s32.totalorder %s41, 0
      %p295 = por %p293, %p294
      %p296 = scmp.ne.s32.totalorder %s285, %s288
      %p297 = scmp.eq.s32.totalorder %s46, 1
      %p298 = por %p296, %p297
      %p299 = scmp.ne.s32.totalorder %s288, %s289
      %p300 = scmp.eq.s32.totalorder %s46, 0
      %p301 = por %p299, %p300
      %p302 = scmp.ne.s32.totalorder %s288, %s289
      %p303 = scmp.eq.s32.totalorder %s47, 1
      %p304 = por %p302, %p303
      %p306 = scmp.ne.s32.totalorder %s289, %s305
      %p307 = scmp.eq.s32.totalorder %s47, 0
      %p308 = por %p306, %p307
      %s309 = ssub.s32 %s41, %s48
      %p310 = scmp.eq.s32.totalorder %s309, 0
      %s312 = sadd.s32 %s311, 1
      %s313 = scalar_select %p310, %s311, %s312
      %p316 = pneg %p310
      %p317 = scmp.eq.s32.totalorder %s41, 1
      %p318 = por %p316, %p317
      %p319 = scmp.ne.s32.totalorder %s311, %s314
      %p320 = scmp.eq.s32.totalorder %s41, 0
      %p321 = por %p319, %p320
      %p322 = scmp.ne.s32.totalorder %s311, %s314
      %p323 = scmp.eq.s32.totalorder %s46, 1
      %p324 = por %p322, %p323
      %p325 = scmp.ne.s32.totalorder %s314, %s315
      %p326 = scmp.eq.s32.totalorder %s46, 0
      %p327 = por %p325, %p326
      %p328 = scmp.ne.s32.totalorder %s314, %s315
      %p329 = scmp.eq.s32.totalorder %s47, 1
      %p330 = por %p328, %p329
      %p332 = scmp.ne.s32.totalorder %s315, %s331
      %p333 = scmp.eq.s32.totalorder %s47, 0
      %p334 = por %p332, %p333
      %s335 = ssub.s32 %s41, %s48
      %p336 = scmp.eq.s32.totalorder %s335, 0
      %s338 = sadd.s32 %s337, 1
      %s339 = scalar_select %p336, %s337, %s338
      %p342 = pneg %p336
      %p343 = scmp.eq.s32.totalorder %s41, 1
      %p344 = por %p342, %p343
      %p345 = scmp.ne.s32.totalorder %s337, %s340
      %p346 = scmp.eq.s32.totalorder %s41, 0
      %p347 = por %p345, %p346
      %p348 = scmp.ne.s32.totalorder %s337, %s340
      %p349 = scmp.eq.s32.totalorder %s46, 1
      %p350 = por %p348, %p349
      %p351 = scmp.ne.s32.totalorder %s340, %s341
      %p352 = scmp.eq.s32.totalorder %s46, 0
      %p353 = por %p351, %p352
      %p354 = scmp.ne.s32.totalorder %s340, %s341
      %p355 = scmp.eq.s32.totalorder %s47, 1
      %p356 = por %p354, %p355
      %p358 = scmp.ne.s32.totalorder %s341, %s357
      %p359 = scmp.eq.s32.totalorder %s47, 0
      %p360 = por %p358, %p359
      %s362 = sadd.s32 %s361, 1
      %p365 = scmp.eq.s32.totalorder %s41, 1
      %p366 = scmp.ne.s32.totalorder %s361, %s363
      %p367 = scmp.eq.s32.totalorder %s41, 0
      %p368 = por %p366, %p367
      %p369 = scmp.ne.s32.totalorder %s361, %s363
      %p370 = scmp.eq.s32.totalorder %s46, 1
      %p371 = por %p369, %p370
      %p372 = scmp.ne.s32.totalorder %s363, %s364
      %p373 = scmp.eq.s32.totalorder %s46, 0
      %p374 = por %p372, %p373
      %p375 = scmp.ne.s32.totalorder %s363, %s364
      %p376 = scmp.eq.s32.totalorder %s47, 1
      %p377 = por %p375, %p376
      %p379 = scmp.ne.s32.totalorder %s364, %s378
      %p380 = scmp.eq.s32.totalorder %s47, 0
      %p381 = por %p379, %p380
      %p382 = scmp.le.s32.totalorder 1, %s41
      %p383 = scmp.lt.s32.totalorder %s41, 3
      %p384 = pnand %p382, %p383
      %p385 = pneg %p384
      // Predicated region
      $region9: #{tpu_custom_call.1} parent=5 // pred_check
        _
      $region10: #{tpu_custom_call.1} parent=5 // pred_check_branch
        %387 = sbr.rel (%p384) target = $region12
      $region11: #{tpu_custom_call.1} parent=5 // pred_region
        %s388 = ssub.s32 %s41, 1
      $region12: #{tpu_custom_call.1} parent=5 // pred_fallthru
        _
      %p389 = scmp.lt.s32.totalorder %s41, 2
      // Predicated region
      $region13: #{tpu_custom_call.1} parent=5 // pred_check
        %p390 = pneg %p389
      $region14: #{tpu_custom_call.1} parent=5 // pred_check_branch
        %392 = sbr.rel (%p390) target = $region16
      $region15: #{tpu_custom_call.1} parent=5 // pred_region
        // Predicated region
        $region17: #{tpu_custom_call.1} parent=15 // pred_check
          %p393 = pneg %p61
        $region18: #{tpu_custom_call.1} parent=15 // pred_check_branch
          %395 = sbr.rel (%p393) target = $region20
        $region19: #{tpu_custom_call.1} parent=15 // pred_region
          %s396 = sand.u32 %s51, 1
          %s397 = scalar_lea.sflag [#allocation3], %s396
          %s398 = sand.u32 %s51, 1
          %s399 = scalar_lea.vmem [#allocation2], %s398
          %s401 = ssub.s32 16, 16
          %402 = vsyncadd %s397, %s401
          %s403 = smul.addr %s41, 16
          %s404 = scalar_lea.hbm %s1, %s403
          %s406 = sshll.u32 %s399, 4
          %s407 = int_to_ptr.vmem [resolvable:$true] %s406
          %409 = dma.hbm_to_vmem [thread:$0]  %s404, 16, %s407, %s397
        $region20: #{tpu_custom_call.1} parent=15 // pred_fallthru
          _
        // Predicated region
        $region21: #{tpu_custom_call.1} parent=15 // pred_check
          %p410 = pneg %p87
        $region22: #{tpu_custom_call.1} parent=15 // pred_check_branch
          %412 = sbr.rel (%p410) target = $region24
        $region23: #{tpu_custom_call.1} parent=15 // pred_region
          %s413 = sand.u32 %s41, 1
          %s414 = scalar_lea.sflag [#allocation6], %s413
          %s415 = sand.u32 %s77, 1
          %s416 = scalar_lea.vmem [#allocation5], %s415
          %s418 = ssub.s32 16, 16
          %419 = vsyncadd %s414, %s418
          %s420 = smul.addr %s41, 16
          %s421 = scalar_lea.hbm %s2, %s420
          %s423 = sshll.u32 %s416, 4
          %s424 = int_to_ptr.vmem [resolvable:$true] %s423
          %426 = dma.hbm_to_vmem [thread:$0]  %s421, 16, %s424, %s414
        $region24: #{tpu_custom_call.1} parent=15 // pred_fallthru
          _
        // Predicated region
        $region25: #{tpu_custom_call.1} parent=15 // pred_check
          %p427 = pneg %p113
        $region26: #{tpu_custom_call.1} parent=15 // pred_check_branch
          %429 = sbr.rel (%p427) target = $region28
        $region27: #{tpu_custom_call.1} parent=15 // pred_region
          %s430 = sand.u32 %s41, 1
          %s431 = scalar_lea.sflag [#allocation6], %s430
          %s432 = sand.u32 %s103, 1
          %s433 = smul.addr %s432, 16
          %s434 = scalar_lea.vmem [#allocation7], %s433
          %s436 = ssub.s32 256, 256
          %437 = vsyncadd %s431, %s436
          %s438 = smul.addr %s41, 4
          %s439 = smul.addr %s438, 64
          %s440 = scalar_lea.hbm %s3, %s439
          %s441 = sshll.u32 %s434, 4
          %s442 = int_to_ptr.vmem [resolvable:$true] %s441
          %447 = dma.hbm_to_vmem [thread:$0]  %s440, 256, %s442, %s431, 64, 64, 4
        $region28: #{tpu_custom_call.1} parent=15 // pred_fallthru
          _
        // Predicated region
        $region29: #{tpu_custom_call.1} parent=15 // pred_check
          %p448 = pneg %p139
        $region30: #{tpu_custom_call.1} parent=15 // pred_check_branch
          %450 = sbr.rel (%p448) target = $region32
        $region31: #{tpu_custom_call.1} parent=15 // pred_region
          %s451 = sand.u32 %s41, 1
          %s452 = scalar_lea.sflag [#allocation9], %s451
          %s453 = sand.u32 %s129, 1
          %s454 = scalar_lea.vmem [#allocation8], %s453
          %s456 = ssub.s32 16, 16
          %457 = vsyncadd %s452, %s456
          %s458 = smul.addr %s41, 16
          %s459 = scalar_lea.hbm %s4, %s458
          %s461 = sshll.u32 %s454, 4
          %s462 = int_to_ptr.vmem [resolvable:$true] %s461
          %464 = dma.hbm_to_vmem [thread:$0]  %s459, 16, %s462, %s452
        $region32: #{tpu_custom_call.1} parent=15 // pred_fallthru
          _
        // Predicated region
        $region33: #{tpu_custom_call.1} parent=15 // pred_check
          %p465 = pneg %p165
        $region34: #{tpu_custom_call.1} parent=15 // pred_check_branch
          %467 = sbr.rel (%p465) target = $region36
        $region35: #{tpu_custom_call.1} parent=15 // pred_region
          %s468 = sand.u32 %s41, 1
          %s469 = scalar_lea.sflag [#allocation9], %s468
          %s470 = sand.u32 %s155, 1
          %s471 = smul.addr %s470, 16
          %s472 = scalar_lea.vmem [#allocation10], %s471
          %s474 = ssub.s32 256, 256
          %475 = vsyncadd %s469, %s474
          %s476 = smul.addr %s41, 4
          %s477 = smul.addr %s476, 64
          %s478 = scalar_lea.hbm %s5, %s477
          %s479 = sshll.u32 %s472, 4
          %s480 = int_to_ptr.vmem [resolvable:$true] %s479
          %485 = dma.hbm_to_vmem [thread:$0]  %s478, 256, %s480, %s469, 64, 64, 4
        $region36: #{tpu_custom_call.1} parent=15 // pred_fallthru
          _
        // Predicated region
        $region37: #{tpu_custom_call.1} parent=15 // pred_check
          %p486 = pneg %p191
        $region38: #{tpu_custom_call.1} parent=15 // pred_check_branch
          %488 = sbr.rel (%p486) target = $region40
        $region39: #{tpu_custom_call.1} parent=15 // pred_region
          %s489 = sand.u32 %s41, 1
          %s490 = scalar_lea.sflag [#allocation12], %s489
          %s491 = sand.u32 %s181, 1
          %s492 = scalar_lea.vmem [#allocation11], %s491
          %s494 = ssub.s32 16, 16
          %495 = vsyncadd %s490, %s494
          %s496 = smul.addr %s41, 16
          %s497 = scalar_lea.hbm %s6, %s496
          %s499 = sshll.u32 %s492, 4
          %s500 = int_to_ptr.vmem [resolvable:$true] %s499
          %502 = dma.hbm_to_vmem [thread:$0]  %s497, 16, %s500, %s490
        $region40: #{tpu_custom_call.1} parent=15 // pred_fallthru
          _
        // Predicated region
        $region41: #{tpu_custom_call.1} parent=15 // pred_check
          %p503 = pneg %p217
        $region42: #{tpu_custom_call.1} parent=15 // pred_check_branch
          %505 = sbr.rel (%p503) target = $region44
        $region43: #{tpu_custom_call.1} parent=15 // pred_region
          %s506 = sand.u32 %s41, 1
          %s507 = scalar_lea.sflag [#allocation12], %s506
          %s508 = sand.u32 %s207, 1
          %s509 = scalar_lea.vmem [#allocation13], %s508
          %s511 = ssub.s32 16, 16
          %512 = vsyncadd %s507, %s511
          %s513 = smul.addr %s41, 16
          %s514 = scalar_lea.hbm %s7, %s513
          %s516 = sshll.u32 %s509, 4
          %s517 = int_to_ptr.vmem [resolvable:$true] %s516
          %519 = dma.hbm_to_vmem [thread:$0]  %s514, 16, %s517, %s507
        $region44: #{tpu_custom_call.1} parent=15 // pred_fallthru
          _
        // Predicated region
        $region45: #{tpu_custom_call.1} parent=15 // pred_check
          %p520 = pneg %p243
        $region46: #{tpu_custom_call.1} parent=15 // pred_check_branch
          %522 = sbr.rel (%p520) target = $region48
        $region47: #{tpu_custom_call.1} parent=15 // pred_region
          %s523 = sand.u32 %s41, 1
          %s524 = scalar_lea.sflag [#allocation15], %s523
          %s525 = sand.u32 %s233, 1
          %s526 = scalar_lea.vmem [#allocation14], %s525
          %s528 = ssub.s32 16, 16
          %529 = vsyncadd %s524, %s528
          %s530 = smul.addr %s41, 16
          %s531 = scalar_lea.hbm %s8, %s530
          %s533 = sshll.u32 %s526, 4
          %s534 = int_to_ptr.vmem [resolvable:$true] %s533
          %536 = dma.hbm_to_vmem [thread:$0]  %s531, 16, %s534, %s524
        $region48: #{tpu_custom_call.1} parent=15 // pred_fallthru
          _
        // Predicated region
        $region49: #{tpu_custom_call.1} parent=15 // pred_check
          %p537 = pneg %p269
        $region50: #{tpu_custom_call.1} parent=15 // pred_check_branch
          %539 = sbr.rel (%p537) target = $region52
        $region51: #{tpu_custom_call.1} parent=15 // pred_region
          %s540 = sand.u32 %s41, 1
          %s541 = scalar_lea.sflag [#allocation15], %s540
          %s542 = sand.u32 %s259, 1
          %s543 = smul.addr %s542, 16
          %s544 = scalar_lea.vmem [#allocation16], %s543
          %s546 = ssub.s32 256, 256
          %547 = vsyncadd %s541, %s546
          %s548 = smul.addr %s41, 4
          %s549 = smul.addr %s548, 64
          %s550 = scalar_lea.hbm %s9, %s549
          %s551 = sshll.u32 %s544, 4
          %s552 = int_to_ptr.vmem [resolvable:$true] %s551
          %557 = dma.hbm_to_vmem [thread:$0]  %s550, 256, %s552, %s541, 64, 64, 4
        $region52: #{tpu_custom_call.1} parent=15 // pred_fallthru
          _
        // Predicated region
        $region53: #{tpu_custom_call.1} parent=15 // pred_check
          %p558 = pneg %p295
        $region54: #{tpu_custom_call.1} parent=15 // pred_check_branch
          %560 = sbr.rel (%p558) target = $region56
        $region55: #{tpu_custom_call.1} parent=15 // pred_region
          %s561 = sand.u32 %s41, 1
          %s562 = scalar_lea.sflag [#allocation18], %s561
          %s563 = sand.u32 %s285, 1
          %s564 = scalar_lea.vmem [#allocation17], %s563
          %s566 = ssub.s32 16, 16
          %567 = vsyncadd %s562, %s566
          %s568 = smul.addr %s41, 16
          %s569 = scalar_lea.hbm %s10, %s568
          %s571 = sshll.u32 %s564, 4
          %s572 = int_to_ptr.vmem [resolvable:$true] %s571
          %574 = dma.hbm_to_vmem [thread:$0]  %s569, 16, %s572, %s562
        $region56: #{tpu_custom_call.1} parent=15 // pred_fallthru
          _
        // Predicated region
        $region57: #{tpu_custom_call.1} parent=15 // pred_check
          %p575 = pneg %p321
        $region58: #{tpu_custom_call.1} parent=15 // pred_check_branch
          %577 = sbr.rel (%p575) target = $region60
        $region59: #{tpu_custom_call.1} parent=15 // pred_region
          %s578 = sand.u32 %s41, 1
          %s579 = scalar_lea.sflag [#allocation18], %s578
          %s580 = sand.u32 %s311, 1
          %s581 = smul.addr %s580, 64
          %s582 = scalar_lea.vmem [#allocation19], %s581
          %s584 = ssub.s32 1024, 1024
          %585 = vsyncadd %s579, %s584
          %s586 = smul.addr %s41, 16
          %s587 = smul.addr %s586, 64
          %s588 = scalar_lea.hbm %s11, %s587
          %s589 = sshll.u32 %s582, 4
          %s590 = int_to_ptr.vmem [resolvable:$true] %s589
          %595 = dma.hbm_to_vmem [thread:$0]  %s588, 1024, %s590, %s579, 64, 64, 4
        $region60: #{tpu_custom_call.1} parent=15 // pred_fallthru
          _
        // Predicated region
        $region61: #{tpu_custom_call.1} parent=15 // pred_check
          %p596 = pneg %p347
        $region62: #{tpu_custom_call.1} parent=15 // pred_check_branch
          %598 = sbr.rel (%p596) target = $region64
        $region63: #{tpu_custom_call.1} parent=15 // pred_region
          %s599 = sand.u32 %s337, 1
          %s600 = scalar_lea.sflag [#allocation21], %s599
          %s601 = sand.u32 %s337, 1
          %s602 = scalar_lea.vmem [#allocation20], %s601
          %s604 = ssub.s32 16, 16
          %605 = vsyncadd %s600, %s604
          %s606 = smul.addr %s41, 16
          %s607 = scalar_lea.hbm %s12, %s606
          %s609 = sshll.u32 %s602, 4
          %s610 = int_to_ptr.vmem [resolvable:$true] %s609
          %612 = dma.hbm_to_vmem [thread:$0]  %s607, 16, %s610, %s600
        $region64: #{tpu_custom_call.1} parent=15 // pred_fallthru
          _
      $region16: #{tpu_custom_call.1} parent=5 // pred_fallthru
        _
      %p613 = scmp.le.s32.totalorder 1, %s41
      %p614 = scmp.lt.s32.totalorder %s41, 3
      %p615 = pnand %p613, %p614
      %p616 = pneg %p615
      // Predicated region
      $region65: #{tpu_custom_call.1} parent=5 // pred_check
        _
      $region66: #{tpu_custom_call.1} parent=5 // pred_check_branch
        %618 = sbr.rel (%p615) target = $region68
      $region67: #{tpu_custom_call.1} parent=5 // pred_region
        %s619 = ssub.s32 %s41, 1
        %s620 = sand.u32 %s54, 1
        %s621 = scalar_lea.sflag [#allocation3], %s620
        %s622 = sand.u32 %s54, 1
        %s623 = scalar_lea.vmem [#allocation2], %s622
        // Predicated region
        $region69: #{tpu_custom_call.1} parent=67 // pred_check
          %p624 = pneg %p67
        $region70: #{tpu_custom_call.1} parent=67 // pred_check_branch
          %626 = sbr.rel (%p624) target = $region72
        $region71: #{tpu_custom_call.1} parent=67 // pred_region
          %627 = dma.done %s621, 16
        $region72: #{tpu_custom_call.1} parent=67 // pred_fallthru
          _
        %s628 = sand.u32 %s46, 1
        %s629 = scalar_lea.sflag [#allocation6], %s628
        %s630 = sand.u32 %s80, 1
        %s631 = scalar_lea.vmem [#allocation5], %s630
        // Predicated region
        $region73: #{tpu_custom_call.1} parent=67 // pred_check
          %p632 = pneg %p93
        $region74: #{tpu_custom_call.1} parent=67 // pred_check_branch
          %634 = sbr.rel (%p632) target = $region76
        $region75: #{tpu_custom_call.1} parent=67 // pred_region
          %635 = dma.done %s629, 16
        $region76: #{tpu_custom_call.1} parent=67 // pred_fallthru
          _
        %s636 = sand.u32 %s46, 1
        %s637 = scalar_lea.sflag [#allocation6], %s636
        %s638 = sand.u32 %s106, 1
        %s639 = smul.addr %s638, 16
        %s640 = scalar_lea.vmem [#allocation7], %s639
        // Predicated region
        $region77: #{tpu_custom_call.1} parent=67 // pred_check
          %p641 = pneg %p119
        $region78: #{tpu_custom_call.1} parent=67 // pred_check_branch
          %643 = sbr.rel (%p641) target = $region80
        $region79: #{tpu_custom_call.1} parent=67 // pred_region
          %644 = dma.done %s637, 256
        $region80: #{tpu_custom_call.1} parent=67 // pred_fallthru
          _
        %s645 = sand.u32 %s46, 1
        %s646 = scalar_lea.sflag [#allocation9], %s645
        %s647 = sand.u32 %s132, 1
        %s648 = scalar_lea.vmem [#allocation8], %s647
        // Predicated region
        $region81: #{tpu_custom_call.1} parent=67 // pred_check
          %p649 = pneg %p145
        $region82: #{tpu_custom_call.1} parent=67 // pred_check_branch
          %651 = sbr.rel (%p649) target = $region84
        $region83: #{tpu_custom_call.1} parent=67 // pred_region
          %652 = dma.done %s646, 16
        $region84: #{tpu_custom_call.1} parent=67 // pred_fallthru
          _
        %s653 = sand.u32 %s46, 1
        %s654 = scalar_lea.sflag [#allocation9], %s653
        %s655 = sand.u32 %s158, 1
        %s656 = smul.addr %s655, 16
        %s657 = scalar_lea.vmem [#allocation10], %s656
        // Predicated region
        $region85: #{tpu_custom_call.1} parent=67 // pred_check
          %p658 = pneg %p171
        $region86: #{tpu_custom_call.1} parent=67 // pred_check_branch
          %660 = sbr.rel (%p658) target = $region88
        $region87: #{tpu_custom_call.1} parent=67 // pred_region
          %661 = dma.done %s654, 256
        $region88: #{tpu_custom_call.1} parent=67 // pred_fallthru
          _
        %s662 = sand.u32 %s46, 1
        %s663 = scalar_lea.sflag [#allocation12], %s662
        %s664 = sand.u32 %s184, 1
        %s665 = scalar_lea.vmem [#allocation11], %s664
        // Predicated region
        $region89: #{tpu_custom_call.1} parent=67 // pred_check
          %p666 = pneg %p197
        $region90: #{tpu_custom_call.1} parent=67 // pred_check_branch
          %668 = sbr.rel (%p666) target = $region92
        $region91: #{tpu_custom_call.1} parent=67 // pred_region
          %669 = dma.done %s663, 16
        $region92: #{tpu_custom_call.1} parent=67 // pred_fallthru
          _
        %s670 = sand.u32 %s46, 1
        %s671 = scalar_lea.sflag [#allocation12], %s670
        %s672 = sand.u32 %s210, 1
        %s673 = scalar_lea.vmem [#allocation13], %s672
        // Predicated region
        $region93: #{tpu_custom_call.1} parent=67 // pred_check
          %p674 = pneg %p223
        $region94: #{tpu_custom_call.1} parent=67 // pred_check_branch
          %676 = sbr.rel (%p674) target = $region96
        $region95: #{tpu_custom_call.1} parent=67 // pred_region
          %677 = dma.done %s671, 16
        $region96: #{tpu_custom_call.1} parent=67 // pred_fallthru
          _
        %s678 = sand.u32 %s46, 1
        %s679 = scalar_lea.sflag [#allocation15], %s678
        %s680 = sand.u32 %s236, 1
        %s681 = scalar_lea.vmem [#allocation14], %s680
        // Predicated region
        $region97: #{tpu_custom_call.1} parent=67 // pred_check
          %p682 = pneg %p249
        $region98: #{tpu_custom_call.1} parent=67 // pred_check_branch
          %684 = sbr.rel (%p682) target = $region100
        $region99: #{tpu_custom_call.1} parent=67 // pred_region
          %685 = dma.done %s679, 16
        $region100: #{tpu_custom_call.1} parent=67 // pred_fallthru
          _
        %s686 = sand.u32 %s46, 1
        %s687 = scalar_lea.sflag [#allocation15], %s686
        %s688 = sand.u32 %s262, 1
        %s689 = smul.addr %s688, 16
        %s690 = scalar_lea.vmem [#allocation16], %s689
        // Predicated region
        $region101: #{tpu_custom_call.1} parent=67 // pred_check
          %p691 = pneg %p275
        $region102: #{tpu_custom_call.1} parent=67 // pred_check_branch
          %693 = sbr.rel (%p691) target = $region104
        $region103: #{tpu_custom_call.1} parent=67 // pred_region
          %694 = dma.done %s687, 256
        $region104: #{tpu_custom_call.1} parent=67 // pred_fallthru
          _
        %s695 = sand.u32 %s46, 1
        %s696 = scalar_lea.sflag [#allocation18], %s695
        %s697 = sand.u32 %s288, 1
        %s698 = scalar_lea.vmem [#allocation17], %s697
        // Predicated region
        $region105: #{tpu_custom_call.1} parent=67 // pred_check
          %p699 = pneg %p301
        $region106: #{tpu_custom_call.1} parent=67 // pred_check_branch
          %701 = sbr.rel (%p699) target = $region108
        $region107: #{tpu_custom_call.1} parent=67 // pred_region
          %702 = dma.done %s696, 16
        $region108: #{tpu_custom_call.1} parent=67 // pred_fallthru
          _
        %s703 = sand.u32 %s46, 1
        %s704 = scalar_lea.sflag [#allocation18], %s703
        %s705 = sand.u32 %s314, 1
        %s706 = smul.addr %s705, 64
        %s707 = scalar_lea.vmem [#allocation19], %s706
        // Predicated region
        $region109: #{tpu_custom_call.1} parent=67 // pred_check
          %p708 = pneg %p327
        $region110: #{tpu_custom_call.1} parent=67 // pred_check_branch
          %710 = sbr.rel (%p708) target = $region112
        $region111: #{tpu_custom_call.1} parent=67 // pred_region
          %711 = dma.done %s704, 1024
        $region112: #{tpu_custom_call.1} parent=67 // pred_fallthru
          _
        %s712 = sand.u32 %s340, 1
        %s713 = scalar_lea.sflag [#allocation21], %s712
        %s714 = sand.u32 %s340, 1
        %s715 = scalar_lea.vmem [#allocation20], %s714
        // Predicated region
        $region113: #{tpu_custom_call.1} parent=67 // pred_check
          %p716 = pneg %p353
        $region114: #{tpu_custom_call.1} parent=67 // pred_check_branch
          %718 = sbr.rel (%p716) target = $region116
        $region115: #{tpu_custom_call.1} parent=67 // pred_region
          %719 = dma.done %s713, 16
        $region116: #{tpu_custom_call.1} parent=67 // pred_fallthru
          _
        %s720 = sand.u32 %s54, 1
        %s721 = scalar_lea.sflag [#allocation3], %s720
        %s722 = sand.u32 %s54, 1
        %s723 = scalar_lea.vmem [#allocation2], %s722
        %p724 = pneg %p67
        %p725 = pneg %p64
        %s726 = sand.u32 %s46, 1
        %s727 = scalar_lea.sflag [#allocation6], %s726
        %s728 = sand.u32 %s80, 1
        %s729 = scalar_lea.vmem [#allocation5], %s728
        %p730 = pneg %p93
        %p731 = pneg %p90
        %s732 = sand.u32 %s46, 1
        %s733 = scalar_lea.sflag [#allocation6], %s732
        %s734 = sand.u32 %s106, 1
        %s735 = smul.addr %s734, 16
        %s736 = scalar_lea.vmem [#allocation7], %s735
        %p737 = pneg %p119
        %p738 = pneg %p116
        %s739 = sand.u32 %s46, 1
        %s740 = scalar_lea.sflag [#allocation9], %s739
        %s741 = sand.u32 %s132, 1
        %s742 = scalar_lea.vmem [#allocation8], %s741
        %p743 = pneg %p145
        %p744 = pneg %p142
        %s745 = sand.u32 %s46, 1
        %s746 = scalar_lea.sflag [#allocation9], %s745
        %s747 = sand.u32 %s158, 1
        %s748 = smul.addr %s747, 16
        %s749 = scalar_lea.vmem [#allocation10], %s748
        %p750 = pneg %p171
        %p751 = pneg %p168
        %s752 = sand.u32 %s46, 1
        %s753 = scalar_lea.sflag [#allocation12], %s752
        %s754 = sand.u32 %s184, 1
        %s755 = scalar_lea.vmem [#allocation11], %s754
        %p756 = pneg %p197
        %p757 = pneg %p194
        %s758 = sand.u32 %s46, 1
        %s759 = scalar_lea.sflag [#allocation12], %s758
        %s760 = sand.u32 %s210, 1
        %s761 = scalar_lea.vmem [#allocation13], %s760
        %p762 = pneg %p223
        %p763 = pneg %p220
        %s764 = sand.u32 %s46, 1
        %s765 = scalar_lea.sflag [#allocation15], %s764
        %s766 = sand.u32 %s236, 1
        %s767 = scalar_lea.vmem [#allocation14], %s766
        %p768 = pneg %p249
        %p769 = pneg %p246
        %s770 = sand.u32 %s46, 1
        %s771 = scalar_lea.sflag [#allocation15], %s770
        %s772 = sand.u32 %s262, 1
        %s773 = smul.addr %s772, 16
        %s774 = scalar_lea.vmem [#allocation16], %s773
        %p775 = pneg %p275
        %p776 = pneg %p272
        %s777 = sand.u32 %s46, 1
        %s778 = scalar_lea.sflag [#allocation18], %s777
        %s779 = sand.u32 %s288, 1
        %s780 = scalar_lea.vmem [#allocation17], %s779
        %p781 = pneg %p301
        %p782 = pneg %p298
        %s783 = sand.u32 %s46, 1
        %s784 = scalar_lea.sflag [#allocation18], %s783
        %s785 = sand.u32 %s314, 1
        %s786 = smul.addr %s785, 64
        %s787 = scalar_lea.vmem [#allocation19], %s786
        %p788 = pneg %p327
        %p789 = pneg %p324
        %s790 = sand.u32 %s340, 1
        %s791 = scalar_lea.sflag [#allocation21], %s790
        %s792 = sand.u32 %s340, 1
        %s793 = scalar_lea.vmem [#allocation20], %s792
        %p794 = pneg %p353
        %p795 = pneg %p350
        %p796 = pneg %p374
        %p797 = pneg %p371
        %p799 = scmp.eq.s32.totalorder %s46, 0
        // Predicated region
        $region117: #{tpu_custom_call.1} parent=67 // pred_check
          %p800 = pneg %p799
        $region118: #{tpu_custom_call.1} parent=67 // pred_check_branch
          %802 = sbr.rel (%p800) target = $region120
        $region119: #{tpu_custom_call.1} parent=67 // pred_region
          $region121: #{tpu_custom_call.1} parent=119
            #allocation23 [shape = 's32[1]{0}', space=sflag, size = 0x4, scoped, tag = 'scoped memory for tpu_custom_call.1']
            // Predicated region
            $region122: #{tpu_custom_call.1} parent=121 // pred_check
              _
            $region123: #{tpu_custom_call.1} parent=121 // pred_check_branch
              %804 = sbr.rel target = $region125
            $region124: #{tpu_custom_call.1} parent=121 // pred_region
              %805 = sst [smem:[#allocation26]] [#allocation25]
              %806 = sst [smem:[#allocation27]] [#allocation24]
            $region125: #{tpu_custom_call.1} parent=121 // pred_fallthru
              _
            %808 = shalt.err (0)
            %s810 = sshll.u32 [#allocation22], 4
            %s811 = int_to_ptr.vmem [resolvable:$true] %s810
            %813 = dma.hbm_to_vmem [thread:$0]  %s0, 256, %s811, [#allocation23]
            %s814 = smul.u32 2, 8
            %s815 = smul.u32 %s814, 1
            %s816 = sshll.u32 %s815, 4
            %817 = dma.done [#allocation23], %s816
        $region120: #{tpu_custom_call.1} parent=67 // pred_fallthru
          _
        %v818 = vld [vmem:[#allocation22] sm:$0xff]
        %v819 = vld [vmem:[#allocation22 + $0x8] sm:$0xff]
        %v820 = vld [vmem:[%s623] sm:$0x1]
        %v821 = vld [vmem:[%s631] sm:$0x1]
        %vm822 = vcmask 261120
        %v823 = vsel %vm822, %v818, 0.0
        %824 = vadd.xlane.f32.xlu0 %v823
        %v825 = vpop.xlane.xlu0 %824
        %v826 = vsel %vm822, %v819, 0.0
        %827 = vadd.xlane.f32.xlu0 %v826
        %v828 = vpop.xlane.xlu0 %827
        %v829 = vrcp.pop 32.0
        %v830 = vmul.f32 %v825, %v829
        %v831 = vmul.f32 %v828, %v829
        %v832 = vsub.f32 %v818, %v830
        %v833 = vsub.f32 %v819, %v831
        %v834 = vmul.f32 %v832, %v832
        %v835 = vmul.f32 %v833, %v833
        %v836 = vsel %vm822, %v834, 0.0
        %837 = vadd.xlane.f32.xlu0 %v836
        %v838 = vpop.xlane.xlu0 %837
        %v839 = vsel %vm822, %v835, 0.0
        %840 = vadd.xlane.f32.xlu0 %v839
        %v841 = vpop.xlane.xlu0 %840
        %v842 = vmul.f32 %v838, %v829
        %v843 = vmul.f32 %v841, %v829
        %v844 = vadd.f32 %v842, 1e-05
        %v845 = vadd.f32 %v843, 1e-05
        %v846 = vrsqrt.pop %v844
        %v847 = vrsqrt.pop %v845
        %v848 = vmul.f32 %v832, %v846
        %v849 = vmul.f32 %v833, %v847
        %v851 = vlaneseq
        %v852 = vshrl.u32 %v851, 7
        %v853 = vsub.s32 0, %v852
        %v854 = vrot.slane %v820, %v853
        %v856 = vmul.f32 %v848, %v854
        %v857 = vmul.f32 %v849, %v854
        %v859 = vlaneseq
        %v860 = vshrl.u32 %v859, 7
        %v861 = vsub.s32 0, %v860
        %v862 = vrot.slane %v821, %v861
        %v864 = vadd.f32 %v856, %v862
        %v865 = vadd.f32 %v857, %v862
        %v866 = vpack.c.bf16 %v865, %v864
        %v867 = vld [vmem:[%s640] sm:$0xf]
        %v868 = vld [vmem:[%s640 + $0x4] sm:$0xf]
        %v869 = vld [vmem:[%s640 + $0x8] sm:$0xf]
        %v870 = vld [vmem:[%s640 + $0xc] sm:$0xf]
        %v871 = vld [vmem:[%s648] sm:$0x1]
        %v873 = vlaneseq
        %v874 = vshrl.u32 %v873, 7
        %v875 = vsub.s32 0, %v874
        %v876 = vrot.slane %v871, %v875
        %v882 = vunpack.c.l.b16 %v867
        %v883 = vunpack.c.l.b16 %v868
        %v884 = vunpack.c.l.b16 %v869
        %v885 = vunpack.c.l.b16 %v870
        %v886 = vpack.c.b16 %v883, %v882
        %v887 = vpack.c.b16 %v885, %v884
        %v891 = vsel %vm822, %v866, 0
        %893 = vmatprep.subr.bf16.mxu0 0
        %894 = vmatpush1.bf16.msra.mxu0 %v886
        %895 = vmatprep.subr.bf16.mxu0 0
        %896 = vmatpush1.bf16.msra.mxu0 %v887
        %897 = vmatprep.subr.bf16.mxu0 0
        %898 = vmatpush1.bf16.msra.mxu0 0
        %899 = vmatprep.subr.bf16.mxu0 0
        %900 = vmatpush1.bf16.msra.mxu0 0
        %901 = vmatprep.subr.bf16.mxu0 0
        %902 = vmatpush1.bf16.msra.mxu0 0
        %903 = vmatprep.subr.bf16.mxu0 0
        %904 = vmatpush1.bf16.msra.mxu0 0
        %905 = vmatprep.subr.bf16.mxu0 0
        %906 = vmatpush1.bf16.msra.mxu0 0
        %907 = vmatprep.subr.bf16.mxu0 0
        %908 = vmatpush1.bf16.msra.mxu0 0
        %909 = vmatprep.subr.bf16.mxu0 0
        %910 = vmatpush1.bf16.msra.mxu0 0
        %911 = vmatprep.subr.bf16.mxu0 0
        %912 = vmatpush1.bf16.msra.mxu0 0
        %913 = vmatprep.subr.bf16.mxu0 0
        %914 = vmatpush1.bf16.msra.mxu0 0
        %915 = vmatprep.subr.bf16.mxu0 0
        %916 = vmatpush1.bf16.msra.mxu0 0
        %917 = vmatprep.subr.bf16.mxu0 0
        %918 = vmatpush1.bf16.msra.mxu0 0
        %919 = vmatprep.subr.bf16.mxu0 0
        %920 = vmatpush1.bf16.msra.mxu0 0
        %921 = vmatprep.subr.bf16.mxu0 0
        %922 = vmatpush1.bf16.msra.mxu0 0
        %923 = vmatprep.subr.bf16.mxu0 0
        %924 = vmatpush1.bf16.msra.mxu0 0
        %925 = vmatprep.mubr.bf16.mxu0 0
        %926 = vmatmul.mubr.bf16.gmra.mrb[0].mxu0 %v891
        %v927 = vpop.f32.mrb[0].mxu0
        %v928 = vadd.f32 %v876, %v927
        %v929 = vpop.f32.mrb[0].mxu0
        %v930 = vpop.f32.mrb[0].mxu0
        %v931 = vadd.f32 %v876, %v930
        %v932 = vpop.f32.mrb[0].mxu0
        %933 = vdwg.mxu0
        %v934 = vpack.c.bf16 %v931, %v928
        %936 = vrot.lane.b32.xlu0 %v934, 120
        %v937 = vpop.permute.xlu0 %936
        %938 = vrot.lane.b32.xlu0 %v934, 112
        %v939 = vpop.permute.xlu0 %938
        %940 = vrot.lane.b32.xlu0 %v934, 104
        %v941 = vpop.permute.xlu0 %940
        %942 = vrot.lane.b32.xlu0 %v934, 96
        %v943 = vpop.permute.xlu0 %942
        %944 = vrot.lane.b32.xlu0 %v934, 88
        %v945 = vpop.permute.xlu0 %944
        %946 = vrot.lane.b32.xlu0 %v934, 80
        %v947 = vpop.permute.xlu0 %946
        %948 = vrot.lane.b32.xlu0 %v934, 72
        %v949 = vpop.permute.xlu0 %948
        %950 = vrot.lane.b32.xlu0 %v934, 64
        %v951 = vpop.permute.xlu0 %950
        %952 = vrot.lane.b32.xlu0 %v934, 56
        %v953 = vpop.permute.xlu0 %952
        %954 = vrot.lane.b32.xlu0 %v934, 48
        %v955 = vpop.permute.xlu0 %954
        %956 = vrot.lane.b32.xlu0 %v934, 40
        %v957 = vpop.permute.xlu0 %956
        %v960 = vpack.i.b16 %v937, %v934
        %v962 = vshrl.u32 %v934, 16
        %v963 = vshrl.u32 %v937, 16
        %v964 = vpack.i.b16 %v963, %v962
        %v968 = vpack.i.b16 %v941, %v939
        %v970 = vshrl.u32 %v939, 16
        %v971 = vshrl.u32 %v941, 16
        %v972 = vpack.i.b16 %v971, %v970
        %v976 = vpack.i.b16 %v945, %v943
        %v978 = vshrl.u32 %v943, 16
        %v979 = vshrl.u32 %v945, 16
        %v980 = vpack.i.b16 %v979, %v978
        %v984 = vpack.i.b16 %v949, %v947
        %v986 = vshrl.u32 %v947, 16
        %v987 = vshrl.u32 %v949, 16
        %v988 = vpack.i.b16 %v987, %v986
        %v992 = vpack.i.b16 %v953, %v951
        %v994 = vshrl.u32 %v951, 16
        %v995 = vshrl.u32 %v953, 16
        %v996 = vpack.i.b16 %v995, %v994
        %v1000 = vpack.i.b16 %v957, %v955
        %v1002 = vshrl.u32 %v955, 16
        %v1003 = vshrl.u32 %v957, 16
        %v1004 = vpack.i.b16 %v1003, %v1002
        %v1007 = vpack.i.b16 0, 0
        %v1009 = vshrl.u32 0, 16
        %v1010 = vpack.i.b16 %v1009, %v1009
        %v1012 = vcombine.low %v960, %v976
        %v1013 = vcombine.high %v960, %v976
        %v1015 = vunpack.c.l.s4 1983009808
        %v1016 = vunpack.c.0.s8 %v1015
        %v1017 = vlaneseq
        %v1018 = vshrl.u32 %v1017, 7
        %v1019 = vsub.s32 %v1016, %v1018
        %v1020 = vrot.slane %v1012, %v1019
        %v1022 = vunpack.c.l.s4 1983009808
        %v1023 = vunpack.c.0.s8 %v1022
        %v1024 = vlaneseq
        %v1025 = vshrl.u32 %v1024, 7
        %v1026 = vsub.s32 %v1023, %v1025
        %v1027 = vrot.slane %v1013, %v1026
        %v1028 = vcombine.low %v968, %v984
        %v1029 = vcombine.high %v968, %v984
        %v1031 = vunpack.c.l.s4 1983009808
        %v1032 = vunpack.c.0.s8 %v1031
        %v1033 = vlaneseq
        %v1034 = vshrl.u32 %v1033, 7
        %v1035 = vsub.s32 %v1032, %v1034
        %v1036 = vrot.slane %v1028, %v1035
        %v1038 = vunpack.c.l.s4 1983009808
        %v1039 = vunpack.c.0.s8 %v1038
        %v1040 = vlaneseq
        %v1041 = vshrl.u32 %v1040, 7
        %v1042 = vsub.s32 %v1039, %v1041
        %v1043 = vrot.slane %v1029, %v1042
        %v1044 = vcombine.high %v992, %v1007
        %v1046 = vunpack.c.l.s4 1983009808
        %v1047 = vunpack.c.0.s8 %v1046
        %v1048 = vlaneseq
        %v1049 = vshrl.u32 %v1048, 7
        %v1050 = vsub.s32 %v1047, %v1049
        %v1051 = vrot.slane %v992, %v1050
        %v1053 = vunpack.c.l.s4 1983009808
        %v1054 = vunpack.c.0.s8 %v1053
        %v1055 = vlaneseq
        %v1056 = vshrl.u32 %v1055, 7
        %v1057 = vsub.s32 %v1054, %v1056
        %v1058 = vrot.slane %v1044, %v1057
        %v1059 = vcombine.high %v1000, %v1007
        %v1061 = vunpack.c.l.s4 1983009808
        %v1062 = vunpack.c.0.s8 %v1061
        %v1063 = vlaneseq
        %v1064 = vshrl.u32 %v1063, 7
        %v1065 = vsub.s32 %v1062, %v1064
        %v1066 = vrot.slane %v1000, %v1065
        %v1068 = vunpack.c.l.s4 1983009808
        %v1069 = vunpack.c.0.s8 %v1068
        %v1070 = vlaneseq
        %v1071 = vshrl.u32 %v1070, 7
        %v1072 = vsub.s32 %v1069, %v1071
        %v1073 = vrot.slane %v1059, %v1072
        %v1074 = vcombine.low %v1020, %v1036
        %v1075 = vcombine.high %v1020, %v1036
        %v1077 = vunpack.c.l.s4 1934713408
        %v1078 = vunpack.c.0.s8 %v1077
        %v1079 = vlaneseq
        %v1080 = vshrl.u32 %v1079, 7
        %v1081 = vsub.s32 %v1078, %v1080
        %v1082 = vrot.slane %v1074, %v1081
        %v1084 = vunpack.c.l.s4 1934713408
        %v1085 = vunpack.c.0.s8 %v1084
        %v1086 = vlaneseq
        %v1087 = vshrl.u32 %v1086, 7
        %v1088 = vsub.s32 %v1085, %v1087
        %v1089 = vrot.slane %v1075, %v1088
        %v1090 = vcombine.low %v1027, %v1043
        %v1091 = vcombine.high %v1027, %v1043
        %v1093 = vunpack.c.l.s4 1934713408
        %v1094 = vunpack.c.0.s8 %v1093
        %v1095 = vlaneseq
        %v1096 = vshrl.u32 %v1095, 7
        %v1097 = vsub.s32 %v1094, %v1096
        %v1098 = vrot.slane %v1090, %v1097
        %v1100 = vunpack.c.l.s4 1934713408
        %v1101 = vunpack.c.0.s8 %v1100
        %v1102 = vlaneseq
        %v1103 = vshrl.u32 %v1102, 7
        %v1104 = vsub.s32 %v1101, %v1103
        %v1105 = vrot.slane %v1091, %v1104
        %v1106 = vcombine.low %v1051, %v1066
        %v1107 = vcombine.high %v1051, %v1066
        %v1109 = vunpack.c.l.s4 1934713408
        %v1110 = vunpack.c.0.s8 %v1109
        %v1111 = vlaneseq
        %v1112 = vshrl.u32 %v1111, 7
        %v1113 = vsub.s32 %v1110, %v1112
        %v1114 = vrot.slane %v1106, %v1113
        %v1116 = vunpack.c.l.s4 1934713408
        %v1117 = vunpack.c.0.s8 %v1116
        %v1118 = vlaneseq
        %v1119 = vshrl.u32 %v1118, 7
        %v1120 = vsub.s32 %v1117, %v1119
        %v1121 = vrot.slane %v1107, %v1120
        %v1122 = vcombine.low %v1058, %v1073
        %v1123 = vcombine.high %v1058, %v1073
        %v1125 = vunpack.c.l.s4 1934713408
        %v1126 = vunpack.c.0.s8 %v1125
        %v1127 = vlaneseq
        %v1128 = vshrl.u32 %v1127, 7
        %v1129 = vsub.s32 %v1126, %v1128
        %v1130 = vrot.slane %v1122, %v1129
        %v1132 = vunpack.c.l.s4 1934713408
        %v1133 = vunpack.c.0.s8 %v1132
        %v1134 = vlaneseq
        %v1135 = vshrl.u32 %v1134, 7
        %v1136 = vsub.s32 %v1133, %v1135
        %v1137 = vrot.slane %v1123, %v1136
        %v1138 = vcombine.low %v1082, %v1114
        %v1139 = vcombine.high %v1082, %v1114
        %v1140 = vcombine.low %v1089, %v1121
        %v1141 = vcombine.high %v1089, %v1121
        %v1142 = vcombine.low %v1098, %v1130
        %v1143 = vcombine.high %v1098, %v1130
        %v1144 = vcombine.low %v1105, %v1137
        %v1145 = vcombine.high %v1105, %v1137
        %v1146 = vcombine.low %v964, %v980
        %v1147 = vcombine.high %v964, %v980
        %v1149 = vunpack.c.l.s4 1983009808
        %v1150 = vunpack.c.0.s8 %v1149
        %v1151 = vlaneseq
        %v1152 = vshrl.u32 %v1151, 7
        %v1153 = vsub.s32 %v1150, %v1152
        %v1154 = vrot.slane %v1146, %v1153
        %v1156 = vunpack.c.l.s4 1983009808
        %v1157 = vunpack.c.0.s8 %v1156
        %v1158 = vlaneseq
        %v1159 = vshrl.u32 %v1158, 7
        %v1160 = vsub.s32 %v1157, %v1159
        %v1161 = vrot.slane %v1147, %v1160
        %v1162 = vcombine.low %v972, %v988
        %v1163 = vcombine.high %v972, %v988
        %v1165 = vunpack.c.l.s4 1983009808
        %v1166 = vunpack.c.0.s8 %v1165
        %v1167 = vlaneseq
        %v1168 = vshrl.u32 %v1167, 7
        %v1169 = vsub.s32 %v1166, %v1168
        %v1170 = vrot.slane %v1162, %v1169
        %v1172 = vunpack.c.l.s4 1983009808
        %v1173 = vunpack.c.0.s8 %v1172
        %v1174 = vlaneseq
        %v1175 = vshrl.u32 %v1174, 7
        %v1176 = vsub.s32 %v1173, %v1175
        %v1177 = vrot.slane %v1163, %v1176
        %v1178 = vcombine.high %v996, %v1010
        %v1180 = vunpack.c.l.s4 1983009808
        %v1181 = vunpack.c.0.s8 %v1180
        %v1182 = vlaneseq
        %v1183 = vshrl.u32 %v1182, 7
        %v1184 = vsub.s32 %v1181, %v1183
        %v1185 = vrot.slane %v996, %v1184
        %v1187 = vunpack.c.l.s4 1983009808
        %v1188 = vunpack.c.0.s8 %v1187
        %v1189 = vlaneseq
        %v1190 = vshrl.u32 %v1189, 7
        %v1191 = vsub.s32 %v1188, %v1190
        %v1192 = vrot.slane %v1178, %v1191
        %v1193 = vcombine.high %v1004, %v1010
        %v1195 = vunpack.c.l.s4 1983009808
        %v1196 = vunpack.c.0.s8 %v1195
        %v1197 = vlaneseq
        %v1198 = vshrl.u32 %v1197, 7
        %v1199 = vsub.s32 %v1196, %v1198
        %v1200 = vrot.slane %v1004, %v1199
        %v1202 = vunpack.c.l.s4 1983009808
        %v1203 = vunpack.c.0.s8 %v1202
        %v1204 = vlaneseq
        %v1205 = vshrl.u32 %v1204, 7
        %v1206 = vsub.s32 %v1203, %v1205
        %v1207 = vrot.slane %v1193, %v1206
        %v1208 = vcombine.low %v1154, %v1170
        %v1209 = vcombine.high %v1154, %v1170
        %v1211 = vunpack.c.l.s4 1934713408
        %v1212 = vunpack.c.0.s8 %v1211
        %v1213 = vlaneseq
        %v1214 = vshrl.u32 %v1213, 7
        %v1215 = vsub.s32 %v1212, %v1214
        %v1216 = vrot.slane %v1208, %v1215
        %v1218 = vunpack.c.l.s4 1934713408
        %v1219 = vunpack.c.0.s8 %v1218
        %v1220 = vlaneseq
        %v1221 = vshrl.u32 %v1220, 7
        %v1222 = vsub.s32 %v1219, %v1221
        %v1223 = vrot.slane %v1209, %v1222
        %v1224 = vcombine.low %v1161, %v1177
        %v1225 = vcombine.high %v1161, %v1177
        %v1227 = vunpack.c.l.s4 1934713408
        %v1228 = vunpack.c.0.s8 %v1227
        %v1229 = vlaneseq
        %v1230 = vshrl.u32 %v1229, 7
        %v1231 = vsub.s32 %v1228, %v1230
        %v1232 = vrot.slane %v1224, %v1231
        %v1234 = vunpack.c.l.s4 1934713408
        %v1235 = vunpack.c.0.s8 %v1234
        %v1236 = vlaneseq
        %v1237 = vshrl.u32 %v1236, 7
        %v1238 = vsub.s32 %v1235, %v1237
        %v1239 = vrot.slane %v1225, %v1238
        %v1240 = vcombine.low %v1185, %v1200
        %v1241 = vcombine.high %v1185, %v1200
        %v1243 = vunpack.c.l.s4 1934713408
        %v1244 = vunpack.c.0.s8 %v1243
        %v1245 = vlaneseq
        %v1246 = vshrl.u32 %v1245, 7
        %v1247 = vsub.s32 %v1244, %v1246
        %v1248 = vrot.slane %v1240, %v1247
        %v1250 = vunpack.c.l.s4 1934713408
        %v1251 = vunpack.c.0.s8 %v1250
        %v1252 = vlaneseq
        %v1253 = vshrl.u32 %v1252, 7
        %v1254 = vsub.s32 %v1251, %v1253
        %v1255 = vrot.slane %v1241, %v1254
        %v1256 = vcombine.low %v1192, %v1207
        %v1257 = vcombine.high %v1192, %v1207
        %v1259 = vunpack.c.l.s4 1934713408
        %v1260 = vunpack.c.0.s8 %v1259
        %v1261 = vlaneseq
        %v1262 = vshrl.u32 %v1261, 7
        %v1263 = vsub.s32 %v1260, %v1262
        %v1264 = vrot.slane %v1256, %v1263
        %v1266 = vunpack.c.l.s4 1934713408
        %v1267 = vunpack.c.0.s8 %v1266
        %v1268 = vlaneseq
        %v1269 = vshrl.u32 %v1268, 7
        %v1270 = vsub.s32 %v1267, %v1269
        %v1271 = vrot.slane %v1257, %v1270
        %v1272 = vcombine.low %v1216, %v1248
        %v1273 = vcombine.high %v1216, %v1248
        %v1274 = vcombine.low %v1223, %v1255
        %v1275 = vcombine.high %v1223, %v1255
        %v1276 = vcombine.low %v1232, %v1264
        %v1277 = vcombine.high %v1232, %v1264
        %v1278 = vcombine.low %v1239, %v1271
        %v1279 = vcombine.high %v1239, %v1271
        %v1280 = vcombine.low %v1138, %v1140
        %v1281 = vcombine.high %v1138, %v1140
        %v1283 = vunpack.c.l.s4 1983009808
        %v1284 = vunpack.c.0.s8 %v1283
        %v1285 = vlaneseq
        %v1286 = vshrl.u32 %v1285, 7
        %v1287 = vsub.s32 %v1284, %v1286
        %v1288 = vrot.slane %v1280, %v1287
        %v1290 = vunpack.c.l.s4 1983009808
        %v1291 = vunpack.c.0.s8 %v1290
        %v1292 = vlaneseq
        %v1293 = vshrl.u32 %v1292, 7
        %v1294 = vsub.s32 %v1291, %v1293
        %v1295 = vrot.slane %v1281, %v1294
        %v1296 = vcombine.low %v1139, %v1141
        %v1297 = vcombine.high %v1139, %v1141
        %v1299 = vunpack.c.l.s4 1983009808
        %v1300 = vunpack.c.0.s8 %v1299
        %v1301 = vlaneseq
        %v1302 = vshrl.u32 %v1301, 7
        %v1303 = vsub.s32 %v1300, %v1302
        %v1304 = vrot.slane %v1296, %v1303
        %v1306 = vunpack.c.l.s4 1983009808
        %v1307 = vunpack.c.0.s8 %v1306
        %v1308 = vlaneseq
        %v1309 = vshrl.u32 %v1308, 7
        %v1310 = vsub.s32 %v1307, %v1309
        %v1311 = vrot.slane %v1297, %v1310
        %v1312 = vcombine.low %v1142, %v1144
        %v1313 = vcombine.high %v1142, %v1144
        %v1315 = vunpack.c.l.s4 1983009808
        %v1316 = vunpack.c.0.s8 %v1315
        %v1317 = vlaneseq
        %v1318 = vshrl.u32 %v1317, 7
        %v1319 = vsub.s32 %v1316, %v1318
        %v1320 = vrot.slane %v1312, %v1319
        %v1322 = vunpack.c.l.s4 1983009808
        %v1323 = vunpack.c.0.s8 %v1322
        %v1324 = vlaneseq
        %v1325 = vshrl.u32 %v1324, 7
        %v1326 = vsub.s32 %v1323, %v1325
        %v1327 = vrot.slane %v1313, %v1326
        %v1328 = vcombine.low %v1143, %v1145
        %v1329 = vcombine.high %v1143, %v1145
        %v1331 = vunpack.c.l.s4 1983009808
        %v1332 = vunpack.c.0.s8 %v1331
        %v1333 = vlaneseq
        %v1334 = vshrl.u32 %v1333, 7
        %v1335 = vsub.s32 %v1332, %v1334
        %v1336 = vrot.slane %v1328, %v1335
        %v1338 = vunpack.c.l.s4 1983009808
        %v1339 = vunpack.c.0.s8 %v1338
        %v1340 = vlaneseq
        %v1341 = vshrl.u32 %v1340, 7
        %v1342 = vsub.s32 %v1339, %v1341
        %v1343 = vrot.slane %v1329, %v1342
        %v1344 = vcombine.low %v1288, %v1304
        %v1345 = vcombine.high %v1288, %v1304
        %v1347 = vunpack.c.l.s4 1934713408
        %v1348 = vunpack.c.0.s8 %v1347
        %v1349 = vlaneseq
        %v1350 = vshrl.u32 %v1349, 7
        %v1351 = vsub.s32 %v1348, %v1350
        %v1352 = vrot.slane %v1344, %v1351
        %v1354 = vunpack.c.l.s4 1934713408
        %v1355 = vunpack.c.0.s8 %v1354
        %v1356 = vlaneseq
        %v1357 = vshrl.u32 %v1356, 7
        %v1358 = vsub.s32 %v1355, %v1357
        %v1359 = vrot.slane %v1345, %v1358
        %v1360 = vcombine.low %v1295, %v1311
        %v1362 = vunpack.c.l.s4 1934713408
        %v1363 = vunpack.c.0.s8 %v1362
        %v1364 = vlaneseq
        %v1365 = vshrl.u32 %v1364, 7
        %v1366 = vsub.s32 %v1363, %v1365
        %v1367 = vrot.slane %v1360, %v1366
        %v1368 = vcombine.low %v1320, %v1336
        %v1369 = vcombine.high %v1320, %v1336
        %v1371 = vunpack.c.l.s4 1934713408
        %v1372 = vunpack.c.0.s8 %v1371
        %v1373 = vlaneseq
        %v1374 = vshrl.u32 %v1373, 7
        %v1375 = vsub.s32 %v1372, %v1374
        %v1376 = vrot.slane %v1368, %v1375
        %v1378 = vunpack.c.l.s4 1934713408
        %v1379 = vunpack.c.0.s8 %v1378
        %v1380 = vlaneseq
        %v1381 = vshrl.u32 %v1380, 7
        %v1382 = vsub.s32 %v1379, %v1381
        %v1383 = vrot.slane %v1369, %v1382
        %v1384 = vcombine.low %v1327, %v1343
        %v1386 = vunpack.c.l.s4 1934713408
        %v1387 = vunpack.c.0.s8 %v1386
        %v1388 = vlaneseq
        %v1389 = vshrl.u32 %v1388, 7
        %v1390 = vsub.s32 %v1387, %v1389
        %v1391 = vrot.slane %v1384, %v1390
        %v1392 = vcombine.low %v1352, %v1376
        %v1393 = vcombine.high %v1352, %v1376
        %v1394 = vcombine.low %v1359, %v1383
        %v1395 = vcombine.high %v1359, %v1383
        %v1396 = vcombine.low %v1367, %v1391
        %v1397 = vcombine.high %v1367, %v1391
        %v1398 = vcombine.low %v1272, %v1274
        %v1399 = vcombine.high %v1272, %v1274
        %v1401 = vunpack.c.l.s4 1983009808
        %v1402 = vunpack.c.0.s8 %v1401
        %v1403 = vlaneseq
        %v1404 = vshrl.u32 %v1403, 7
        %v1405 = vsub.s32 %v1402, %v1404
        %v1406 = vrot.slane %v1398, %v1405
        %v1408 = vunpack.c.l.s4 1983009808
        %v1409 = vunpack.c.0.s8 %v1408
        %v1410 = vlaneseq
        %v1411 = vshrl.u32 %v1410, 7
        %v1412 = vsub.s32 %v1409, %v1411
        %v1413 = vrot.slane %v1399, %v1412
        %v1414 = vcombine.low %v1273, %v1275
        %v1415 = vcombine.high %v1273, %v1275
        %v1417 = vunpack.c.l.s4 1983009808
        %v1418 = vunpack.c.0.s8 %v1417
        %v1419 = vlaneseq
        %v1420 = vshrl.u32 %v1419, 7
        %v1421 = vsub.s32 %v1418, %v1420
        %v1422 = vrot.slane %v1414, %v1421
        %v1424 = vunpack.c.l.s4 1983009808
        %v1425 = vunpack.c.0.s8 %v1424
        %v1426 = vlaneseq
        %v1427 = vshrl.u32 %v1426, 7
        %v1428 = vsub.s32 %v1425, %v1427
        %v1429 = vrot.slane %v1415, %v1428
        %v1430 = vcombine.low %v1276, %v1278
        %v1431 = vcombine.high %v1276, %v1278
        %v1433 = vunpack.c.l.s4 1983009808
        %v1434 = vunpack.c.0.s8 %v1433
        %v1435 = vlaneseq
        %v1436 = vshrl.u32 %v1435, 7
        %v1437 = vsub.s32 %v1434, %v1436
        %v1438 = vrot.slane %v1430, %v1437
        %v1440 = vunpack.c.l.s4 1983009808
        %v1441 = vunpack.c.0.s8 %v1440
        %v1442 = vlaneseq
        %v1443 = vshrl.u32 %v1442, 7
        %v1444 = vsub.s32 %v1441, %v1443
        %v1445 = vrot.slane %v1431, %v1444
        %v1446 = vcombine.low %v1277, %v1279
        %v1447 = vcombine.high %v1277, %v1279
        %v1449 = vunpack.c.l.s4 1983009808
        %v1450 = vunpack.c.0.s8 %v1449
        %v1451 = vlaneseq
        %v1452 = vshrl.u32 %v1451, 7
        %v1453 = vsub.s32 %v1450, %v1452
        %v1454 = vrot.slane %v1446, %v1453
        %v1456 = vunpack.c.l.s4 1983009808
        %v1457 = vunpack.c.0.s8 %v1456
        %v1458 = vlaneseq
        %v1459 = vshrl.u32 %v1458, 7
        %v1460 = vsub.s32 %v1457, %v1459
        %v1461 = vrot.slane %v1447, %v1460
        %v1462 = vcombine.low %v1406, %v1422
        %v1463 = vcombine.high %v1406, %v1422
        %v1465 = vunpack.c.l.s4 1934713408
        %v1466 = vunpack.c.0.s8 %v1465
        %v1467 = vlaneseq
        %v1468 = vshrl.u32 %v1467, 7
        %v1469 = vsub.s32 %v1466, %v1468
        %v1470 = vrot.slane %v1462, %v1469
        %v1472 = vunpack.c.l.s4 1934713408
        %v1473 = vunpack.c.0.s8 %v1472
        %v1474 = vlaneseq
        %v1475 = vshrl.u32 %v1474, 7
        %v1476 = vsub.s32 %v1473, %v1475
        %v1477 = vrot.slane %v1463, %v1476
        %v1478 = vcombine.low %v1413, %v1429
        %v1480 = vunpack.c.l.s4 1934713408
        %v1481 = vunpack.c.0.s8 %v1480
        %v1482 = vlaneseq
        %v1483 = vshrl.u32 %v1482, 7
        %v1484 = vsub.s32 %v1481, %v1483
        %v1485 = vrot.slane %v1478, %v1484
        %v1486 = vcombine.low %v1438, %v1454
        %v1487 = vcombine.high %v1438, %v1454
        %v1489 = vunpack.c.l.s4 1934713408
        %v1490 = vunpack.c.0.s8 %v1489
        %v1491 = vlaneseq
        %v1492 = vshrl.u32 %v1491, 7
        %v1493 = vsub.s32 %v1490, %v1492
        %v1494 = vrot.slane %v1486, %v1493
        %v1496 = vunpack.c.l.s4 1934713408
        %v1497 = vunpack.c.0.s8 %v1496
        %v1498 = vlaneseq
        %v1499 = vshrl.u32 %v1498, 7
        %v1500 = vsub.s32 %v1497, %v1499
        %v1501 = vrot.slane %v1487, %v1500
        %v1502 = vcombine.low %v1445, %v1461
        %v1504 = vunpack.c.l.s4 1934713408
        %v1505 = vunpack.c.0.s8 %v1504
        %v1506 = vlaneseq
        %v1507 = vshrl.u32 %v1506, 7
        %v1508 = vsub.s32 %v1505, %v1507
        %v1509 = vrot.slane %v1502, %v1508
        %v1510 = vcombine.low %v1470, %v1494
        %v1511 = vcombine.high %v1470, %v1494
        %v1512 = vcombine.low %v1477, %v1501
        %v1513 = vcombine.high %v1477, %v1501
        %v1514 = vcombine.low %v1485, %v1509
        %v1515 = vcombine.high %v1485, %v1509
        %v1518 = vpack.i.b16 %v1510, %v1392
        %v1519 = vshrl.u32 %v1392, 16
        %v1520 = vshrl.u32 %v1510, 16
        %v1521 = vpack.i.b16 %v1520, %v1519
        %v1524 = vpack.i.b16 %v1511, %v1393
        %v1525 = vshrl.u32 %v1393, 16
        %v1526 = vshrl.u32 %v1511, 16
        %v1527 = vpack.i.b16 %v1526, %v1525
        %v1530 = vpack.i.b16 %v1512, %v1394
        %v1531 = vshrl.u32 %v1394, 16
        %v1532 = vshrl.u32 %v1512, 16
        %v1533 = vpack.i.b16 %v1532, %v1531
        %v1536 = vpack.i.b16 %v1513, %v1395
        %v1537 = vshrl.u32 %v1395, 16
        %v1538 = vshrl.u32 %v1513, 16
        %v1539 = vpack.i.b16 %v1538, %v1537
        %v1542 = vpack.i.b16 %v1514, %v1396
        %v1543 = vshrl.u32 %v1396, 16
        %v1544 = vshrl.u32 %v1514, 16
        %v1545 = vpack.i.b16 %v1544, %v1543
        %v1548 = vpack.i.b16 %v1515, %v1397
        %v1549 = vshrl.u32 %v1397, 16
        %v1550 = vshrl.u32 %v1515, 16
        %v1551 = vpack.i.b16 %v1550, %v1549
        %v1552 = vunpack.c.l.b16 %v1518
        %v1553 = vunpack.c.h.b16 %v1518
        %v1554 = vunpack.c.l.b16 %v1521
        %v1555 = vunpack.c.h.b16 %v1521
        %v1556 = vunpack.c.l.b16 %v1524
        %v1557 = vunpack.c.h.b16 %v1524
        %v1558 = vunpack.c.l.b16 %v1527
        %v1559 = vunpack.c.h.b16 %v1527
        %v1560 = vpack.c.b16 %v1552, %v1552
        %v1561 = vpack.c.b16 %v1553, %v1553
        %v1562 = vpack.c.b16 %v1554, %v1554
        %v1563 = vpack.c.b16 %v1555, %v1555
        %v1564 = vpack.c.b16 %v1556, %v1556
        %v1565 = vpack.c.b16 %v1557, %v1557
        %v1566 = vpack.c.b16 %v1558, %v1558
        %v1567 = vpack.c.b16 %v1559, %v1559
        %v1568 = vunpack.c.l.b16 %v1530
        %v1569 = vunpack.c.h.b16 %v1530
        %v1570 = vunpack.c.l.b16 %v1533
        %v1571 = vunpack.c.h.b16 %v1533
        %v1572 = vunpack.c.l.b16 %v1536
        %v1573 = vunpack.c.h.b16 %v1536
        %v1574 = vunpack.c.l.b16 %v1539
        %v1575 = vunpack.c.h.b16 %v1539
        %v1576 = vpack.c.b16 %v1568, %v1568
        %v1577 = vpack.c.b16 %v1569, %v1569
        %v1578 = vpack.c.b16 %v1570, %v1570
        %v1579 = vpack.c.b16 %v1571, %v1571
        %v1580 = vpack.c.b16 %v1572, %v1572
        %v1581 = vpack.c.b16 %v1573, %v1573
        %v1582 = vpack.c.b16 %v1574, %v1574
        %v1583 = vpack.c.b16 %v1575, %v1575
        %v1584 = vunpack.c.l.b16 %v1542
        %v1585 = vunpack.c.h.b16 %v1542
        %v1586 = vunpack.c.l.b16 %v1545
        %v1587 = vunpack.c.h.b16 %v1545
        %v1588 = vunpack.c.l.b16 %v1548
        %v1589 = vunpack.c.h.b16 %v1548
        %v1590 = vunpack.c.l.b16 %v1551
        %v1591 = vunpack.c.h.b16 %v1551
        %v1592 = vpack.c.b16 %v1584, %v1584
        %v1593 = vpack.c.b16 %v1585, %v1585
        %v1594 = vpack.c.b16 %v1586, %v1586
        %v1595 = vpack.c.b16 %v1587, %v1587
        %v1596 = vpack.c.b16 %v1588, %v1588
        %v1597 = vpack.c.b16 %v1589, %v1589
        %v1598 = vpack.c.b16 %v1590, %v1590
        %v1599 = vpack.c.b16 %v1591, %v1591
        %v1600 = vld [vmem:[%s657] sm:$0xf]
        %v1601 = vld [vmem:[%s657 + $0x4] sm:$0xf]
        %v1602 = vld [vmem:[%s657 + $0x8] sm:$0xf]
        %v1603 = vld [vmem:[%s657 + $0xc] sm:$0xf]
        %v1604 = vld [vmem:[%s665] sm:$0x1]
        %v1605 = vlaneseq
        %v1606 = vshrl.u32 %v1605, 7
        %v1607 = vlaneseq
        %v1608 = vand.u32 %v1607, 127
        %vm1609 = vcmp.le.s32.totalorder %v1608, %v1606
        %v1610 = vsel %vm1609, 0.0, -1e+30
        %vm1611 = vcmask 64512
        %v1613 = vsel %vm1611, %v1560, 0
        %v1616 = vsel %vm1611, %v1576, 0
        %1618 = vmatprep.subr.bf16.mxu0 0
        %1619 = vmatpush1.bf16.xpose.msra.mxu0 %v1616
        %1620 = vmatprep.subr.bf16.mxu0 0
        %1621 = vmatpush1.bf16.xpose.msra.mxu0 0
        %1622 = vmatprep.subr.bf16.mxu0 0
        %1623 = vmatpush1.bf16.xpose.msra.mxu0 0
        %1624 = vmatprep.subr.bf16.mxu0 0
        %1625 = vmatpush1.bf16.xpose.msra.mxu0 0
        %1626 = vmatprep.subr.bf16.mxu0 0
        %1627 = vmatpush1.bf16.xpose.msra.mxu0 0
        %1628 = vmatprep.subr.bf16.mxu0 0
        %1629 = vmatpush1.bf16.xpose.msra.mxu0 0
        %1630 = vmatprep.subr.bf16.mxu0 0
        %1631 = vmatpush1.bf16.xpose.msra.mxu0 0
        %1632 = vmatprep.subr.bf16.mxu0 0
        %1633 = vmatpush1.bf16.xpose.msra.mxu0 0
        %1634 = vmatprep.subr.bf16.mxu0 0
        %1635 = vmatpush1.bf16.xpose.msra.mxu0 0
        %1636 = vmatprep.subr.bf16.mxu0 0
        %1637 = vmatpush1.bf16.xpose.msra.mxu0 0
        %1638 = vmatprep.subr.bf16.mxu0 0
        %1639 = vmatpush1.bf16.xpose.msra.mxu0 0
        %1640 = vmatprep.subr.bf16.mxu0 0
        %1641 = vmatpush1.bf16.xpose.msra.mxu0 0
        %1642 = vmatprep.subr.bf16.mxu0 0
        %1643 = vmatpush1.bf16.xpose.msra.mxu0 0
        %1644 = vmatprep.subr.bf16.mxu0 0
        %1645 = vmatpush1.bf16.xpose.msra.mxu0 0
        %1646 = vmatprep.subr.bf16.mxu0 0
        %1647 = vmatpush1.bf16.xpose.msra.mxu0 0
        %1648 = vmatprep.subr.bf16.mxu0 0
        %1649 = vmatpush1.bf16.xpose.msra.mxu0 0
        %1650 = vmatprep.mubr.bf16.mxu0 0
        %1651 = vmatmul.mubr.bf16.gmra.mrb[0].mxu0 %v1613
        %v1652 = vpop.f32.mrb[0].mxu0
        %v1653 = vadd.f32 %v1610, %v1652
        %v1654 = vpop.f32.mrb[0].mxu0
        %v1655 = vpop.f32.mrb[0].mxu0
        %v1656 = vpop.f32.mrb[0].mxu0
        %1657 = vdwg.mxu0
        %v1659 = vsel %vm1611, %v1561, 0
        %v1662 = vsel %vm1611, %v1577, 0
        %1664 = vmatprep.subr.bf16.mxu0 0
        %1665 = vmatpush1.bf16.xpose.msra.mxu0 %v1662
        %1666 = vmatprep.subr.bf16.mxu0 0
        %1667 = vmatpush1.bf16.xpose.msra.mxu0 0
        %1668 = vmatprep.subr.bf16.mxu0 0
        %1669 = vmatpush1.bf16.xpose.msra.mxu0 0
        %1670 = vmatprep.subr.bf16.mxu0 0
        %1671 = vmatpush1.bf16.xpose.msra.mxu0 0
        %1672 = vmatprep.subr.bf16.mxu0 0
        %1673 = vmatpush1.bf16.xpose.msra.mxu0 0
        %1674 = vmatprep.subr.bf16.mxu0 0
        %1675 = vmatpush1.bf16.xpose.msra.mxu0 0
        %1676 = vmatprep.subr.bf16.mxu0 0
        %1677 = vmatpush1.bf16.xpose.msra.mxu0 0
        %1678 = vmatprep.subr.bf16.mxu0 0
        %1679 = vmatpush1.bf16.xpose.msra.mxu0 0
        %1680 = vmatprep.subr.bf16.mxu0 0
        %1681 = vmatpush1.bf16.xpose.msra.mxu0 0
        %1682 = vmatprep.subr.bf16.mxu0 0
        %1683 = vmatpush1.bf16.xpose.msra.mxu0 0
        %1684 = vmatprep.subr.bf16.mxu0 0
        %1685 = vmatpush1.bf16.xpose.msra.mxu0 0
        %1686 = vmatprep.subr.bf16.mxu0 0
        %1687 = vmatpush1.bf16.xpose.msra.mxu0 0
        %1688 = vmatprep.subr.bf16.mxu0 0
        %1689 = vmatpush1.bf16.xpose.msra.mxu0 0
        %1690 = vmatprep.subr.bf16.mxu0 0
        %1691 = vmatpush1.bf16.xpose.msra.mxu0 0
        %1692 = vmatprep.subr.bf16.mxu0 0
        %1693 = vmatpush1.bf16.xpose.msra.mxu0 0
        %1694 = vmatprep.subr.bf16.mxu0 0
        %1695 = vmatpush1.bf16.xpose.msra.mxu0 0
        %1696 = vmatprep.mubr.bf16.mxu0 0
        %1697 = vmatmul.mubr.bf16.gmra.mrb[0].mxu0 %v1659
        %v1698 = vpop.f32.mrb[0].mxu0
        %v1699 = vadd.f32 %v1610, %v1698
        %v1700 = vpop.f32.mrb[0].mxu0
        %v1701 = vpop.f32.mrb[0].mxu0
        %v1702 = vpop.f32.mrb[0].mxu0
        %1703 = vdwg.mxu0
        %v1705 = vsel %vm1611, %v1562, 0
        %v1708 = vsel %vm1611, %v1578, 0
        %1710 = vmatprep.subr.bf16.mxu0 0
        %1711 = vmatpush1.bf16.xpose.msra.mxu0 %v1708
        %1712 = vmatprep.subr.bf16.mxu0 0
        %1713 = vmatpush1.bf16.xpose.msra.mxu0 0
        %1714 = vmatprep.subr.bf16.mxu0 0
        %1715 = vmatpush1.bf16.xpose.msra.mxu0 0
        %1716 = vmatprep.subr.bf16.mxu0 0
        %1717 = vmatpush1.bf16.xpose.msra.mxu0 0
        %1718 = vmatprep.subr.bf16.mxu0 0
        %1719 = vmatpush1.bf16.xpose.msra.mxu0 0
        %1720 = vmatprep.subr.bf16.mxu0 0
        %1721 = vmatpush1.bf16.xpose.msra.mxu0 0
        %1722 = vmatprep.subr.bf16.mxu0 0
        %1723 = vmatpush1.bf16.xpose.msra.mxu0 0
        %1724 = vmatprep.subr.bf16.mxu0 0
        %1725 = vmatpush1.bf16.xpose.msra.mxu0 0
        %1726 = vmatprep.subr.bf16.mxu0 0
        %1727 = vmatpush1.bf16.xpose.msra.mxu0 0
        %1728 = vmatprep.subr.bf16.mxu0 0
        %1729 = vmatpush1.bf16.xpose.msra.mxu0 0
        %1730 = vmatprep.subr.bf16.mxu0 0
        %1731 = vmatpush1.bf16.xpose.msra.mxu0 0
        %1732 = vmatprep.subr.bf16.mxu0 0
        %1733 = vmatpush1.bf16.xpose.msra.mxu0 0
        %1734 = vmatprep.subr.bf16.mxu0 0
        %1735 = vmatpush1.bf16.xpose.msra.mxu0 0
        %1736 = vmatprep.subr.bf16.mxu0 0
        %1737 = vmatpush1.bf16.xpose.msra.mxu0 0
        %1738 = vmatprep.subr.bf16.mxu0 0
        %1739 = vmatpush1.bf16.xpose.msra.mxu0 0
        %1740 = vmatprep.subr.bf16.mxu0 0
        %1741 = vmatpush1.bf16.xpose.msra.mxu0 0
        %1742 = vmatprep.mubr.bf16.mxu0 0
        %1743 = vmatmul.mubr.bf16.gmra.mrb[0].mxu0 %v1705
        %v1744 = vpop.f32.mrb[0].mxu0
        %v1745 = vadd.f32 %v1610, %v1744
        %v1746 = vpop.f32.mrb[0].mxu0
        %v1747 = vpop.f32.mrb[0].mxu0
        %v1748 = vpop.f32.mrb[0].mxu0
        %1749 = vdwg.mxu0
        %v1751 = vsel %vm1611, %v1563, 0
        %v1754 = vsel %vm1611, %v1579, 0
        %1756 = vmatprep.subr.bf16.mxu0 0
        %1757 = vmatpush1.bf16.xpose.msra.mxu0 %v1754
        %1758 = vmatprep.subr.bf16.mxu0 0
        %1759 = vmatpush1.bf16.xpose.msra.mxu0 0
        %1760 = vmatprep.subr.bf16.mxu0 0
        %1761 = vmatpush1.bf16.xpose.msra.mxu0 0
        %1762 = vmatprep.subr.bf16.mxu0 0
        %1763 = vmatpush1.bf16.xpose.msra.mxu0 0
        %1764 = vmatprep.subr.bf16.mxu0 0
        %1765 = vmatpush1.bf16.xpose.msra.mxu0 0
        %1766 = vmatprep.subr.bf16.mxu0 0
        %1767 = vmatpush1.bf16.xpose.msra.mxu0 0
        %1768 = vmatprep.subr.bf16.mxu0 0
        %1769 = vmatpush1.bf16.xpose.msra.mxu0 0
        %1770 = vmatprep.subr.bf16.mxu0 0
        %1771 = vmatpush1.bf16.xpose.msra.mxu0 0
        %1772 = vmatprep.subr.bf16.mxu0 0
        %1773 = vmatpush1.bf16.xpose.msra.mxu0 0
        %1774 = vmatprep.subr.bf16.mxu0 0
        %1775 = vmatpush1.bf16.xpose.msra.mxu0 0
        %1776 = vmatprep.subr.bf16.mxu0 0
        %1777 = vmatpush1.bf16.xpose.msra.mxu0 0
        %1778 = vmatprep.subr.bf16.mxu0 0
        %1779 = vmatpush1.bf16.xpose.msra.mxu0 0
        %1780 = vmatprep.subr.bf16.mxu0 0
        %1781 = vmatpush1.bf16.xpose.msra.mxu0 0
        %1782 = vmatprep.subr.bf16.mxu0 0
        %1783 = vmatpush1.bf16.xpose.msra.mxu0 0
        %1784 = vmatprep.subr.bf16.mxu0 0
        %1785 = vmatpush1.bf16.xpose.msra.mxu0 0
        %1786 = vmatprep.subr.bf16.mxu0 0
        %1787 = vmatpush1.bf16.xpose.msra.mxu0 0
        %1788 = vmatprep.mubr.bf16.mxu0 0
        %1789 = vmatmul.mubr.bf16.gmra.mrb[0].mxu0 %v1751
        %v1790 = vpop.f32.mrb[0].mxu0
        %v1791 = vadd.f32 %v1610, %v1790
        %v1792 = vpop.f32.mrb[0].mxu0
        %v1793 = vpop.f32.mrb[0].mxu0
        %v1794 = vpop.f32.mrb[0].mxu0
        %1795 = vdwg.mxu0
        %v1797 = vsel %vm1611, %v1564, 0
        %v1800 = vsel %vm1611, %v1580, 0
        %1802 = vmatprep.subr.bf16.mxu0 0
        %1803 = vmatpush1.bf16.xpose.msra.mxu0 %v1800
        %1804 = vmatprep.subr.bf16.mxu0 0
        %1805 = vmatpush1.bf16.xpose.msra.mxu0 0
        %1806 = vmatprep.subr.bf16.mxu0 0
        %1807 = vmatpush1.bf16.xpose.msra.mxu0 0
        %1808 = vmatprep.subr.bf16.mxu0 0
        %1809 = vmatpush1.bf16.xpose.msra.mxu0 0
        %1810 = vmatprep.subr.bf16.mxu0 0
        %1811 = vmatpush1.bf16.xpose.msra.mxu0 0
        %1812 = vmatprep.subr.bf16.mxu0 0
        %1813 = vmatpush1.bf16.xpose.msra.mxu0 0
        %1814 = vmatprep.subr.bf16.mxu0 0
        %1815 = vmatpush1.bf16.xpose.msra.mxu0 0
        %1816 = vmatprep.subr.bf16.mxu0 0
        %1817 = vmatpush1.bf16.xpose.msra.mxu0 0
        %1818 = vmatprep.subr.bf16.mxu0 0
        %1819 = vmatpush1.bf16.xpose.msra.mxu0 0
        %1820 = vmatprep.subr.bf16.mxu0 0
        %1821 = vmatpush1.bf16.xpose.msra.mxu0 0
        %1822 = vmatprep.subr.bf16.mxu0 0
        %1823 = vmatpush1.bf16.xpose.msra.mxu0 0
        %1824 = vmatprep.subr.bf16.mxu0 0
        %1825 = vmatpush1.bf16.xpose.msra.mxu0 0
        %1826 = vmatprep.subr.bf16.mxu0 0
        %1827 = vmatpush1.bf16.xpose.msra.mxu0 0
        %1828 = vmatprep.subr.bf16.mxu0 0
        %1829 = vmatpush1.bf16.xpose.msra.mxu0 0
        %1830 = vmatprep.subr.bf16.mxu0 0
        %1831 = vmatpush1.bf16.xpose.msra.mxu0 0
        %1832 = vmatprep.subr.bf16.mxu0 0
        %1833 = vmatpush1.bf16.xpose.msra.mxu0 0
        %1834 = vmatprep.mubr.bf16.mxu0 0
        %1835 = vmatmul.mubr.bf16.gmra.mrb[0].mxu0 %v1797
        %v1836 = vpop.f32.mrb[0].mxu0
        %v1837 = vadd.f32 %v1610, %v1836
        %v1838 = vpop.f32.mrb[0].mxu0
        %v1839 = vpop.f32.mrb[0].mxu0
        %v1840 = vpop.f32.mrb[0].mxu0
        %1841 = vdwg.mxu0
        %v1843 = vsel %vm1611, %v1565, 0
        %v1846 = vsel %vm1611, %v1581, 0
        %1848 = vmatprep.subr.bf16.mxu0 0
        %1849 = vmatpush1.bf16.xpose.msra.mxu0 %v1846
        %1850 = vmatprep.subr.bf16.mxu0 0
        %1851 = vmatpush1.bf16.xpose.msra.mxu0 0
        %1852 = vmatprep.subr.bf16.mxu0 0
        %1853 = vmatpush1.bf16.xpose.msra.mxu0 0
        %1854 = vmatprep.subr.bf16.mxu0 0
        %1855 = vmatpush1.bf16.xpose.msra.mxu0 0
        %1856 = vmatprep.subr.bf16.mxu0 0
        %1857 = vmatpush1.bf16.xpose.msra.mxu0 0
        %1858 = vmatprep.subr.bf16.mxu0 0
        %1859 = vmatpush1.bf16.xpose.msra.mxu0 0
        %1860 = vmatprep.subr.bf16.mxu0 0
        %1861 = vmatpush1.bf16.xpose.msra.mxu0 0
        %1862 = vmatprep.subr.bf16.mxu0 0
        %1863 = vmatpush1.bf16.xpose.msra.mxu0 0
        %1864 = vmatprep.subr.bf16.mxu0 0
        %1865 = vmatpush1.bf16.xpose.msra.mxu0 0
        %1866 = vmatprep.subr.bf16.mxu0 0
        %1867 = vmatpush1.bf16.xpose.msra.mxu0 0
        %1868 = vmatprep.subr.bf16.mxu0 0
        %1869 = vmatpush1.bf16.xpose.msra.mxu0 0
        %1870 = vmatprep.subr.bf16.mxu0 0
        %1871 = vmatpush1.bf16.xpose.msra.mxu0 0
        %1872 = vmatprep.subr.bf16.mxu0 0
        %1873 = vmatpush1.bf16.xpose.msra.mxu0 0
        %1874 = vmatprep.subr.bf16.mxu0 0
        %1875 = vmatpush1.bf16.xpose.msra.mxu0 0
        %1876 = vmatprep.subr.bf16.mxu0 0
        %1877 = vmatpush1.bf16.xpose.msra.mxu0 0
        %1878 = vmatprep.subr.bf16.mxu0 0
        %1879 = vmatpush1.bf16.xpose.msra.mxu0 0
        %1880 = vmatprep.mubr.bf16.mxu0 0
        %1881 = vmatmul.mubr.bf16.gmra.mrb[0].mxu0 %v1843
        %v1882 = vpop.f32.mrb[0].mxu0
        %v1883 = vadd.f32 %v1610, %v1882
        %v1884 = vpop.f32.mrb[0].mxu0
        %v1885 = vpop.f32.mrb[0].mxu0
        %v1886 = vpop.f32.mrb[0].mxu0
        %1887 = vdwg.mxu0
        %v1889 = vsel %vm1611, %v1566, 0
        %v1892 = vsel %vm1611, %v1582, 0
        %1894 = vmatprep.subr.bf16.mxu0 0
        %1895 = vmatpush1.bf16.xpose.msra.mxu0 %v1892
        %1896 = vmatprep.subr.bf16.mxu0 0
        %1897 = vmatpush1.bf16.xpose.msra.mxu0 0
        %1898 = vmatprep.subr.bf16.mxu0 0
        %1899 = vmatpush1.bf16.xpose.msra.mxu0 0
        %1900 = vmatprep.subr.bf16.mxu0 0
        %1901 = vmatpush1.bf16.xpose.msra.mxu0 0
        %1902 = vmatprep.subr.bf16.mxu0 0
        %1903 = vmatpush1.bf16.xpose.msra.mxu0 0
        %1904 = vmatprep.subr.bf16.mxu0 0
        %1905 = vmatpush1.bf16.xpose.msra.mxu0 0
        %1906 = vmatprep.subr.bf16.mxu0 0
        %1907 = vmatpush1.bf16.xpose.msra.mxu0 0
        %1908 = vmatprep.subr.bf16.mxu0 0
        %1909 = vmatpush1.bf16.xpose.msra.mxu0 0
        %1910 = vmatprep.subr.bf16.mxu0 0
        %1911 = vmatpush1.bf16.xpose.msra.mxu0 0
        %1912 = vmatprep.subr.bf16.mxu0 0
        %1913 = vmatpush1.bf16.xpose.msra.mxu0 0
        %1914 = vmatprep.subr.bf16.mxu0 0
        %1915 = vmatpush1.bf16.xpose.msra.mxu0 0
        %1916 = vmatprep.subr.bf16.mxu0 0
        %1917 = vmatpush1.bf16.xpose.msra.mxu0 0
        %1918 = vmatprep.subr.bf16.mxu0 0
        %1919 = vmatpush1.bf16.xpose.msra.mxu0 0
        %1920 = vmatprep.subr.bf16.mxu0 0
        %1921 = vmatpush1.bf16.xpose.msra.mxu0 0
        %1922 = vmatprep.subr.bf16.mxu0 0
        %1923 = vmatpush1.bf16.xpose.msra.mxu0 0
        %1924 = vmatprep.subr.bf16.mxu0 0
        %1925 = vmatpush1.bf16.xpose.msra.mxu0 0
        %1926 = vmatprep.mubr.bf16.mxu0 0
        %1927 = vmatmul.mubr.bf16.gmra.mrb[0].mxu0 %v1889
        %v1928 = vpop.f32.mrb[0].mxu0
        %v1929 = vadd.f32 %v1610, %v1928
        %v1930 = vpop.f32.mrb[0].mxu0
        %v1931 = vpop.f32.mrb[0].mxu0
        %v1932 = vpop.f32.mrb[0].mxu0
        %1933 = vdwg.mxu0
        %v1935 = vsel %vm1611, %v1567, 0
        %v1938 = vsel %vm1611, %v1583, 0
        %1940 = vmatprep.subr.bf16.mxu0 0
        %1941 = vmatpush1.bf16.xpose.msra.mxu0 %v1938
        %1942 = vmatprep.subr.bf16.mxu0 0
        %1943 = vmatpush1.bf16.xpose.msra.mxu0 0
        %1944 = vmatprep.subr.bf16.mxu0 0
        %1945 = vmatpush1.bf16.xpose.msra.mxu0 0
        %1946 = vmatprep.subr.bf16.mxu0 0
        %1947 = vmatpush1.bf16.xpose.msra.mxu0 0
        %1948 = vmatprep.subr.bf16.mxu0 0
        %1949 = vmatpush1.bf16.xpose.msra.mxu0 0
        %1950 = vmatprep.subr.bf16.mxu0 0
        %1951 = vmatpush1.bf16.xpose.msra.mxu0 0
        %1952 = vmatprep.subr.bf16.mxu0 0
        %1953 = vmatpush1.bf16.xpose.msra.mxu0 0
        %1954 = vmatprep.subr.bf16.mxu0 0
        %1955 = vmatpush1.bf16.xpose.msra.mxu0 0
        %1956 = vmatprep.subr.bf16.mxu0 0
        %1957 = vmatpush1.bf16.xpose.msra.mxu0 0
        %1958 = vmatprep.subr.bf16.mxu0 0
        %1959 = vmatpush1.bf16.xpose.msra.mxu0 0
        %1960 = vmatprep.subr.bf16.mxu0 0
        %1961 = vmatpush1.bf16.xpose.msra.mxu0 0
        %1962 = vmatprep.subr.bf16.mxu0 0
        %1963 = vmatpush1.bf16.xpose.msra.mxu0 0
        %1964 = vmatprep.subr.bf16.mxu0 0
        %1965 = vmatpush1.bf16.xpose.msra.mxu0 0
        %1966 = vmatprep.subr.bf16.mxu0 0
        %1967 = vmatpush1.bf16.xpose.msra.mxu0 0
        %1968 = vmatprep.subr.bf16.mxu0 0
        %1969 = vmatpush1.bf16.xpose.msra.mxu0 0
        %1970 = vmatprep.subr.bf16.mxu0 0
        %1971 = vmatpush1.bf16.xpose.msra.mxu0 0
        %1972 = vmatprep.mubr.bf16.mxu0 0
        %1973 = vmatmul.mubr.bf16.gmra.mrb[0].mxu0 %v1935
        %v1974 = vpop.f32.mrb[0].mxu0
        %v1975 = vadd.f32 %v1610, %v1974
        %v1976 = vpop.f32.mrb[0].mxu0
        %v1977 = vpop.f32.mrb[0].mxu0
        %v1978 = vpop.f32.mrb[0].mxu0
        %1979 = vdwg.mxu0
        %v1980 = vsel %vm1611, %v1653, -inf
        %1981 = vmax.xlane.f32.xlu0 %v1980
        %v1982 = vpop.xlane.xlu0 %1981
        %v1983 = vsel %vm1611, %v1699, -inf
        %1984 = vmax.xlane.f32.xlu0 %v1983
        %v1985 = vpop.xlane.xlu0 %1984
        %v1986 = vsel %vm1611, %v1745, -inf
        %1987 = vmax.xlane.f32.xlu0 %v1986
        %v1988 = vpop.xlane.xlu0 %1987
        %v1989 = vsel %vm1611, %v1791, -inf
        %1990 = vmax.xlane.f32.xlu0 %v1989
        %v1991 = vpop.xlane.xlu0 %1990
        %v1992 = vsel %vm1611, %v1837, -inf
        %1993 = vmax.xlane.f32.xlu0 %v1992
        %v1994 = vpop.xlane.xlu0 %1993
        %v1995 = vsel %vm1611, %v1883, -inf
        %1996 = vmax.xlane.f32.xlu0 %v1995
        %v1997 = vpop.xlane.xlu0 %1996
        %v1998 = vsel %vm1611, %v1929, -inf
        %1999 = vmax.xlane.f32.xlu0 %v1998
        %v2000 = vpop.xlane.xlu0 %1999
        %v2001 = vsel %vm1611, %v1975, -inf
        %2002 = vmax.xlane.f32.xlu0 %v2001
        %v2003 = vpop.xlane.xlu0 %2002
        %v2004 = vsub.f32 %v1653, %v1982
        %v2005 = vsub.f32 %v1699, %v1985
        %v2006 = vsub.f32 %v1745, %v1988
        %v2007 = vsub.f32 %v1791, %v1991
        %v2008 = vsub.f32 %v1837, %v1994
        %v2009 = vsub.f32 %v1883, %v1997
        %v2010 = vsub.f32 %v1929, %v2000
        %v2011 = vsub.f32 %v1975, %v2003
        %v2012 = vmul.f32 %v2004, 1.442695
        %v2013 = vpow.pop %v2012
        %v2014 = vmul.f32 %v2005, 1.442695
        %v2015 = vpow.pop %v2014
        %v2016 = vmul.f32 %v2006, 1.442695
        %v2017 = vpow.pop %v2016
        %v2018 = vmul.f32 %v2007, 1.442695
        %v2019 = vpow.pop %v2018
        %v2020 = vmul.f32 %v2008, 1.442695
        %v2021 = vpow.pop %v2020
        %v2022 = vmul.f32 %v2009, 1.442695
        %v2023 = vpow.pop %v2022
        %v2024 = vmul.f32 %v2010, 1.442695
        %v2025 = vpow.pop %v2024
        %v2026 = vmul.f32 %v2011, 1.442695
        %v2027 = vpow.pop %v2026
        %v2028 = vsel %vm1611, %v2013, 0.0
        %2029 = vadd.xlane.f32.xlu0 %v2028
        %v2030 = vpop.xlane.xlu0 %2029
        %v2031 = vsel %vm1611, %v2015, 0.0
        %2032 = vadd.xlane.f32.xlu0 %v2031
        %v2033 = vpop.xlane.xlu0 %2032
        %v2034 = vsel %vm1611, %v2017, 0.0
        %2035 = vadd.xlane.f32.xlu0 %v2034
        %v2036 = vpop.xlane.xlu0 %2035
        %v2037 = vsel %vm1611, %v2019, 0.0
        %2038 = vadd.xlane.f32.xlu0 %v2037
        %v2039 = vpop.xlane.xlu0 %2038
        %v2040 = vsel %vm1611, %v2021, 0.0
        %2041 = vadd.xlane.f32.xlu0 %v2040
        %v2042 = vpop.xlane.xlu0 %2041
        %v2043 = vsel %vm1611, %v2023, 0.0
        %2044 = vadd.xlane.f32.xlu0 %v2043
        %v2045 = vpop.xlane.xlu0 %2044
        %v2046 = vsel %vm1611, %v2025, 0.0
        %2047 = vadd.xlane.f32.xlu0 %v2046
        %v2048 = vpop.xlane.xlu0 %2047
        %v2049 = vsel %vm1611, %v2027, 0.0
        %2050 = vadd.xlane.f32.xlu0 %v2049
        %v2051 = vpop.xlane.xlu0 %2050
        %v2052 = vrcp.pop %v2030
        %v2053 = vrcp.pop %v2033
        %v2054 = vrcp.pop %v2036
        %v2055 = vrcp.pop %v2039
        %v2056 = vrcp.pop %v2042
        %v2057 = vrcp.pop %v2045
        %v2058 = vrcp.pop %v2048
        %v2059 = vrcp.pop %v2051
        %v2060 = vpack.c.bf16 %v2013, %v2013
        %v2061 = vpack.c.bf16 %v2015, %v2015
        %v2062 = vpack.c.bf16 %v2017, %v2017
        %v2063 = vpack.c.bf16 %v2019, %v2019
        %v2064 = vpack.c.bf16 %v2021, %v2021
        %v2065 = vpack.c.bf16 %v2023, %v2023
        %v2066 = vpack.c.bf16 %v2025, %v2025
        %v2067 = vpack.c.bf16 %v2027, %v2027
        %v2069 = vsel %vm1611, %v2060, 0
        %vm2071 = vcmask 1043456
        %v2073 = vsel %vm2071, %v1592, 0
        %2075 = vmatprep.subr.bf16.mxu0 0
        %2076 = vmatpush1.bf16.msra.mxu0 %v2073
        %2077 = vmatprep.subr.bf16.mxu0 0
        %2078 = vmatpush1.bf16.msra.mxu0 0
        %2079 = vmatprep.subr.bf16.mxu0 0
        %2080 = vmatpush1.bf16.msra.mxu0 0
        %2081 = vmatprep.subr.bf16.mxu0 0
        %2082 = vmatpush1.bf16.msra.mxu0 0
        %2083 = vmatprep.subr.bf16.mxu0 0
        %2084 = vmatpush1.bf16.msra.mxu0 0
        %2085 = vmatprep.subr.bf16.mxu0 0
        %2086 = vmatpush1.bf16.msra.mxu0 0
        %2087 = vmatprep.subr.bf16.mxu0 0
        %2088 = vmatpush1.bf16.msra.mxu0 0
        %2089 = vmatprep.subr.bf16.mxu0 0
        %2090 = vmatpush1.bf16.msra.mxu0 0
        %2091 = vmatprep.subr.bf16.mxu0 0
        %2092 = vmatpush1.bf16.msra.mxu0 0
        %2093 = vmatprep.subr.bf16.mxu0 0
        %2094 = vmatpush1.bf16.msra.mxu0 0
        %2095 = vmatprep.subr.bf16.mxu0 0
        %2096 = vmatpush1.bf16.msra.mxu0 0
        %2097 = vmatprep.subr.bf16.mxu0 0
        %2098 = vmatpush1.bf16.msra.mxu0 0
        %2099 = vmatprep.subr.bf16.mxu0 0
        %2100 = vmatpush1.bf16.msra.mxu0 0
        %2101 = vmatprep.subr.bf16.mxu0 0
        %2102 = vmatpush1.bf16.msra.mxu0 0
        %2103 = vmatprep.subr.bf16.mxu0 0
        %2104 = vmatpush1.bf16.msra.mxu0 0
        %2105 = vmatprep.subr.bf16.mxu0 0
        %2106 = vmatpush1.bf16.msra.mxu0 0
        %2107 = vmatprep.mubr.bf16.mxu0 0
        %2108 = vmatmul.mubr.bf16.gmra.mrb[0].mxu0 %v2069
        %v2109 = vpop.f32.mrb[0].mxu0
        %v2110 = vadd.f32 0.0, %v2109
        %v2111 = vpop.f32.mrb[0].mxu0
        %v2112 = vpop.f32.mrb[0].mxu0
        %v2113 = vpop.f32.mrb[0].mxu0
        %2114 = vdwg.mxu0
        %v2116 = vsel %vm1611, %v2061, 0
        %v2119 = vsel %vm2071, %v1593, 0
        %2121 = vmatprep.subr.bf16.mxu0 0
        %2122 = vmatpush1.bf16.msra.mxu0 %v2119
        %2123 = vmatprep.subr.bf16.mxu0 0
        %2124 = vmatpush1.bf16.msra.mxu0 0
        %2125 = vmatprep.subr.bf16.mxu0 0
        %2126 = vmatpush1.bf16.msra.mxu0 0
        %2127 = vmatprep.subr.bf16.mxu0 0
        %2128 = vmatpush1.bf16.msra.mxu0 0
        %2129 = vmatprep.subr.bf16.mxu0 0
        %2130 = vmatpush1.bf16.msra.mxu0 0
        %2131 = vmatprep.subr.bf16.mxu0 0
        %2132 = vmatpush1.bf16.msra.mxu0 0
        %2133 = vmatprep.subr.bf16.mxu0 0
        %2134 = vmatpush1.bf16.msra.mxu0 0
        %2135 = vmatprep.subr.bf16.mxu0 0
        %2136 = vmatpush1.bf16.msra.mxu0 0
        %2137 = vmatprep.subr.bf16.mxu0 0
        %2138 = vmatpush1.bf16.msra.mxu0 0
        %2139 = vmatprep.subr.bf16.mxu0 0
        %2140 = vmatpush1.bf16.msra.mxu0 0
        %2141 = vmatprep.subr.bf16.mxu0 0
        %2142 = vmatpush1.bf16.msra.mxu0 0
        %2143 = vmatprep.subr.bf16.mxu0 0
        %2144 = vmatpush1.bf16.msra.mxu0 0
        %2145 = vmatprep.subr.bf16.mxu0 0
        %2146 = vmatpush1.bf16.msra.mxu0 0
        %2147 = vmatprep.subr.bf16.mxu0 0
        %2148 = vmatpush1.bf16.msra.mxu0 0
        %2149 = vmatprep.subr.bf16.mxu0 0
        %2150 = vmatpush1.bf16.msra.mxu0 0
        %2151 = vmatprep.subr.bf16.mxu0 0
        %2152 = vmatpush1.bf16.msra.mxu0 0
        %2153 = vmatprep.mubr.bf16.mxu0 0
        %2154 = vmatmul.mubr.bf16.gmra.mrb[0].mxu0 %v2116
        %v2155 = vpop.f32.mrb[0].mxu0
        %v2156 = vadd.f32 0.0, %v2155
        %v2157 = vpop.f32.mrb[0].mxu0
        %v2158 = vpop.f32.mrb[0].mxu0
        %v2159 = vpop.f32.mrb[0].mxu0
        %2160 = vdwg.mxu0
        %v2162 = vsel %vm1611, %v2062, 0
        %v2165 = vsel %vm2071, %v1594, 0
        %2167 = vmatprep.subr.bf16.mxu0 0
        %2168 = vmatpush1.bf16.msra.mxu0 %v2165
        %2169 = vmatprep.subr.bf16.mxu0 0
        %2170 = vmatpush1.bf16.msra.mxu0 0
        %2171 = vmatprep.subr.bf16.mxu0 0
        %2172 = vmatpush1.bf16.msra.mxu0 0
        %2173 = vmatprep.subr.bf16.mxu0 0
        %2174 = vmatpush1.bf16.msra.mxu0 0
        %2175 = vmatprep.subr.bf16.mxu0 0
        %2176 = vmatpush1.bf16.msra.mxu0 0
        %2177 = vmatprep.subr.bf16.mxu0 0
        %2178 = vmatpush1.bf16.msra.mxu0 0
        %2179 = vmatprep.subr.bf16.mxu0 0
        %2180 = vmatpush1.bf16.msra.mxu0 0
        %2181 = vmatprep.subr.bf16.mxu0 0
        %2182 = vmatpush1.bf16.msra.mxu0 0
        %2183 = vmatprep.subr.bf16.mxu0 0
        %2184 = vmatpush1.bf16.msra.mxu0 0
        %2185 = vmatprep.subr.bf16.mxu0 0
        %2186 = vmatpush1.bf16.msra.mxu0 0
        %2187 = vmatprep.subr.bf16.mxu0 0
        %2188 = vmatpush1.bf16.msra.mxu0 0
        %2189 = vmatprep.subr.bf16.mxu0 0
        %2190 = vmatpush1.bf16.msra.mxu0 0
        %2191 = vmatprep.subr.bf16.mxu0 0
        %2192 = vmatpush1.bf16.msra.mxu0 0
        %2193 = vmatprep.subr.bf16.mxu0 0
        %2194 = vmatpush1.bf16.msra.mxu0 0
        %2195 = vmatprep.subr.bf16.mxu0 0
        %2196 = vmatpush1.bf16.msra.mxu0 0
        %2197 = vmatprep.subr.bf16.mxu0 0
        %2198 = vmatpush1.bf16.msra.mxu0 0
        %2199 = vmatprep.mubr.bf16.mxu0 0
        %2200 = vmatmul.mubr.bf16.gmra.mrb[0].mxu0 %v2162
        %v2201 = vpop.f32.mrb[0].mxu0
        %v2202 = vadd.f32 0.0, %v2201
        %v2203 = vpop.f32.mrb[0].mxu0
        %v2204 = vpop.f32.mrb[0].mxu0
        %v2205 = vpop.f32.mrb[0].mxu0
        %2206 = vdwg.mxu0
        %v2208 = vsel %vm1611, %v2063, 0
        %v2211 = vsel %vm2071, %v1595, 0
        %2213 = vmatprep.subr.bf16.mxu0 0
        %2214 = vmatpush1.bf16.msra.mxu0 %v2211
        %2215 = vmatprep.subr.bf16.mxu0 0
        %2216 = vmatpush1.bf16.msra.mxu0 0
        %2217 = vmatprep.subr.bf16.mxu0 0
        %2218 = vmatpush1.bf16.msra.mxu0 0
        %2219 = vmatprep.subr.bf16.mxu0 0
        %2220 = vmatpush1.bf16.msra.mxu0 0
        %2221 = vmatprep.subr.bf16.mxu0 0
        %2222 = vmatpush1.bf16.msra.mxu0 0
        %2223 = vmatprep.subr.bf16.mxu0 0
        %2224 = vmatpush1.bf16.msra.mxu0 0
        %2225 = vmatprep.subr.bf16.mxu0 0
        %2226 = vmatpush1.bf16.msra.mxu0 0
        %2227 = vmatprep.subr.bf16.mxu0 0
        %2228 = vmatpush1.bf16.msra.mxu0 0
        %2229 = vmatprep.subr.bf16.mxu0 0
        %2230 = vmatpush1.bf16.msra.mxu0 0
        %2231 = vmatprep.subr.bf16.mxu0 0
        %2232 = vmatpush1.bf16.msra.mxu0 0
        %2233 = vmatprep.subr.bf16.mxu0 0
        %2234 = vmatpush1.bf16.msra.mxu0 0
        %2235 = vmatprep.subr.bf16.mxu0 0
        %2236 = vmatpush1.bf16.msra.mxu0 0
        %2237 = vmatprep.subr.bf16.mxu0 0
        %2238 = vmatpush1.bf16.msra.mxu0 0
        %2239 = vmatprep.subr.bf16.mxu0 0
        %2240 = vmatpush1.bf16.msra.mxu0 0
        %2241 = vmatprep.subr.bf16.mxu0 0
        %2242 = vmatpush1.bf16.msra.mxu0 0
        %2243 = vmatprep.subr.bf16.mxu0 0
        %2244 = vmatpush1.bf16.msra.mxu0 0
        %2245 = vmatprep.mubr.bf16.mxu0 0
        %2246 = vmatmul.mubr.bf16.gmra.mrb[0].mxu0 %v2208
        %v2247 = vpop.f32.mrb[0].mxu0
        %v2248 = vadd.f32 0.0, %v2247
        %v2249 = vpop.f32.mrb[0].mxu0
        %v2250 = vpop.f32.mrb[0].mxu0
        %v2251 = vpop.f32.mrb[0].mxu0
        %2252 = vdwg.mxu0
        %v2254 = vsel %vm1611, %v2064, 0
        %v2257 = vsel %vm2071, %v1596, 0
        %2259 = vmatprep.subr.bf16.mxu0 0
        %2260 = vmatpush1.bf16.msra.mxu0 %v2257
        %2261 = vmatprep.subr.bf16.mxu0 0
        %2262 = vmatpush1.bf16.msra.mxu0 0
        %2263 = vmatprep.subr.bf16.mxu0 0
        %2264 = vmatpush1.bf16.msra.mxu0 0
        %2265 = vmatprep.subr.bf16.mxu0 0
        %2266 = vmatpush1.bf16.msra.mxu0 0
        %2267 = vmatprep.subr.bf16.mxu0 0
        %2268 = vmatpush1.bf16.msra.mxu0 0
        %2269 = vmatprep.subr.bf16.mxu0 0
        %2270 = vmatpush1.bf16.msra.mxu0 0
        %2271 = vmatprep.subr.bf16.mxu0 0
        %2272 = vmatpush1.bf16.msra.mxu0 0
        %2273 = vmatprep.subr.bf16.mxu0 0
        %2274 = vmatpush1.bf16.msra.mxu0 0
        %2275 = vmatprep.subr.bf16.mxu0 0
        %2276 = vmatpush1.bf16.msra.mxu0 0
        %2277 = vmatprep.subr.bf16.mxu0 0
        %2278 = vmatpush1.bf16.msra.mxu0 0
        %2279 = vmatprep.subr.bf16.mxu0 0
        %2280 = vmatpush1.bf16.msra.mxu0 0
        %2281 = vmatprep.subr.bf16.mxu0 0
        %2282 = vmatpush1.bf16.msra.mxu0 0
        %2283 = vmatprep.subr.bf16.mxu0 0
        %2284 = vmatpush1.bf16.msra.mxu0 0
        %2285 = vmatprep.subr.bf16.mxu0 0
        %2286 = vmatpush1.bf16.msra.mxu0 0
        %2287 = vmatprep.subr.bf16.mxu0 0
        %2288 = vmatpush1.bf16.msra.mxu0 0
        %2289 = vmatprep.subr.bf16.mxu0 0
        %2290 = vmatpush1.bf16.msra.mxu0 0
        %2291 = vmatprep.mubr.bf16.mxu0 0
        %2292 = vmatmul.mubr.bf16.gmra.mrb[0].mxu0 %v2254
        %v2293 = vpop.f32.mrb[0].mxu0
        %v2294 = vadd.f32 0.0, %v2293
        %v2295 = vpop.f32.mrb[0].mxu0
        %v2296 = vpop.f32.mrb[0].mxu0
        %v2297 = vpop.f32.mrb[0].mxu0
        %2298 = vdwg.mxu0
        %v2300 = vsel %vm1611, %v2065, 0
        %v2303 = vsel %vm2071, %v1597, 0
        %2305 = vmatprep.subr.bf16.mxu0 0
        %2306 = vmatpush1.bf16.msra.mxu0 %v2303
        %2307 = vmatprep.subr.bf16.mxu0 0
        %2308 = vmatpush1.bf16.msra.mxu0 0
        %2309 = vmatprep.subr.bf16.mxu0 0
        %2310 = vmatpush1.bf16.msra.mxu0 0
        %2311 = vmatprep.subr.bf16.mxu0 0
        %2312 = vmatpush1.bf16.msra.mxu0 0
        %2313 = vmatprep.subr.bf16.mxu0 0
        %2314 = vmatpush1.bf16.msra.mxu0 0
        %2315 = vmatprep.subr.bf16.mxu0 0
        %2316 = vmatpush1.bf16.msra.mxu0 0
        %2317 = vmatprep.subr.bf16.mxu0 0
        %2318 = vmatpush1.bf16.msra.mxu0 0
        %2319 = vmatprep.subr.bf16.mxu0 0
        %2320 = vmatpush1.bf16.msra.mxu0 0
        %2321 = vmatprep.subr.bf16.mxu0 0
        %2322 = vmatpush1.bf16.msra.mxu0 0
        %2323 = vmatprep.subr.bf16.mxu0 0
        %2324 = vmatpush1.bf16.msra.mxu0 0
        %2325 = vmatprep.subr.bf16.mxu0 0
        %2326 = vmatpush1.bf16.msra.mxu0 0
        %2327 = vmatprep.subr.bf16.mxu0 0
        %2328 = vmatpush1.bf16.msra.mxu0 0
        %2329 = vmatprep.subr.bf16.mxu0 0
        %2330 = vmatpush1.bf16.msra.mxu0 0
        %2331 = vmatprep.subr.bf16.mxu0 0
        %2332 = vmatpush1.bf16.msra.mxu0 0
        %2333 = vmatprep.subr.bf16.mxu0 0
        %2334 = vmatpush1.bf16.msra.mxu0 0
        %2335 = vmatprep.subr.bf16.mxu0 0
        %2336 = vmatpush1.bf16.msra.mxu0 0
        %2337 = vmatprep.mubr.bf16.mxu0 0
        %2338 = vmatmul.mubr.bf16.gmra.mrb[0].mxu0 %v2300
        %v2339 = vpop.f32.mrb[0].mxu0
        %v2340 = vadd.f32 0.0, %v2339
        %v2341 = vpop.f32.mrb[0].mxu0
        %v2342 = vpop.f32.mrb[0].mxu0
        %v2343 = vpop.f32.mrb[0].mxu0
        %2344 = vdwg.mxu0
        %v2346 = vsel %vm1611, %v2066, 0
        %v2349 = vsel %vm2071, %v1598, 0
        %2351 = vmatprep.subr.bf16.mxu0 0
        %2352 = vmatpush1.bf16.msra.mxu0 %v2349
        %2353 = vmatprep.subr.bf16.mxu0 0
        %2354 = vmatpush1.bf16.msra.mxu0 0
        %2355 = vmatprep.subr.bf16.mxu0 0
        %2356 = vmatpush1.bf16.msra.mxu0 0
        %2357 = vmatprep.subr.bf16.mxu0 0
        %2358 = vmatpush1.bf16.msra.mxu0 0
        %2359 = vmatprep.subr.bf16.mxu0 0
        %2360 = vmatpush1.bf16.msra.mxu0 0
        %2361 = vmatprep.subr.bf16.mxu0 0
        %2362 = vmatpush1.bf16.msra.mxu0 0
        %2363 = vmatprep.subr.bf16.mxu0 0
        %2364 = vmatpush1.bf16.msra.mxu0 0
        %2365 = vmatprep.subr.bf16.mxu0 0
        %2366 = vmatpush1.bf16.msra.mxu0 0
        %2367 = vmatprep.subr.bf16.mxu0 0
        %2368 = vmatpush1.bf16.msra.mxu0 0
        %2369 = vmatprep.subr.bf16.mxu0 0
        %2370 = vmatpush1.bf16.msra.mxu0 0
        %2371 = vmatprep.subr.bf16.mxu0 0
        %2372 = vmatpush1.bf16.msra.mxu0 0
        %2373 = vmatprep.subr.bf16.mxu0 0
        %2374 = vmatpush1.bf16.msra.mxu0 0
        %2375 = vmatprep.subr.bf16.mxu0 0
        %2376 = vmatpush1.bf16.msra.mxu0 0
        %2377 = vmatprep.subr.bf16.mxu0 0
        %2378 = vmatpush1.bf16.msra.mxu0 0
        %2379 = vmatprep.subr.bf16.mxu0 0
        %2380 = vmatpush1.bf16.msra.mxu0 0
        %2381 = vmatprep.subr.bf16.mxu0 0
        %2382 = vmatpush1.bf16.msra.mxu0 0
        %2383 = vmatprep.mubr.bf16.mxu0 0
        %2384 = vmatmul.mubr.bf16.gmra.mrb[0].mxu0 %v2346
        %v2385 = vpop.f32.mrb[0].mxu0
        %v2386 = vadd.f32 0.0, %v2385
        %v2387 = vpop.f32.mrb[0].mxu0
        %v2388 = vpop.f32.mrb[0].mxu0
        %v2389 = vpop.f32.mrb[0].mxu0
        %2390 = vdwg.mxu0
        %v2392 = vsel %vm1611, %v2067, 0
        %v2395 = vsel %vm2071, %v1599, 0
        %2397 = vmatprep.subr.bf16.mxu0 0
        %2398 = vmatpush1.bf16.msra.mxu0 %v2395
        %2399 = vmatprep.subr.bf16.mxu0 0
        %2400 = vmatpush1.bf16.msra.mxu0 0
        %2401 = vmatprep.subr.bf16.mxu0 0
        %2402 = vmatpush1.bf16.msra.mxu0 0
        %2403 = vmatprep.subr.bf16.mxu0 0
        %2404 = vmatpush1.bf16.msra.mxu0 0
        %2405 = vmatprep.subr.bf16.mxu0 0
        %2406 = vmatpush1.bf16.msra.mxu0 0
        %2407 = vmatprep.subr.bf16.mxu0 0
        %2408 = vmatpush1.bf16.msra.mxu0 0
        %2409 = vmatprep.subr.bf16.mxu0 0
        %2410 = vmatpush1.bf16.msra.mxu0 0
        %2411 = vmatprep.subr.bf16.mxu0 0
        %2412 = vmatpush1.bf16.msra.mxu0 0
        %2413 = vmatprep.subr.bf16.mxu0 0
        %2414 = vmatpush1.bf16.msra.mxu0 0
        %2415 = vmatprep.subr.bf16.mxu0 0
        %2416 = vmatpush1.bf16.msra.mxu0 0
        %2417 = vmatprep.subr.bf16.mxu0 0
        %2418 = vmatpush1.bf16.msra.mxu0 0
        %2419 = vmatprep.subr.bf16.mxu0 0
        %2420 = vmatpush1.bf16.msra.mxu0 0
        %2421 = vmatprep.subr.bf16.mxu0 0
        %2422 = vmatpush1.bf16.msra.mxu0 0
        %2423 = vmatprep.subr.bf16.mxu0 0
        %2424 = vmatpush1.bf16.msra.mxu0 0
        %2425 = vmatprep.subr.bf16.mxu0 0
        %2426 = vmatpush1.bf16.msra.mxu0 0
        %2427 = vmatprep.subr.bf16.mxu0 0
        %2428 = vmatpush1.bf16.msra.mxu0 0
        %2429 = vmatprep.mubr.bf16.mxu0 0
        %2430 = vmatmul.mubr.bf16.gmra.mrb[0].mxu0 %v2392
        %v2431 = vpop.f32.mrb[0].mxu0
        %v2432 = vadd.f32 0.0, %v2431
        %v2433 = vpop.f32.mrb[0].mxu0
        %v2434 = vpop.f32.mrb[0].mxu0
        %v2435 = vpop.f32.mrb[0].mxu0
        %2436 = vdwg.mxu0
        %v2437 = vmul.f32 %v2110, %v2052
        %v2438 = vmul.f32 %v2156, %v2053
        %v2439 = vmul.f32 %v2202, %v2054
        %v2440 = vmul.f32 %v2248, %v2055
        %v2441 = vmul.f32 %v2294, %v2056
        %v2442 = vmul.f32 %v2340, %v2057
        %v2443 = vmul.f32 %v2386, %v2058
        %v2444 = vmul.f32 %v2432, %v2059
        %v2445 = vpack.c.bf16 %v2437, %v2437
        %v2446 = vpack.c.bf16 %v2438, %v2438
        %v2447 = vpack.c.bf16 %v2439, %v2439
        %v2448 = vpack.c.bf16 %v2440, %v2440
        %v2449 = vpack.c.bf16 %v2441, %v2441
        %v2450 = vpack.c.bf16 %v2442, %v2442
        %v2451 = vpack.c.bf16 %v2443, %v2443
        %v2452 = vpack.c.bf16 %v2444, %v2444
        %v2455 = vpack.i.b16 %v2447, %v2445
        %v2456 = vshrl.u32 %v2445, 16
        %v2457 = vshrl.u32 %v2447, 16
        %v2458 = vpack.i.b16 %v2457, %v2456
        %v2461 = vpack.i.b16 %v2451, %v2449
        %v2462 = vshrl.u32 %v2449, 16
        %v2463 = vshrl.u32 %v2451, 16
        %v2464 = vpack.i.b16 %v2463, %v2462
        %v2467 = vpack.i.b16 %v2448, %v2446
        %v2468 = vshrl.u32 %v2446, 16
        %v2469 = vshrl.u32 %v2448, 16
        %v2470 = vpack.i.b16 %v2469, %v2468
        %v2473 = vpack.i.b16 %v2452, %v2450
        %v2474 = vshrl.u32 %v2450, 16
        %v2475 = vshrl.u32 %v2452, 16
        %v2476 = vpack.i.b16 %v2475, %v2474
        %v2479 = vunpack.c.l.s4 1983009808
        %v2480 = vunpack.c.0.s8 %v2479
        %v2481 = vlaneseq
        %v2482 = vshrl.u32 %v2481, 7
        %v2483 = vsub.s32 %v2480, %v2482
        %v2484 = vrot.slane %v2455, %v2483
        %v2487 = vunpack.c.l.s4 1983009808
        %v2488 = vunpack.c.0.s8 %v2487
        %v2489 = vlaneseq
        %v2490 = vshrl.u32 %v2489, 7
        %v2491 = vsub.s32 %v2488, %v2490
        %v2492 = vrot.slane %v2461, %v2491
        %v2493 = vcombine.low %v2484, %v2492
        %v2494 = vcombine.high %v2484, %v2492
        %v2496 = vunpack.c.l.s4 1934713408
        %v2497 = vunpack.c.0.s8 %v2496
        %v2498 = vlaneseq
        %v2499 = vshrl.u32 %v2498, 7
        %v2500 = vsub.s32 %v2497, %v2499
        %v2501 = vrot.slane %v2493, %v2500
        %v2503 = vunpack.c.l.s4 1934713408
        %v2504 = vunpack.c.0.s8 %v2503
        %v2505 = vlaneseq
        %v2506 = vshrl.u32 %v2505, 7
        %v2507 = vsub.s32 %v2504, %v2506
        %v2508 = vrot.slane %v2494, %v2507
        %v2509 = vcombine.high %v2501, 0
        %v2510 = vcombine.high %v2508, 0
        %v2513 = vunpack.c.l.s4 1983009808
        %v2514 = vunpack.c.0.s8 %v2513
        %v2515 = vlaneseq
        %v2516 = vshrl.u32 %v2515, 7
        %v2517 = vsub.s32 %v2514, %v2516
        %v2518 = vrot.slane %v2458, %v2517
        %v2521 = vunpack.c.l.s4 1983009808
        %v2522 = vunpack.c.0.s8 %v2521
        %v2523 = vlaneseq
        %v2524 = vshrl.u32 %v2523, 7
        %v2525 = vsub.s32 %v2522, %v2524
        %v2526 = vrot.slane %v2464, %v2525
        %v2527 = vcombine.low %v2518, %v2526
        %v2528 = vcombine.high %v2518, %v2526
        %v2530 = vunpack.c.l.s4 1934713408
        %v2531 = vunpack.c.0.s8 %v2530
        %v2532 = vlaneseq
        %v2533 = vshrl.u32 %v2532, 7
        %v2534 = vsub.s32 %v2531, %v2533
        %v2535 = vrot.slane %v2527, %v2534
        %v2537 = vunpack.c.l.s4 1934713408
        %v2538 = vunpack.c.0.s8 %v2537
        %v2539 = vlaneseq
        %v2540 = vshrl.u32 %v2539, 7
        %v2541 = vsub.s32 %v2538, %v2540
        %v2542 = vrot.slane %v2528, %v2541
        %v2543 = vcombine.high %v2535, 0
        %v2544 = vcombine.high %v2542, 0
        %v2547 = vunpack.c.l.s4 1983009808
        %v2548 = vunpack.c.0.s8 %v2547
        %v2549 = vlaneseq
        %v2550 = vshrl.u32 %v2549, 7
        %v2551 = vsub.s32 %v2548, %v2550
        %v2552 = vrot.slane %v2467, %v2551
        %v2555 = vunpack.c.l.s4 1983009808
        %v2556 = vunpack.c.0.s8 %v2555
        %v2557 = vlaneseq
        %v2558 = vshrl.u32 %v2557, 7
        %v2559 = vsub.s32 %v2556, %v2558
        %v2560 = vrot.slane %v2473, %v2559
        %v2561 = vcombine.low %v2552, %v2560
        %v2562 = vcombine.high %v2552, %v2560
        %v2564 = vunpack.c.l.s4 1934713408
        %v2565 = vunpack.c.0.s8 %v2564
        %v2566 = vlaneseq
        %v2567 = vshrl.u32 %v2566, 7
        %v2568 = vsub.s32 %v2565, %v2567
        %v2569 = vrot.slane %v2561, %v2568
        %v2571 = vunpack.c.l.s4 1934713408
        %v2572 = vunpack.c.0.s8 %v2571
        %v2573 = vlaneseq
        %v2574 = vshrl.u32 %v2573, 7
        %v2575 = vsub.s32 %v2572, %v2574
        %v2576 = vrot.slane %v2562, %v2575
        %v2577 = vcombine.high %v2569, 0
        %v2578 = vcombine.high %v2576, 0
        %v2581 = vunpack.c.l.s4 1983009808
        %v2582 = vunpack.c.0.s8 %v2581
        %v2583 = vlaneseq
        %v2584 = vshrl.u32 %v2583, 7
        %v2585 = vsub.s32 %v2582, %v2584
        %v2586 = vrot.slane %v2470, %v2585
        %v2589 = vunpack.c.l.s4 1983009808
        %v2590 = vunpack.c.0.s8 %v2589
        %v2591 = vlaneseq
        %v2592 = vshrl.u32 %v2591, 7
        %v2593 = vsub.s32 %v2590, %v2592
        %v2594 = vrot.slane %v2476, %v2593
        %v2595 = vcombine.low %v2586, %v2594
        %v2596 = vcombine.high %v2586, %v2594
        %v2598 = vunpack.c.l.s4 1934713408
        %v2599 = vunpack.c.0.s8 %v2598
        %v2600 = vlaneseq
        %v2601 = vshrl.u32 %v2600, 7
        %v2602 = vsub.s32 %v2599, %v2601
        %v2603 = vrot.slane %v2595, %v2602
        %v2605 = vunpack.c.l.s4 1934713408
        %v2606 = vunpack.c.0.s8 %v2605
        %v2607 = vlaneseq
        %v2608 = vshrl.u32 %v2607, 7
        %v2609 = vsub.s32 %v2606, %v2608
        %v2610 = vrot.slane %v2596, %v2609
        %v2611 = vcombine.high %v2603, 0
        %v2612 = vcombine.high %v2610, 0
        %v2613 = vcombine.low %v2501, %v2508
        %v2615 = vunpack.c.l.s4 1983009808
        %v2616 = vunpack.c.0.s8 %v2615
        %v2617 = vlaneseq
        %v2618 = vshrl.u32 %v2617, 7
        %v2619 = vsub.s32 %v2616, %v2618
        %v2620 = vrot.slane %v2613, %v2619
        %v2621 = vcombine.low %v2509, %v2510
        %v2623 = vunpack.c.l.s4 1983009808
        %v2624 = vunpack.c.0.s8 %v2623
        %v2625 = vlaneseq
        %v2626 = vshrl.u32 %v2625, 7
        %v2627 = vsub.s32 %v2624, %v2626
        %v2628 = vrot.slane %v2621, %v2627
        %v2629 = vcombine.low %v2620, %v2628
        %v2631 = vunpack.c.l.s4 1934713408
        %v2632 = vunpack.c.0.s8 %v2631
        %v2633 = vlaneseq
        %v2634 = vshrl.u32 %v2633, 7
        %v2635 = vsub.s32 %v2632, %v2634
        %v2636 = vrot.slane %v2629, %v2635
        %v2637 = vcombine.high %v2636, 0
        %v2638 = vcombine.low %v2535, %v2542
        %v2640 = vunpack.c.l.s4 1983009808
        %v2641 = vunpack.c.0.s8 %v2640
        %v2642 = vlaneseq
        %v2643 = vshrl.u32 %v2642, 7
        %v2644 = vsub.s32 %v2641, %v2643
        %v2645 = vrot.slane %v2638, %v2644
        %v2646 = vcombine.low %v2543, %v2544
        %v2648 = vunpack.c.l.s4 1983009808
        %v2649 = vunpack.c.0.s8 %v2648
        %v2650 = vlaneseq
        %v2651 = vshrl.u32 %v2650, 7
        %v2652 = vsub.s32 %v2649, %v2651
        %v2653 = vrot.slane %v2646, %v2652
        %v2654 = vcombine.low %v2645, %v2653
        %v2656 = vunpack.c.l.s4 1934713408
        %v2657 = vunpack.c.0.s8 %v2656
        %v2658 = vlaneseq
        %v2659 = vshrl.u32 %v2658, 7
        %v2660 = vsub.s32 %v2657, %v2659
        %v2661 = vrot.slane %v2654, %v2660
        %v2662 = vcombine.high %v2661, 0
        %v2663 = vcombine.low %v2569, %v2576
        %v2665 = vunpack.c.l.s4 1983009808
        %v2666 = vunpack.c.0.s8 %v2665
        %v2667 = vlaneseq
        %v2668 = vshrl.u32 %v2667, 7
        %v2669 = vsub.s32 %v2666, %v2668
        %v2670 = vrot.slane %v2663, %v2669
        %v2671 = vcombine.low %v2577, %v2578
        %v2673 = vunpack.c.l.s4 1983009808
        %v2674 = vunpack.c.0.s8 %v2673
        %v2675 = vlaneseq
        %v2676 = vshrl.u32 %v2675, 7
        %v2677 = vsub.s32 %v2674, %v2676
        %v2678 = vrot.slane %v2671, %v2677
        %v2679 = vcombine.low %v2670, %v2678
        %v2681 = vunpack.c.l.s4 1934713408
        %v2682 = vunpack.c.0.s8 %v2681
        %v2683 = vlaneseq
        %v2684 = vshrl.u32 %v2683, 7
        %v2685 = vsub.s32 %v2682, %v2684
        %v2686 = vrot.slane %v2679, %v2685
        %v2687 = vcombine.high %v2686, 0
        %v2688 = vcombine.low %v2603, %v2610
        %v2690 = vunpack.c.l.s4 1983009808
        %v2691 = vunpack.c.0.s8 %v2690
        %v2692 = vlaneseq
        %v2693 = vshrl.u32 %v2692, 7
        %v2694 = vsub.s32 %v2691, %v2693
        %v2695 = vrot.slane %v2688, %v2694
        %v2696 = vcombine.low %v2611, %v2612
        %v2698 = vunpack.c.l.s4 1983009808
        %v2699 = vunpack.c.0.s8 %v2698
        %v2700 = vlaneseq
        %v2701 = vshrl.u32 %v2700, 7
        %v2702 = vsub.s32 %v2699, %v2701
        %v2703 = vrot.slane %v2696, %v2702
        %v2704 = vcombine.low %v2695, %v2703
        %v2706 = vunpack.c.l.s4 1934713408
        %v2707 = vunpack.c.0.s8 %v2706
        %v2708 = vlaneseq
        %v2709 = vshrl.u32 %v2708, 7
        %v2710 = vsub.s32 %v2707, %v2709
        %v2711 = vrot.slane %v2704, %v2710
        %v2712 = vcombine.high %v2711, 0
        %v2715 = vpack.i.b16 %v2661, %v2636
        %v2716 = vshrl.u32 %v2636, 16
        %v2717 = vshrl.u32 %v2661, 16
        %v2718 = vpack.i.b16 %v2717, %v2716
        %v2721 = vpack.i.b16 %v2662, %v2637
        %v2722 = vshrl.u32 %v2637, 16
        %v2723 = vshrl.u32 %v2662, 16
        %v2724 = vpack.i.b16 %v2723, %v2722
        %v2727 = vpack.i.b16 %v2711, %v2686
        %v2728 = vshrl.u32 %v2686, 16
        %v2729 = vshrl.u32 %v2711, 16
        %v2730 = vpack.i.b16 %v2729, %v2728
        %v2733 = vpack.i.b16 %v2712, %v2687
        %v2734 = vshrl.u32 %v2687, 16
        %v2735 = vshrl.u32 %v2712, 16
        %v2736 = vpack.i.b16 %v2735, %v2734
        %v2737 = vunpack.c.l.b16 %v2715
        %v2738 = vunpack.c.l.b16 %v2727
        %v2739 = vpack.c.b16 %v2738, %v2737
        %v2740 = vunpack.c.l.b16 %v2718
        %v2741 = vunpack.c.l.b16 %v2730
        %v2742 = vpack.c.b16 %v2741, %v2740
        %2743 = vrot.lane.b32.xlu0 %v2742, 8
        %v2744 = vpop.permute.xlu0 %2743
        %v2745 = vunpack.c.l.b16 %v2721
        %v2746 = vunpack.c.l.b16 %v2733
        %v2747 = vpack.c.b16 %v2746, %v2745
        %2748 = vrot.lane.b32.xlu0 %v2747, 16
        %v2749 = vpop.permute.xlu0 %2748
        %v2750 = vunpack.c.l.b16 %v2724
        %v2751 = vunpack.c.l.b16 %v2736
        %v2752 = vpack.c.b16 %v2751, %v2750
        %2753 = vrot.lane.b32.xlu0 %v2752, 24
        %v2754 = vpop.permute.xlu0 %2753
        %v2757 = vsel %vm1611, %v2739, %v2744
        %vm2758 = vcmask 130048
        %v2760 = vsel %vm2758, %v2757, %v2749
        %vm2761 = vcmask 195584
        %v2763 = vsel %vm2761, %v2760, %v2754
        %v2765 = vlaneseq
        %v2766 = vshrl.u32 %v2765, 7
        %v2767 = vsub.s32 0, %v2766
        %v2768 = vrot.slane %v1604, %v2767
        %v2774 = vunpack.c.l.b16 %v1600
        %v2775 = vunpack.c.l.b16 %v1601
        %v2776 = vunpack.c.l.b16 %v1602
        %v2777 = vunpack.c.l.b16 %v1603
        %v2778 = vpack.c.b16 %v2775, %v2774
        %v2779 = vpack.c.b16 %v2777, %v2776
        %v2782 = vsel %vm822, %v2763, 0
        %2784 = vmatprep.subr.bf16.mxu0 0
        %2785 = vmatpush1.bf16.msra.mxu0 %v2778
        %2786 = vmatprep.subr.bf16.mxu0 0
        %2787 = vmatpush1.bf16.msra.mxu0 %v2779
        %2788 = vmatprep.subr.bf16.mxu0 0
        %2789 = vmatpush1.bf16.msra.mxu0 0
        %2790 = vmatprep.subr.bf16.mxu0 0
        %2791 = vmatpush1.bf16.msra.mxu0 0
        %2792 = vmatprep.subr.bf16.mxu0 0
        %2793 = vmatpush1.bf16.msra.mxu0 0
        %2794 = vmatprep.subr.bf16.mxu0 0
        %2795 = vmatpush1.bf16.msra.mxu0 0
        %2796 = vmatprep.subr.bf16.mxu0 0
        %2797 = vmatpush1.bf16.msra.mxu0 0
        %2798 = vmatprep.subr.bf16.mxu0 0
        %2799 = vmatpush1.bf16.msra.mxu0 0
        %2800 = vmatprep.subr.bf16.mxu0 0
        %2801 = vmatpush1.bf16.msra.mxu0 0
        %2802 = vmatprep.subr.bf16.mxu0 0
        %2803 = vmatpush1.bf16.msra.mxu0 0
        %2804 = vmatprep.subr.bf16.mxu0 0
        %2805 = vmatpush1.bf16.msra.mxu0 0
        %2806 = vmatprep.subr.bf16.mxu0 0
        %2807 = vmatpush1.bf16.msra.mxu0 0
        %2808 = vmatprep.subr.bf16.mxu0 0
        %2809 = vmatpush1.bf16.msra.mxu0 0
        %2810 = vmatprep.subr.bf16.mxu0 0
        %2811 = vmatpush1.bf16.msra.mxu0 0
        %2812 = vmatprep.subr.bf16.mxu0 0
        %2813 = vmatpush1.bf16.msra.mxu0 0
        %2814 = vmatprep.subr.bf16.mxu0 0
        %2815 = vmatpush1.bf16.msra.mxu0 0
        %2816 = vmatprep.mubr.bf16.mxu0 0
        %2817 = vmatmul.mubr.bf16.gmra.mrb[0].mxu0 %v2782
        %v2818 = vpop.f32.mrb[0].mxu0
        %v2819 = vadd.f32 %v2768, %v2818
        %v2820 = vpop.f32.mrb[0].mxu0
        %v2821 = vpop.f32.mrb[0].mxu0
        %v2822 = vadd.f32 %v2768, %v2821
        %v2823 = vpop.f32.mrb[0].mxu0
        %2824 = vdwg.mxu0
        %v2825 = vadd.f32 %v818, %v2819
        %v2826 = vadd.f32 %v819, %v2822
        %2827 = vst.msk [vmem:[#allocation22] sm:$0xff] %vm822, %v2825
        %2828 = vst.msk [vmem:[#allocation22 + $0x8] sm:$0xff] %vm822, %v2826
        %v2829 = vld [vmem:[#allocation22] sm:$0xff]
        %v2830 = vld [vmem:[#allocation22 + $0x8] sm:$0xff]
        %v2831 = vld [vmem:[%s673] sm:$0x1]
        %v2832 = vld [vmem:[%s681] sm:$0x1]
        %v2833 = vsel %vm822, %v2829, 0.0
        %2834 = vadd.xlane.f32.xlu0 %v2833
        %v2835 = vpop.xlane.xlu0 %2834
        %v2836 = vsel %vm822, %v2830, 0.0
        %2837 = vadd.xlane.f32.xlu0 %v2836
        %v2838 = vpop.xlane.xlu0 %2837
        %v2839 = vmul.f32 %v2835, %v829
        %v2840 = vmul.f32 %v2838, %v829
        %v2841 = vsub.f32 %v2829, %v2839
        %v2842 = vsub.f32 %v2830, %v2840
        %v2843 = vmul.f32 %v2841, %v2841
        %v2844 = vmul.f32 %v2842, %v2842
        %v2845 = vsel %vm822, %v2843, 0.0
        %2846 = vadd.xlane.f32.xlu0 %v2845
        %v2847 = vpop.xlane.xlu0 %2846
        %v2848 = vsel %vm822, %v2844, 0.0
        %2849 = vadd.xlane.f32.xlu0 %v2848
        %v2850 = vpop.xlane.xlu0 %2849
        %v2851 = vmul.f32 %v2847, %v829
        %v2852 = vmul.f32 %v2850, %v829
        %v2853 = vadd.f32 %v2851, 1e-05
        %v2854 = vadd.f32 %v2852, 1e-05
        %v2855 = vrsqrt.pop %v2853
        %v2856 = vrsqrt.pop %v2854
        %v2857 = vmul.f32 %v2841, %v2855
        %v2858 = vmul.f32 %v2842, %v2856
        %v2860 = vlaneseq
        %v2861 = vshrl.u32 %v2860, 7
        %v2862 = vsub.s32 0, %v2861
        %v2863 = vrot.slane %v2831, %v2862
        %v2865 = vmul.f32 %v2857, %v2863
        %v2866 = vmul.f32 %v2858, %v2863
        %v2868 = vlaneseq
        %v2869 = vshrl.u32 %v2868, 7
        %v2870 = vsub.s32 0, %v2869
        %v2871 = vrot.slane %v2832, %v2870
        %v2873 = vadd.f32 %v2865, %v2871
        %v2874 = vadd.f32 %v2866, %v2871
        %v2875 = vpack.c.bf16 %v2874, %v2873
        %v2876 = vld [vmem:[%s690] sm:$0xf]
        %v2877 = vld [vmem:[%s690 + $0x4] sm:$0xf]
        %v2878 = vld [vmem:[%s690 + $0x8] sm:$0xf]
        %v2879 = vld [vmem:[%s690 + $0xc] sm:$0xf]
        %v2880 = vld [vmem:[%s698] sm:$0x1]
        %v2882 = vlaneseq
        %v2883 = vshrl.u32 %v2882, 7
        %v2884 = vsub.s32 0, %v2883
        %v2885 = vrot.slane %v2880, %v2884
        %v2891 = vunpack.c.l.b16 %v2876
        %v2892 = vunpack.c.l.b16 %v2877
        %v2893 = vunpack.c.l.b16 %v2878
        %v2894 = vunpack.c.l.b16 %v2879
        %v2895 = vpack.c.b16 %v2892, %v2891
        %v2896 = vpack.c.b16 %v2894, %v2893
        %v2900 = vsel %vm822, %v2875, 0
        %2902 = vmatprep.subr.bf16.mxu0 0
        %2903 = vmatpush1.bf16.msra.mxu0 %v2895
        %2904 = vmatprep.subr.bf16.mxu0 0
        %2905 = vmatpush1.bf16.msra.mxu0 %v2896
        %2906 = vmatprep.subr.bf16.mxu0 0
        %2907 = vmatpush1.bf16.msra.mxu0 0
        %2908 = vmatprep.subr.bf16.mxu0 0
        %2909 = vmatpush1.bf16.msra.mxu0 0
        %2910 = vmatprep.subr.bf16.mxu0 0
        %2911 = vmatpush1.bf16.msra.mxu0 0
        %2912 = vmatprep.subr.bf16.mxu0 0
        %2913 = vmatpush1.bf16.msra.mxu0 0
        %2914 = vmatprep.subr.bf16.mxu0 0
        %2915 = vmatpush1.bf16.msra.mxu0 0
        %2916 = vmatprep.subr.bf16.mxu0 0
        %2917 = vmatpush1.bf16.msra.mxu0 0
        %2918 = vmatprep.subr.bf16.mxu0 0
        %2919 = vmatpush1.bf16.msra.mxu0 0
        %2920 = vmatprep.subr.bf16.mxu0 0
        %2921 = vmatpush1.bf16.msra.mxu0 0
        %2922 = vmatprep.subr.bf16.mxu0 0
        %2923 = vmatpush1.bf16.msra.mxu0 0
        %2924 = vmatprep.subr.bf16.mxu0 0
        %2925 = vmatpush1.bf16.msra.mxu0 0
        %2926 = vmatprep.subr.bf16.mxu0 0
        %2927 = vmatpush1.bf16.msra.mxu0 0
        %2928 = vmatprep.subr.bf16.mxu0 0
        %2929 = vmatpush1.bf16.msra.mxu0 0
        %2930 = vmatprep.subr.bf16.mxu0 0
        %2931 = vmatpush1.bf16.msra.mxu0 0
        %2932 = vmatprep.subr.bf16.mxu0 0
        %2933 = vmatpush1.bf16.msra.mxu0 0
        %2934 = vmatprep.mubr.bf16.mxu0 0
        %2935 = vmatmul.mubr.bf16.gmra.mrb[0].mxu0 %v2900
        %v2936 = vpop.f32.mrb[0].mxu0
        %v2937 = vadd.f32 %v2885, %v2936
        %v2938 = vpop.f32.mrb[0].mxu0
        %v2939 = vpop.f32.mrb[0].mxu0
        %v2940 = vadd.f32 %v2885, %v2939
        %v2941 = vpop.f32.mrb[0].mxu0
        %2942 = vdwg.mxu0
        %v2943 = vmul.f32 %v2937, 0.5
        %v2944 = vmul.f32 %v2940, 0.5
        %v2945 = vmul.f32 %v2937, 0.044715
        %v2946 = vmul.f32 %v2940, 0.044715
        %v2947 = vmul.f32 %v2945, %v2937
        %v2948 = vmul.f32 %v2946, %v2940
        %v2949 = vmul.f32 %v2947, %v2937
        %v2950 = vmul.f32 %v2948, %v2940
        %v2951 = vadd.f32 %v2937, %v2949
        %v2952 = vadd.f32 %v2940, %v2950
        %v2953 = vmul.f32 %v2951, 0.7978846
        %v2954 = vmul.f32 %v2952, 0.7978846
        %v2955 = vtanh.pop %v2953
        %v2956 = vtanh.pop %v2954
        %v2957 = vadd.f32 %v2955, 1.0
        %v2958 = vadd.f32 %v2956, 1.0
        %v2959 = vmul.f32 %v2943, %v2957
        %v2960 = vmul.f32 %v2944, %v2958
        %v2961 = vpack.c.bf16 %v2960, %v2959
        %v2962 = vld [vmem:[%s707] sm:$0xf]
        %v2963 = vld [vmem:[%s707 + $0x4] sm:$0xf]
        %v2964 = vld [vmem:[%s707 + $0x8] sm:$0xf]
        %v2965 = vld [vmem:[%s707 + $0xc] sm:$0xf]
        %v2966 = vld [vmem:[%s707 + $0x10] sm:$0xf]
        %v2967 = vld [vmem:[%s707 + $0x14] sm:$0xf]
        %v2968 = vld [vmem:[%s707 + $0x18] sm:$0xf]
        %v2969 = vld [vmem:[%s707 + $0x1c] sm:$0xf]
        %v2970 = vld [vmem:[%s707 + $0x20] sm:$0xf]
        %v2971 = vld [vmem:[%s707 + $0x24] sm:$0xf]
        %v2972 = vld [vmem:[%s707 + $0x28] sm:$0xf]
        %v2973 = vld [vmem:[%s707 + $0x2c] sm:$0xf]
        %v2974 = vld [vmem:[%s707 + $0x30] sm:$0xf]
        %v2975 = vld [vmem:[%s707 + $0x34] sm:$0xf]
        %v2976 = vld [vmem:[%s707 + $0x38] sm:$0xf]
        %v2977 = vld [vmem:[%s707 + $0x3c] sm:$0xf]
        %v2978 = vld [vmem:[%s715] sm:$0x1]
        %v2980 = vlaneseq
        %v2981 = vshrl.u32 %v2980, 7
        %v2982 = vsub.s32 0, %v2981
        %v2983 = vrot.slane %v2978, %v2982
        %v3001 = vunpack.c.l.b16 %v2962
        %v3002 = vunpack.c.l.b16 %v2963
        %v3003 = vunpack.c.l.b16 %v2964
        %v3004 = vunpack.c.l.b16 %v2965
        %v3005 = vunpack.c.l.b16 %v2966
        %v3006 = vunpack.c.l.b16 %v2967
        %v3007 = vunpack.c.l.b16 %v2968
        %v3008 = vunpack.c.l.b16 %v2969
        %v3009 = vunpack.c.l.b16 %v2970
        %v3010 = vunpack.c.l.b16 %v2971
        %v3011 = vunpack.c.l.b16 %v2972
        %v3012 = vunpack.c.l.b16 %v2973
        %v3013 = vunpack.c.l.b16 %v2974
        %v3014 = vunpack.c.l.b16 %v2975
        %v3015 = vunpack.c.l.b16 %v2976
        %v3016 = vunpack.c.l.b16 %v2977
        %v3017 = vpack.c.b16 %v3002, %v3001
        %v3018 = vpack.c.b16 %v3004, %v3003
        %v3019 = vpack.c.b16 %v3006, %v3005
        %v3020 = vpack.c.b16 %v3008, %v3007
        %v3021 = vpack.c.b16 %v3010, %v3009
        %v3022 = vpack.c.b16 %v3012, %v3011
        %v3023 = vpack.c.b16 %v3014, %v3013
        %v3024 = vpack.c.b16 %v3016, %v3015
        %3033 = vmatprep.subr.bf16.mxu0 0
        %3034 = vmatpush1.bf16.msra.mxu0 %v3017
        %3035 = vmatprep.subr.bf16.mxu0 0
        %3036 = vmatpush1.bf16.msra.mxu0 %v3018
        %3037 = vmatprep.subr.bf16.mxu0 0
        %3038 = vmatpush1.bf16.msra.mxu0 %v3019
        %3039 = vmatprep.subr.bf16.mxu0 0
        %3040 = vmatpush1.bf16.msra.mxu0 %v3020
        %3041 = vmatprep.subr.bf16.mxu0 0
        %3042 = vmatpush1.bf16.msra.mxu0 %v3021
        %3043 = vmatprep.subr.bf16.mxu0 0
        %3044 = vmatpush1.bf16.msra.mxu0 %v3022
        %3045 = vmatprep.subr.bf16.mxu0 0
        %3046 = vmatpush1.bf16.msra.mxu0 %v3023
        %3047 = vmatprep.subr.bf16.mxu0 0
        %3048 = vmatpush1.bf16.msra.mxu0 %v3024
        %3049 = vmatprep.subr.bf16.mxu0 0
        %3050 = vmatpush1.bf16.msra.mxu0 0
        %3051 = vmatprep.subr.bf16.mxu0 0
        %3052 = vmatpush1.bf16.msra.mxu0 0
        %3053 = vmatprep.subr.bf16.mxu0 0
        %3054 = vmatpush1.bf16.msra.mxu0 0
        %3055 = vmatprep.subr.bf16.mxu0 0
        %3056 = vmatpush1.bf16.msra.mxu0 0
        %3057 = vmatprep.subr.bf16.mxu0 0
        %3058 = vmatpush1.bf16.msra.mxu0 0
        %3059 = vmatprep.subr.bf16.mxu0 0
        %3060 = vmatpush1.bf16.msra.mxu0 0
        %3061 = vmatprep.subr.bf16.mxu0 0
        %3062 = vmatpush1.bf16.msra.mxu0 0
        %3063 = vmatprep.subr.bf16.mxu0 0
        %3064 = vmatpush1.bf16.msra.mxu0 0
        %3065 = vmatprep.mubr.bf16.mxu0 0
        %3066 = vmatmul.mubr.bf16.gmra.mrb[0].mxu0 %v2961
        %v3067 = vpop.f32.mrb[0].mxu0
        %v3068 = vadd.f32 %v2983, %v3067
        %v3069 = vpop.f32.mrb[0].mxu0
        %v3070 = vpop.f32.mrb[0].mxu0
        %v3071 = vadd.f32 %v2983, %v3070
        %v3072 = vpop.f32.mrb[0].mxu0
        %3073 = vdwg.mxu0
        %v3074 = vadd.f32 %v2829, %v3068
        %v3075 = vadd.f32 %v2830, %v3071
        %3076 = vst.msk [vmem:[#allocation22] sm:$0xff] %vm822, %v3074
        %3077 = vst.msk [vmem:[#allocation22 + $0x8] sm:$0xff] %vm822, %v3075
        // Predicated region
        $region126: #{tpu_custom_call.1} parent=67 // pred_check
          %p3078 = pneg %p371
        $region127: #{tpu_custom_call.1} parent=67 // pred_check_branch
          %3080 = sbr.rel (%p3078) target = $region129
        $region128: #{tpu_custom_call.1} parent=67 // pred_region
          %s3082 = ssub.s32 256, 256
          %3083 = vsyncadd [#allocation4], %s3082
          %s3084 = sshll.u32 [#allocation22], 4
          %s3085 = int_to_ptr.vmem [resolvable:$true] %s3084
          %3090 = dma.vmem_to_hbm [thread:$0]  %s3085, 256, %s13, [#allocation4], 128, 128, 8
        $region129: #{tpu_custom_call.1} parent=67 // pred_fallthru
          _
        // Predicated region
        $region130: #{tpu_custom_call.1} parent=67 // pred_check
          %p3091 = pneg %p371
        $region131: #{tpu_custom_call.1} parent=67 // pred_check_branch
          %3093 = sbr.rel (%p3091) target = $region133
        $region132: #{tpu_custom_call.1} parent=67 // pred_region
          %3094 = dma.done [#allocation4], 256
        $region133: #{tpu_custom_call.1} parent=67 // pred_fallthru
          _
      $region68: #{tpu_custom_call.1} parent=5 // pred_fallthru
        _
      %p3095 = scmp.le.s32.totalorder 2, %s41
      // Predicated region
      $region134: #{tpu_custom_call.1} parent=5 // pred_check
        %p3096 = pneg %p3095
      $region135: #{tpu_custom_call.1} parent=5 // pred_check_branch
        %3098 = sbr.rel (%p3096) target = $region137
      $region136: #{tpu_custom_call.1} parent=5 // pred_region
        %s3099 = ssub.s32 %s41, 2
      $region137: #{tpu_custom_call.1} parent=5 // pred_fallthru
        _
    $region6: #{tpu_custom_call.1} parent=1 // loop_footer
      %s45 = sadd.s32 1, %s41
    $region7: #{tpu_custom_call.1} parent=1 // loop_footer_branch
      %40 = sbr.rel target = $region3
    $region8: #{tpu_custom_call.1} parent=1 // loop_exit
      _
    %3100 = vsyncpa [#allocation3], 1
    %s3101 = scalar_lea.sflag [#allocation3], 1
    %3102 = vsyncpa %s3101, 1
    %3103 = vsyncpa [#allocation6], 1
    %s3104 = scalar_lea.sflag [#allocation6], 1
    %3105 = vsyncpa %s3104, 1
    %3106 = vsyncpa [#allocation9], 1
    %s3107 = scalar_lea.sflag [#allocation9], 1
    %3108 = vsyncpa %s3107, 1
    %3109 = vsyncpa [#allocation12], 1
    %s3110 = scalar_lea.sflag [#allocation12], 1
    %3111 = vsyncpa %s3110, 1
    %3112 = vsyncpa [#allocation15], 1
    %s3113 = scalar_lea.sflag [#allocation15], 1
    %3114 = vsyncpa %s3113, 1
    %3115 = vsyncpa [#allocation18], 1
    %s3116 = scalar_lea.sflag [#allocation18], 1
    %3117 = vsyncpa %s3116, 1
    %3118 = vsyncpa [#allocation21], 1
    %s3119 = scalar_lea.sflag [#allocation21], 1
    %3120 = vsyncpa %s3119, 1
    %3121 = vsyncpa [#allocation4], 1
    %s3122 = scalar_lea.sflag [#allocation4], 1
    %3123 = vsyncpa %s3122, 1

</llo_original>
